<compile_context>
chip_gen: v7x
topology: tpu7x:2x2x1
jax: 0.10.0
libtpu: 0.0.40
codegen_flags: <defaults>
</compile_context>

<pallas_src>
import functools
import math

import jax
import jax.numpy as jnp
from jax.experimental import pallas as pl
from jax.experimental.pallas import tpu as pltpu

IN_DIM = 12   # gru1 input size / model feature size
H1 = 20       # gru1 hidden size
H2 = 16       # gru2 hidden size
LAT = 6       # latent size = 12 // 2 (mu / sigma chunk)
GP = 128      # lane pitch per GRU gate (each gate gets its own 128-lane tile)


def _leaky(v):
    # nn.LeakyReLU(0.5)
    return jnp.where(v > 0, v, 0.5 * v)


# ----------------------------- fused kernel -------------------------------
def _make_fused_kernel(T, B, step):
    B2 = B - step

    def kernel(x2_ref, eps_ref,
               wih1_ref, whh1_ref, bih1_ref, bhh1_ref,
               w11_ref, b11_ref, w12_ref, b12_ref,
               wih2_ref, whh2_ref, bih2_ref, bhh2_ref,
               w2_ref, b2_ref, wfc_ref, bfc_ref,
               out_ref, kld_ref):
        # x2_ref: (T*B, 12) time-major rows; row t*B + b == x[b, t, :]
        x2 = x2_ref[...]

        # ---------------- encoder GRU(12 -> 20) ----------------
        # Input projection for ALL timesteps at once (off the serial chain),
        # bih folded in. Gate g lives in lanes [g*GP, g*GP + H1).
        gi_all = jnp.dot(x2, wih1_ref[...],
                         preferred_element_type=jnp.float32) + bih1_ref[...]
        bhh1 = jnp.broadcast_to(bhh1_ref[...], (B, 3 * GP))   # hoisted broadcast
        whh1 = whh1_ref[...]

        h = jnp.zeros((B, H1), jnp.float32)
        hs = []
        for t in range(T):                      # static unroll: only h-recurrence
            gi = gi_all[t * B:(t + 1) * B, :]
            gh = jnp.dot(h, whh1, preferred_element_type=jnp.float32) + bhh1
            r = jax.nn.sigmoid(gi[:, 0:H1] + gh[:, 0:H1])
            z = jax.nn.sigmoid(gi[:, GP:GP + H1] + gh[:, GP:GP + H1])
            n = jnp.tanh(gi[:, 2 * GP:2 * GP + H1] + r * gh[:, 2 * GP:2 * GP + H1])
            h = (1.0 - z) * n + z * h
            hs.append(h)
        h_all = jnp.concatenate(hs, axis=0)     # (T*B, H1)

        # line11 + LeakyReLU + line12 + LeakyReLU + residual, whole sequence.
        y = _leaky(jnp.dot(h_all, w11_ref[...],
                           preferred_element_type=jnp.float32) + b11_ref[...])
        enc = _leaky(jnp.dot(y, w12_ref[...],
                             preferred_element_type=jnp.float32) + b12_ref[...]) + x2

        # ---------------- reparameterization + KLD ----------------
        h_last = enc[(T - 1) * B:T * B, :]      # encoder1[:, -1, :]  -> (B, 12)
        mu = h_last[:, 0:LAT]
        sigma = h_last[:, LAT:2 * LAT]
        s2 = sigma * sigma
        e = mu * mu + s2 - jnp.log(1e-08 + s2) - 1.0
        kld_ref[...] = 0.5 * jnp.sum(e, axis=(0, 1), keepdims=True)   # (1, 1)
        h_lat = mu + sigma * eps_ref[...]       # (B, LAT)

        # ---------------- decoder GRU(6 -> 16) ----------------
        # Project the whole latent batch once; the sliding windows of
        # change_shape become row-slices of the projected array.
        g2_all = jnp.dot(h_lat, wih2_ref[...],
                         preferred_element_type=jnp.float32) + bih2_ref[...]
        bhh2 = jnp.broadcast_to(bhh2_ref[...], (B2, 3 * GP))
        whh2 = whh2_ref[...]

        hd = jnp.zeros((B2, H2), jnp.float32)
        hds = []
        for t in range(step):
            gi = g2_all[t:t + B2, :]            # window inputs h_lat[t+i], i<B2
            gh = jnp.dot(hd, whh2, preferred_element_type=jnp.float32) + bhh2
            r = jax.nn.sigmoid(gi[:, 0:H2] + gh[:, 0:H2])
            z = jax.nn.sigmoid(gi[:, GP:GP + H2] + gh[:, GP:GP + H2])
            n = jnp.tanh(gi[:, 2 * GP:2 * GP + H2] + r * gh[:, 2 * GP:2 * GP + H2])
            hd = (1.0 - z) * n + z * hd
            hds.append(hd)
        hd_all = jnp.concatenate(hds, axis=0)   # (step*B2, H2)

        # line2 + LeakyReLU + residual(encoder1[step:]) + fc1 + Sigmoid,
        # batched over all (window, time) rows; one contiguous output store.
        yd = _leaky(jnp.dot(hd_all, w2_ref[...],
                            preferred_element_type=jnp.float32) + b2_ref[...])
        enc_slice = jnp.concatenate(
            [enc[t * B + step: t * B + step + B2, :] for t in range(step)], axis=0)
        yd = yd + enc_slice
        out = jax.nn.sigmoid(jnp.dot(yd, wfc_ref[...],
                                     preferred_element_type=jnp.float32) + bfc_ref[...])
        out_ref[...] = out                      # (step*B2, 12)

    return kernel


def fused_forward(x2, eps, kp, T, B, step):
    B2 = B - step
    vmem = pl.BlockSpec(memory_space=pltpu.MemorySpace.VMEM)
    kernel = _make_fused_kernel(T, B, step)
    out_flat, kld = pl.pallas_call(
        kernel,
        out_shape=(jax.ShapeDtypeStruct((step * B2, IN_DIM), jnp.float32),
                   jax.ShapeDtypeStruct((1, 1), jnp.float32)),
        in_specs=[vmem] * 18,
        out_specs=(vmem, vmem),
    )(x2, eps,
      kp["wih1"], kp["whh1"], kp["bih1"], kp["bhh1"],
      kp["w11"], kp["b11"], kp["w12"], kp["b12"],
      kp["wih2"], kp["whh2"], kp["bih2"], kp["bhh2"],
      kp["w2"], kp["b2"], kp["wfc"], kp["bfc"])
    return out_flat, kld


# ------------------------------ parameters --------------------------------
def init_raw_params(key):
    """PyTorch-layout parameters (weight (out,in), GRU weights stacked r|z|n)."""
    ks = jax.random.split(key, 16)

    def u(k, shape, fan):
        b = 1.0 / math.sqrt(fan)
        return jax.random.uniform(k, shape, jnp.float32, -b, b)

    return {
        "w_ih1": u(ks[0], (3 * H1, IN_DIM), H1), "w_hh1": u(ks[1], (3 * H1, H1), H1),
        "b_ih1": u(ks[2], (3 * H1,), H1),        "b_hh1": u(ks[3], (3 * H1,), H1),
        "w11": u(ks[4], (H1, H1), H1),           "b11": u(ks[5], (H1,), H1),
        "w12": u(ks[6], (IN_DIM, H1), H1),       "b12": u(ks[7], (IN_DIM,), H1),
        "w_ih2": u(ks[8], (3 * H2, LAT), H2),    "w_hh2": u(ks[9], (3 * H2, H2), H2),
        "b_ih2": u(ks[10], (3 * H2,), H2),       "b_hh2": u(ks[11], (3 * H2,), H2),
        "w2": u(ks[12], (IN_DIM, H2), H2),       "b2": u(ks[13], (IN_DIM,), H2),
        "wfc": u(ks[14], (IN_DIM, IN_DIM), IN_DIM), "bfc": u(ks[15], (IN_DIM,), IN_DIM),
    }


def _pack_gru(w_ih, w_hh, b_ih, b_hh, H):
    """Pack PyTorch GRU weights into (K, 3*GP): gate g at lanes [g*GP, g*GP+H)."""
    kin, kh = w_ih.shape[1], w_hh.shape[1]
    wih_p = jnp.zeros((kin, 3 * GP), jnp.float32)
    whh_p = jnp.zeros((kh, 3 * GP), jnp.float32)
    bih_p = jnp.zeros((1, 3 * GP), jnp.float32)
    bhh_p = jnp.zeros((1, 3 * GP), jnp.float32)
    for g in range(3):
        wih_p = wih_p.at[:, g * GP:g * GP + H].set(w_ih[g * H:(g + 1) * H, :].T)
        whh_p = whh_p.at[:, g * GP:g * GP + H].set(w_hh[g * H:(g + 1) * H, :].T)
        bih_p = bih_p.at[0, g * GP:g * GP + H].set(b_ih[g * H:(g + 1) * H])
        bhh_p = bhh_p.at[0, g * GP:g * GP + H].set(b_hh[g * H:(g + 1) * H])
    return wih_p, whh_p, bih_p, bhh_p


def pack_params(raw):
    wih1, whh1, bih1, bhh1 = _pack_gru(raw["w_ih1"], raw["w_hh1"],
                                       raw["b_ih1"], raw["b_hh1"], H1)
    wih2, whh2, bih2, bhh2 = _pack_gru(raw["w_ih2"], raw["w_hh2"],
                                       raw["b_ih2"], raw["b_hh2"], H2)
    return {
        "wih1": wih1, "whh1": whh1, "bih1": bih1, "bhh1": bhh1,
        "w11": raw["w11"].T, "b11": raw["b11"][None, :],
        "w12": raw["w12"].T, "b12": raw["b12"][None, :],
        "wih2": wih2, "whh2": whh2, "bih2": bih2, "bhh2": bhh2,
        "w2": raw["w2"].T, "b2": raw["b2"][None, :],
        "wfc": raw["wfc"].T, "bfc": raw["bfc"][None, :],
    }


# ------------------------------- forward ----------------------------------
def gruvae2_forward(x, kernel_params, eps, *, step):
    # x: (B, T=step, 12) batch-first like PyTorch; eps: (B, 6) reparam noise.
    B, T, D = x.shape
    assert T == step and D == IN_DIM and B > step
    x2 = jnp.transpose(x, (1, 0, 2)).reshape(T * B, IN_DIM)    # time-major rows
    out_flat, kld = fused_forward(x2, eps, kernel_params, T, B, step)
    B2 = B - step
    out = out_flat.reshape(step, B2, IN_DIM).transpose(1, 0, 2)  # (B-step, step, 12)
    return out, kld[0, 0] / B


# --------------------------- pure-JAX reference ----------------------------
def reference_forward(x, raw, eps, step):
    B, T, _ = x.shape

    def gru(xs, w_ih, w_hh, b_ih, b_hh, H):
        bsz, L, _ = xs.shape
        h = jnp.zeros((bsz, H), jnp.float32)
        outs = []
        for t in range(L):
            gi = xs[:, t, :] @ w_ih.T + b_ih
            gh = h @ w_hh.T + b_hh
            r = jax.nn.sigmoid(gi[:, :H] + gh[:, :H])
            z = jax.nn.sigmoid(gi[:, H:2 * H] + gh[:, H:2 * H])
            n = jnp.tanh(gi[:, 2 * H:] + r * gh[:, 2 * H:])
            h = (1.0 - z) * n + z * h
            outs.append(h)
        return jnp.stack(outs, axis=1)

    lr = lambda v: jnp.where(v > 0, v, 0.5 * v)
    e = gru(x, raw["w_ih1"], raw["w_hh1"], raw["b_ih1"], raw["b_hh1"], H1)
    e = lr(e @ raw["w11"].T + raw["b11"])
    e = lr(e @ raw["w12"].T + raw["b12"]) + x
    h_ = e[:, -1, :]
    mu, sigma = h_[:, :LAT], h_[:, LAT:]
    h = mu + sigma * eps
    B2 = B - step
    hw = jnp.stack([h[i:i + step] for i in range(B2)], axis=0)   # change_shape
    d = gru(hw, raw["w_ih2"], raw["w_hh2"], raw["b_ih2"], raw["b_hh2"], H2)
    d = lr(d @ raw["w2"].T + raw["b2"]) + e[step:, :, :]
    out = jax.nn.sigmoid(d @ raw["wfc"].T + raw["bfc"])
    kld = 0.5 * jnp.sum(mu ** 2 + sigma ** 2 - jnp.log(1e-08 + sigma ** 2) - 1.0) / B
    return out, kld


if __name__ == "__main__":
    step = 8
    B = 16                                   # batch > step so B - step > 0
    key = jax.random.PRNGKey(0)
    kx, kw, kn = jax.random.split(key, 3)

    x = jax.random.normal(kx, (B, step, IN_DIM), jnp.float32)
    raw = init_raw_params(kw)
    packed = pack_params(raw)
    eps = jax.random.normal(kn, (B, LAT), jnp.float32)

    fwd = jax.jit(functools.partial(gruvae2_forward, step=step))
    out, kld = fwd(x, packed, eps)
    jax.block_until_ready((out, kld))

    assert out.shape == (B - step, step, IN_DIM)
    assert kld.shape == ()

    ref_out, ref_kld = reference_forward(x, raw, eps, step)
    assert bool(jnp.allclose(out, ref_out, rtol=2e-3, atol=2e-3))
    assert bool(jnp.allclose(kld, ref_kld, rtol=2e-3, atol=2e-3))
    print("KERNEL_OK")
</pallas_src>

<mosaic_0001>
module attributes {stable_mosaic.version = 11 : i64} {
  func.func @kernel(%arg0: memref<128x12xf32, #tpu.memory_space<vmem>>, %arg1: memref<16x6xf32, #tpu.memory_space<vmem>>, %arg2: memref<12x384xf32, #tpu.memory_space<vmem>>, %arg3: memref<20x384xf32, #tpu.memory_space<vmem>>, %arg4: memref<1x384xf32, #tpu.memory_space<vmem>>, %arg5: memref<1x384xf32, #tpu.memory_space<vmem>>, %arg6: memref<20x20xf32, #tpu.memory_space<vmem>>, %arg7: memref<1x20xf32, #tpu.memory_space<vmem>>, %arg8: memref<20x12xf32, #tpu.memory_space<vmem>>, %arg9: memref<1x12xf32, #tpu.memory_space<vmem>>, %arg10: memref<6x384xf32, #tpu.memory_space<vmem>>, %arg11: memref<16x384xf32, #tpu.memory_space<vmem>>, %arg12: memref<1x384xf32, #tpu.memory_space<vmem>>, %arg13: memref<1x384xf32, #tpu.memory_space<vmem>>, %arg14: memref<16x12xf32, #tpu.memory_space<vmem>>, %arg15: memref<1x12xf32, #tpu.memory_space<vmem>>, %arg16: memref<12x12xf32, #tpu.memory_space<vmem>>, %arg17: memref<1x12xf32, #tpu.memory_space<vmem>>, %arg18: memref<64x12xf32, #tpu.memory_space<vmem>>, %arg19: memref<1x1xf32, #tpu.memory_space<vmem>>) attributes {dimension_semantics = [], scalar_prefetch = 0 : i64, scratch_operands = 0 : i64, tpu.core_type = #tpu.core_type<tc>} {
    %c0 = arith.constant 0 : index
    %c0_0 = arith.constant 0 : index
    %0 = vector.load %arg0[%c0, %c0_0] : memref<128x12xf32, #tpu.memory_space<vmem>>, vector<128x12xf32>
    %c0_1 = arith.constant 0 : index
    %c0_2 = arith.constant 0 : index
    %1 = vector.load %arg2[%c0_1, %c0_2] : memref<12x384xf32, #tpu.memory_space<vmem>>, vector<12x384xf32>
    %cst = arith.constant dense<0.000000e+00> : vector<128x384xf32>
    %2 = tpu.matmul %0, %1, %cst {dimension_numbers = #tpu.dot_dimension_numbers<[1], [0], [0], [1], [0, 0, 1, 1], [], []>} : vector<128x12xf32>, vector<12x384xf32>, vector<128x384xf32> -> vector<128x384xf32>
    %c0_3 = arith.constant 0 : index
    %c0_4 = arith.constant 0 : index
    %3 = vector.load %arg4[%c0_3, %c0_4] : memref<1x384xf32, #tpu.memory_space<vmem>>, vector<1x384xf32>
    %4 = vector.broadcast %3 : vector<1x384xf32> to vector<128x384xf32>
    %5 = arith.addf %2, %4 : vector<128x384xf32>
    %c0_5 = arith.constant 0 : index
    %c0_6 = arith.constant 0 : index
    %6 = vector.load %arg5[%c0_5, %c0_6] : memref<1x384xf32, #tpu.memory_space<vmem>>, vector<1x384xf32>
    %7 = vector.shape_cast %6 : vector<1x384xf32> to vector<1x384xf32>
    %8 = vector.broadcast %7 : vector<1x384xf32> to vector<16x384xf32>
    %c0_7 = arith.constant 0 : index
    %c0_8 = arith.constant 0 : index
    %9 = vector.load %arg3[%c0_7, %c0_8] : memref<20x384xf32, #tpu.memory_space<vmem>>, vector<20x384xf32>
    %cst_9 = arith.constant 0.000000e+00 : f32
    %10 = vector.broadcast %cst_9 : f32 to vector<16x20xf32>
    %11 = vector.extract_strided_slice %5 {offsets = [0, 0], sizes = [16, 384], strides = [1, 1]} : vector<128x384xf32> to vector<16x384xf32>
    %cst_10 = arith.constant dense<0.000000e+00> : vector<16x384xf32>
    %12 = tpu.matmul %10, %9, %cst_10 {dimension_numbers = #tpu.dot_dimension_numbers<[1], [0], [0], [1], [0, 0, 1, 1], [], []>} : vector<16x20xf32>, vector<20x384xf32>, vector<16x384xf32> -> vector<16x384xf32>
    %13 = arith.addf %12, %8 : vector<16x384xf32>
    %14 = vector.extract_strided_slice %11 {offsets = [0, 0], sizes = [16, 20], strides = [1, 1]} : vector<16x384xf32> to vector<16x20xf32>
    %15 = vector.extract_strided_slice %13 {offsets = [0, 0], sizes = [16, 20], strides = [1, 1]} : vector<16x384xf32> to vector<16x20xf32>
    %16 = arith.addf %14, %15 : vector<16x20xf32>
    %17 = arith.negf %16 : vector<16x20xf32>
    %18 = math.exp %17 : vector<16x20xf32>
    %cst_11 = arith.constant 1.000000e+00 : f32
    %19 = vector.broadcast %cst_11 : f32 to vector<16x20xf32>
    %20 = arith.addf %19, %18 : vector<16x20xf32>
    %21 = arith.divf %19, %20 : vector<16x20xf32>
    %22 = vector.extract_strided_slice %11 {offsets = [0, 128], sizes = [16, 20], strides = [1, 1]} : vector<16x384xf32> to vector<16x20xf32>
    %23 = vector.extract_strided_slice %13 {offsets = [0, 128], sizes = [16, 20], strides = [1, 1]} : vector<16x384xf32> to vector<16x20xf32>
    %24 = arith.addf %22, %23 : vector<16x20xf32>
    %25 = arith.negf %24 : vector<16x20xf32>
    %26 = math.exp %25 : vector<16x20xf32>
    %cst_12 = arith.constant 1.000000e+00 : f32
    %27 = vector.broadcast %cst_12 : f32 to vector<16x20xf32>
    %28 = arith.addf %27, %26 : vector<16x20xf32>
    %29 = arith.divf %27, %28 : vector<16x20xf32>
    %30 = vector.extract_strided_slice %11 {offsets = [0, 256], sizes = [16, 20], strides = [1, 1]} : vector<16x384xf32> to vector<16x20xf32>
    %31 = vector.extract_strided_slice %13 {offsets = [0, 256], sizes = [16, 20], strides = [1, 1]} : vector<16x384xf32> to vector<16x20xf32>
    %32 = arith.mulf %21, %31 : vector<16x20xf32>
    %33 = arith.addf %30, %32 : vector<16x20xf32>
    %34 = math.tanh %33 : vector<16x20xf32>
    %cst_13 = arith.constant 1.000000e+00 : f32
    %35 = vector.broadcast %cst_13 : f32 to vector<16x20xf32>
    %36 = arith.subf %35, %29 : vector<16x20xf32>
    %37 = arith.mulf %36, %34 : vector<16x20xf32>
    %38 = arith.mulf %29, %10 : vector<16x20xf32>
    %39 = arith.addf %37, %38 : vector<16x20xf32>
    %40 = vector.extract_strided_slice %5 {offsets = [16, 0], sizes = [16, 384], strides = [1, 1]} : vector<128x384xf32> to vector<16x384xf32>
    %cst_14 = arith.constant dense<0.000000e+00> : vector<16x384xf32>
    %41 = tpu.matmul %39, %9, %cst_14 {dimension_numbers = #tpu.dot_dimension_numbers<[1], [0], [0], [1], [0, 0, 1, 1], [], []>} : vector<16x20xf32>, vector<20x384xf32>, vector<16x384xf32> -> vector<16x384xf32>
    %42 = arith.addf %41, %8 : vector<16x384xf32>
    %43 = vector.extract_strided_slice %40 {offsets = [0, 0], sizes = [16, 20], strides = [1, 1]} : vector<16x384xf32> to vector<16x20xf32>
    %44 = vector.extract_strided_slice %42 {offsets = [0, 0], sizes = [16, 20], strides = [1, 1]} : vector<16x384xf32> to vector<16x20xf32>
    %45 = arith.addf %43, %44 : vector<16x20xf32>
    %46 = arith.negf %45 : vector<16x20xf32>
    %47 = math.exp %46 : vector<16x20xf32>
    %cst_15 = arith.constant 1.000000e+00 : f32
    %48 = vector.broadcast %cst_15 : f32 to vector<16x20xf32>
    %49 = arith.addf %48, %47 : vector<16x20xf32>
    %50 = arith.divf %48, %49 : vector<16x20xf32>
    %51 = vector.extract_strided_slice %40 {offsets = [0, 128], sizes = [16, 20], strides = [1, 1]} : vector<16x384xf32> to vector<16x20xf32>
    %52 = vector.extract_strided_slice %42 {offsets = [0, 128], sizes = [16, 20], strides = [1, 1]} : vector<16x384xf32> to vector<16x20xf32>
    %53 = arith.addf %51, %52 : vector<16x20xf32>
    %54 = arith.negf %53 : vector<16x20xf32>
    %55 = math.exp %54 : vector<16x20xf32>
    %cst_16 = arith.constant 1.000000e+00 : f32
    %56 = vector.broadcast %cst_16 : f32 to vector<16x20xf32>
    %57 = arith.addf %56, %55 : vector<16x20xf32>
    %58 = arith.divf %56, %57 : vector<16x20xf32>
    %59 = vector.extract_strided_slice %40 {offsets = [0, 256], sizes = [16, 20], strides = [1, 1]} : vector<16x384xf32> to vector<16x20xf32>
    %60 = vector.extract_strided_slice %42 {offsets = [0, 256], sizes = [16, 20], strides = [1, 1]} : vector<16x384xf32> to vector<16x20xf32>
    %61 = arith.mulf %50, %60 : vector<16x20xf32>
    %62 = arith.addf %59, %61 : vector<16x20xf32>
    %63 = math.tanh %62 : vector<16x20xf32>
    %cst_17 = arith.constant 1.000000e+00 : f32
    %64 = vector.broadcast %cst_17 : f32 to vector<16x20xf32>
    %65 = arith.subf %64, %58 : vector<16x20xf32>
    %66 = arith.mulf %65, %63 : vector<16x20xf32>
    %67 = arith.mulf %58, %39 : vector<16x20xf32>
    %68 = arith.addf %66, %67 : vector<16x20xf32>
    %69 = vector.extract_strided_slice %5 {offsets = [32, 0], sizes = [16, 384], strides = [1, 1]} : vector<128x384xf32> to vector<16x384xf32>
    %cst_18 = arith.constant dense<0.000000e+00> : vector<16x384xf32>
    %70 = tpu.matmul %68, %9, %cst_18 {dimension_numbers = #tpu.dot_dimension_numbers<[1], [0], [0], [1], [0, 0, 1, 1], [], []>} : vector<16x20xf32>, vector<20x384xf32>, vector<16x384xf32> -> vector<16x384xf32>
    %71 = arith.addf %70, %8 : vector<16x384xf32>
    %72 = vector.extract_strided_slice %69 {offsets = [0, 0], sizes = [16, 20], strides = [1, 1]} : vector<16x384xf32> to vector<16x20xf32>
    %73 = vector.extract_strided_slice %71 {offsets = [0, 0], sizes = [16, 20], strides = [1, 1]} : vector<16x384xf32> to vector<16x20xf32>
    %74 = arith.addf %72, %73 : vector<16x20xf32>
    %75 = arith.negf %74 : vector<16x20xf32>
    %76 = math.exp %75 : vector<16x20xf32>
    %cst_19 = arith.constant 1.000000e+00 : f32
    %77 = vector.broadcast %cst_19 : f32 to vector<16x20xf32>
    %78 = arith.addf %77, %76 : vector<16x20xf32>
    %79 = arith.divf %77, %78 : vector<16x20xf32>
    %80 = vector.extract_strided_slice %69 {offsets = [0, 128], sizes = [16, 20], strides = [1, 1]} : vector<16x384xf32> to vector<16x20xf32>
    %81 = vector.extract_strided_slice %71 {offsets = [0, 128], sizes = [16, 20], strides = [1, 1]} : vector<16x384xf32> to vector<16x20xf32>
    %82 = arith.addf %80, %81 : vector<16x20xf32>
    %83 = arith.negf %82 : vector<16x20xf32>
    %84 = math.exp %83 : vector<16x20xf32>
    %cst_20 = arith.constant 1.000000e+00 : f32
    %85 = vector.broadcast %cst_20 : f32 to vector<16x20xf32>
    %86 = arith.addf %85, %84 : vector<16x20xf32>
    %87 = arith.divf %85, %86 : vector<16x20xf32>
    %88 = vector.extract_strided_slice %69 {offsets = [0, 256], sizes = [16, 20], strides = [1, 1]} : vector<16x384xf32> to vector<16x20xf32>
    %89 = vector.extract_strided_slice %71 {offsets = [0, 256], sizes = [16, 20], strides = [1, 1]} : vector<16x384xf32> to vector<16x20xf32>
    %90 = arith.mulf %79, %89 : vector<16x20xf32>
    %91 = arith.addf %88, %90 : vector<16x20xf32>
    %92 = math.tanh %91 : vector<16x20xf32>
    %cst_21 = arith.constant 1.000000e+00 : f32
    %93 = vector.broadcast %cst_21 : f32 to vector<16x20xf32>
    %94 = arith.subf %93, %87 : vector<16x20xf32>
    %95 = arith.mulf %94, %92 : vector<16x20xf32>
    %96 = arith.mulf %87, %68 : vector<16x20xf32>
    %97 = arith.addf %95, %96 : vector<16x20xf32>
    %98 = vector.extract_strided_slice %5 {offsets = [48, 0], sizes = [16, 384], strides = [1, 1]} : vector<128x384xf32> to vector<16x384xf32>
    %cst_22 = arith.constant dense<0.000000e+00> : vector<16x384xf32>
    %99 = tpu.matmul %97, %9, %cst_22 {dimension_numbers = #tpu.dot_dimension_numbers<[1], [0], [0], [1], [0, 0, 1, 1], [], []>} : vector<16x20xf32>, vector<20x384xf32>, vector<16x384xf32> -> vector<16x384xf32>
    %100 = arith.addf %99, %8 : vector<16x384xf32>
    %101 = vector.extract_strided_slice %98 {offsets = [0, 0], sizes = [16, 20], strides = [1, 1]} : vector<16x384xf32> to vector<16x20xf32>
    %102 = vector.extract_strided_slice %100 {offsets = [0, 0], sizes = [16, 20], strides = [1, 1]} : vector<16x384xf32> to vector<16x20xf32>
    %103 = arith.addf %101, %102 : vector<16x20xf32>
    %104 = arith.negf %103 : vector<16x20xf32>
    %105 = math.exp %104 : vector<16x20xf32>
    %cst_23 = arith.constant 1.000000e+00 : f32
    %106 = vector.broadcast %cst_23 : f32 to vector<16x20xf32>
    %107 = arith.addf %106, %105 : vector<16x20xf32>
    %108 = arith.divf %106, %107 : vector<16x20xf32>
    %109 = vector.extract_strided_slice %98 {offsets = [0, 128], sizes = [16, 20], strides = [1, 1]} : vector<16x384xf32> to vector<16x20xf32>
    %110 = vector.extract_strided_slice %100 {offsets = [0, 128], sizes = [16, 20], strides = [1, 1]} : vector<16x384xf32> to vector<16x20xf32>
    %111 = arith.addf %109, %110 : vector<16x20xf32>
    %112 = arith.negf %111 : vector<16x20xf32>
    %113 = math.exp %112 : vector<16x20xf32>
    %cst_24 = arith.constant 1.000000e+00 : f32
    %114 = vector.broadcast %cst_24 : f32 to vector<16x20xf32>
    %115 = arith.addf %114, %113 : vector<16x20xf32>
    %116 = arith.divf %114, %115 : vector<16x20xf32>
    %117 = vector.extract_strided_slice %98 {offsets = [0, 256], sizes = [16, 20], strides = [1, 1]} : vector<16x384xf32> to vector<16x20xf32>
    %118 = vector.extract_strided_slice %100 {offsets = [0, 256], sizes = [16, 20], strides = [1, 1]} : vector<16x384xf32> to vector<16x20xf32>
    %119 = arith.mulf %108, %118 : vector<16x20xf32>
    %120 = arith.addf %117, %119 : vector<16x20xf32>
    %121 = math.tanh %120 : vector<16x20xf32>
    %cst_25 = arith.constant 1.000000e+00 : f32
    %122 = vector.broadcast %cst_25 : f32 to vector<16x20xf32>
    %123 = arith.subf %122, %116 : vector<16x20xf32>
    %124 = arith.mulf %123, %121 : vector<16x20xf32>
    %125 = arith.mulf %116, %97 : vector<16x20xf32>
    %126 = arith.addf %124, %125 : vector<16x20xf32>
    %127 = vector.extract_strided_slice %5 {offsets = [64, 0], sizes = [16, 384], strides = [1, 1]} : vector<128x384xf32> to vector<16x384xf32>
    %cst_26 = arith.constant dense<0.000000e+00> : vector<16x384xf32>
    %128 = tpu.matmul %126, %9, %cst_26 {dimension_numbers = #tpu.dot_dimension_numbers<[1], [0], [0], [1], [0, 0, 1, 1], [], []>} : vector<16x20xf32>, vector<20x384xf32>, vector<16x384xf32> -> vector<16x384xf32>
    %129 = arith.addf %128, %8 : vector<16x384xf32>
    %130 = vector.extract_strided_slice %127 {offsets = [0, 0], sizes = [16, 20], strides = [1, 1]} : vector<16x384xf32> to vector<16x20xf32>
    %131 = vector.extract_strided_slice %129 {offsets = [0, 0], sizes = [16, 20], strides = [1, 1]} : vector<16x384xf32> to vector<16x20xf32>
    %132 = arith.addf %130, %131 : vector<16x20xf32>
    %133 = arith.negf %132 : vector<16x20xf32>
    %134 = math.exp %133 : vector<16x20xf32>
    %cst_27 = arith.constant 1.000000e+00 : f32
    %135 = vector.broadcast %cst_27 : f32 to vector<16x20xf32>
    %136 = arith.addf %135, %134 : vector<16x20xf32>
    %137 = arith.divf %135, %136 : vector<16x20xf32>
    %138 = vector.extract_strided_slice %127 {offsets = [0, 128], sizes = [16, 20], strides = [1, 1]} : vector<16x384xf32> to vector<16x20xf32>
    %139 = vector.extract_strided_slice %129 {offsets = [0, 128], sizes = [16, 20], strides = [1, 1]} : vector<16x384xf32> to vector<16x20xf32>
    %140 = arith.addf %138, %139 : vector<16x20xf32>
    %141 = arith.negf %140 : vector<16x20xf32>
    %142 = math.exp %141 : vector<16x20xf32>
    %cst_28 = arith.constant 1.000000e+00 : f32
    %143 = vector.broadcast %cst_28 : f32 to vector<16x20xf32>
    %144 = arith.addf %143, %142 : vector<16x20xf32>
    %145 = arith.divf %143, %144 : vector<16x20xf32>
    %146 = vector.extract_strided_slice %127 {offsets = [0, 256], sizes = [16, 20], strides = [1, 1]} : vector<16x384xf32> to vector<16x20xf32>
    %147 = vector.extract_strided_slice %129 {offsets = [0, 256], sizes = [16, 20], strides = [1, 1]} : vector<16x384xf32> to vector<16x20xf32>
    %148 = arith.mulf %137, %147 : vector<16x20xf32>
    %149 = arith.addf %146, %148 : vector<16x20xf32>
    %150 = math.tanh %149 : vector<16x20xf32>
    %cst_29 = arith.constant 1.000000e+00 : f32
    %151 = vector.broadcast %cst_29 : f32 to vector<16x20xf32>
    %152 = arith.subf %151, %145 : vector<16x20xf32>
    %153 = arith.mulf %152, %150 : vector<16x20xf32>
    %154 = arith.mulf %145, %126 : vector<16x20xf32>
    %155 = arith.addf %153, %154 : vector<16x20xf32>
    %156 = vector.extract_strided_slice %5 {offsets = [80, 0], sizes = [16, 384], strides = [1, 1]} : vector<128x384xf32> to vector<16x384xf32>
    %cst_30 = arith.constant dense<0.000000e+00> : vector<16x384xf32>
    %157 = tpu.matmul %155, %9, %cst_30 {dimension_numbers = #tpu.dot_dimension_numbers<[1], [0], [0], [1], [0, 0, 1, 1], [], []>} : vector<16x20xf32>, vector<20x384xf32>, vector<16x384xf32> -> vector<16x384xf32>
    %158 = arith.addf %157, %8 : vector<16x384xf32>
    %159 = vector.extract_strided_slice %156 {offsets = [0, 0], sizes = [16, 20], strides = [1, 1]} : vector<16x384xf32> to vector<16x20xf32>
    %160 = vector.extract_strided_slice %158 {offsets = [0, 0], sizes = [16, 20], strides = [1, 1]} : vector<16x384xf32> to vector<16x20xf32>
    %161 = arith.addf %159, %160 : vector<16x20xf32>
    %162 = arith.negf %161 : vector<16x20xf32>
    %163 = math.exp %162 : vector<16x20xf32>
    %cst_31 = arith.constant 1.000000e+00 : f32
    %164 = vector.broadcast %cst_31 : f32 to vector<16x20xf32>
    %165 = arith.addf %164, %163 : vector<16x20xf32>
    %166 = arith.divf %164, %165 : vector<16x20xf32>
    %167 = vector.extract_strided_slice %156 {offsets = [0, 128], sizes = [16, 20], strides = [1, 1]} : vector<16x384xf32> to vector<16x20xf32>
    %168 = vector.extract_strided_slice %158 {offsets = [0, 128], sizes = [16, 20], strides = [1, 1]} : vector<16x384xf32> to vector<16x20xf32>
    %169 = arith.addf %167, %168 : vector<16x20xf32>
    %170 = arith.negf %169 : vector<16x20xf32>
    %171 = math.exp %170 : vector<16x20xf32>
    %cst_32 = arith.constant 1.000000e+00 : f32
    %172 = vector.broadcast %cst_32 : f32 to vector<16x20xf32>
    %173 = arith.addf %172, %171 : vector<16x20xf32>
    %174 = arith.divf %172, %173 : vector<16x20xf32>
    %175 = vector.extract_strided_slice %156 {offsets = [0, 256], sizes = [16, 20], strides = [1, 1]} : vector<16x384xf32> to vector<16x20xf32>
    %176 = vector.extract_strided_slice %158 {offsets = [0, 256], sizes = [16, 20], strides = [1, 1]} : vector<16x384xf32> to vector<16x20xf32>
    %177 = arith.mulf %166, %176 : vector<16x20xf32>
    %178 = arith.addf %175, %177 : vector<16x20xf32>
    %179 = math.tanh %178 : vector<16x20xf32>
    %cst_33 = arith.constant 1.000000e+00 : f32
    %180 = vector.broadcast %cst_33 : f32 to vector<16x20xf32>
    %181 = arith.subf %180, %174 : vector<16x20xf32>
    %182 = arith.mulf %181, %179 : vector<16x20xf32>
    %183 = arith.mulf %174, %155 : vector<16x20xf32>
    %184 = arith.addf %182, %183 : vector<16x20xf32>
    %185 = vector.extract_strided_slice %5 {offsets = [96, 0], sizes = [16, 384], strides = [1, 1]} : vector<128x384xf32> to vector<16x384xf32>
    %cst_34 = arith.constant dense<0.000000e+00> : vector<16x384xf32>
    %186 = tpu.matmul %184, %9, %cst_34 {dimension_numbers = #tpu.dot_dimension_numbers<[1], [0], [0], [1], [0, 0, 1, 1], [], []>} : vector<16x20xf32>, vector<20x384xf32>, vector<16x384xf32> -> vector<16x384xf32>
    %187 = arith.addf %186, %8 : vector<16x384xf32>
    %188 = vector.extract_strided_slice %185 {offsets = [0, 0], sizes = [16, 20], strides = [1, 1]} : vector<16x384xf32> to vector<16x20xf32>
    %189 = vector.extract_strided_slice %187 {offsets = [0, 0], sizes = [16, 20], strides = [1, 1]} : vector<16x384xf32> to vector<16x20xf32>
    %190 = arith.addf %188, %189 : vector<16x20xf32>
    %191 = arith.negf %190 : vector<16x20xf32>
    %192 = math.exp %191 : vector<16x20xf32>
    %cst_35 = arith.constant 1.000000e+00 : f32
    %193 = vector.broadcast %cst_35 : f32 to vector<16x20xf32>
    %194 = arith.addf %193, %192 : vector<16x20xf32>
    %195 = arith.divf %193, %194 : vector<16x20xf32>
    %196 = vector.extract_strided_slice %185 {offsets = [0, 128], sizes = [16, 20], strides = [1, 1]} : vector<16x384xf32> to vector<16x20xf32>
    %197 = vector.extract_strided_slice %187 {offsets = [0, 128], sizes = [16, 20], strides = [1, 1]} : vector<16x384xf32> to vector<16x20xf32>
    %198 = arith.addf %196, %197 : vector<16x20xf32>
    %199 = arith.negf %198 : vector<16x20xf32>
    %200 = math.exp %199 : vector<16x20xf32>
    %cst_36 = arith.constant 1.000000e+00 : f32
    %201 = vector.broadcast %cst_36 : f32 to vector<16x20xf32>
    %202 = arith.addf %201, %200 : vector<16x20xf32>
    %203 = arith.divf %201, %202 : vector<16x20xf32>
    %204 = vector.extract_strided_slice %185 {offsets = [0, 256], sizes = [16, 20], strides = [1, 1]} : vector<16x384xf32> to vector<16x20xf32>
    %205 = vector.extract_strided_slice %187 {offsets = [0, 256], sizes = [16, 20], strides = [1, 1]} : vector<16x384xf32> to vector<16x20xf32>
    %206 = arith.mulf %195, %205 : vector<16x20xf32>
    %207 = arith.addf %204, %206 : vector<16x20xf32>
    %208 = math.tanh %207 : vector<16x20xf32>
    %cst_37 = arith.constant 1.000000e+00 : f32
    %209 = vector.broadcast %cst_37 : f32 to vector<16x20xf32>
    %210 = arith.subf %209, %203 : vector<16x20xf32>
    %211 = arith.mulf %210, %208 : vector<16x20xf32>
    %212 = arith.mulf %203, %184 : vector<16x20xf32>
    %213 = arith.addf %211, %212 : vector<16x20xf32>
    %214 = vector.extract_strided_slice %5 {offsets = [112, 0], sizes = [16, 384], strides = [1, 1]} : vector<128x384xf32> to vector<16x384xf32>
    %cst_38 = arith.constant dense<0.000000e+00> : vector<16x384xf32>
    %215 = tpu.matmul %213, %9, %cst_38 {dimension_numbers = #tpu.dot_dimension_numbers<[1], [0], [0], [1], [0, 0, 1, 1], [], []>} : vector<16x20xf32>, vector<20x384xf32>, vector<16x384xf32> -> vector<16x384xf32>
    %216 = arith.addf %215, %8 : vector<16x384xf32>
    %217 = vector.extract_strided_slice %214 {offsets = [0, 0], sizes = [16, 20], strides = [1, 1]} : vector<16x384xf32> to vector<16x20xf32>
    %218 = vector.extract_strided_slice %216 {offsets = [0, 0], sizes = [16, 20], strides = [1, 1]} : vector<16x384xf32> to vector<16x20xf32>
    %219 = arith.addf %217, %218 : vector<16x20xf32>
    %220 = arith.negf %219 : vector<16x20xf32>
    %221 = math.exp %220 : vector<16x20xf32>
    %cst_39 = arith.constant 1.000000e+00 : f32
    %222 = vector.broadcast %cst_39 : f32 to vector<16x20xf32>
    %223 = arith.addf %222, %221 : vector<16x20xf32>
    %224 = arith.divf %222, %223 : vector<16x20xf32>
    %225 = vector.extract_strided_slice %214 {offsets = [0, 128], sizes = [16, 20], strides = [1, 1]} : vector<16x384xf32> to vector<16x20xf32>
    %226 = vector.extract_strided_slice %216 {offsets = [0, 128], sizes = [16, 20], strides = [1, 1]} : vector<16x384xf32> to vector<16x20xf32>
    %227 = arith.addf %225, %226 : vector<16x20xf32>
    %228 = arith.negf %227 : vector<16x20xf32>
    %229 = math.exp %228 : vector<16x20xf32>
    %cst_40 = arith.constant 1.000000e+00 : f32
    %230 = vector.broadcast %cst_40 : f32 to vector<16x20xf32>
    %231 = arith.addf %230, %229 : vector<16x20xf32>
    %232 = arith.divf %230, %231 : vector<16x20xf32>
    %233 = vector.extract_strided_slice %214 {offsets = [0, 256], sizes = [16, 20], strides = [1, 1]} : vector<16x384xf32> to vector<16x20xf32>
    %234 = vector.extract_strided_slice %216 {offsets = [0, 256], sizes = [16, 20], strides = [1, 1]} : vector<16x384xf32> to vector<16x20xf32>
    %235 = arith.mulf %224, %234 : vector<16x20xf32>
    %236 = arith.addf %233, %235 : vector<16x20xf32>
    %237 = math.tanh %236 : vector<16x20xf32>
    %cst_41 = arith.constant 1.000000e+00 : f32
    %238 = vector.broadcast %cst_41 : f32 to vector<16x20xf32>
    %239 = arith.subf %238, %232 : vector<16x20xf32>
    %240 = arith.mulf %239, %237 : vector<16x20xf32>
    %241 = arith.mulf %232, %213 : vector<16x20xf32>
    %242 = arith.addf %240, %241 : vector<16x20xf32>
    %243 = tpu.concatenate %39, %68, %97, %126, %155, %184, %213, %242 in 0 : vector<16x20xf32>, vector<16x20xf32>, vector<16x20xf32>, vector<16x20xf32>, vector<16x20xf32>, vector<16x20xf32>, vector<16x20xf32>, vector<16x20xf32> -> vector<128x20xf32>
    %c0_42 = arith.constant 0 : index
    %c0_43 = arith.constant 0 : index
    %244 = vector.load %arg6[%c0_42, %c0_43] : memref<20x20xf32, #tpu.memory_space<vmem>>, vector<20x20xf32>
    %cst_44 = arith.constant dense<0.000000e+00> : vector<128x20xf32>
    %245 = tpu.matmul %243, %244, %cst_44 {dimension_numbers = #tpu.dot_dimension_numbers<[1], [0], [0], [1], [0, 0, 1, 1], [], []>} : vector<128x20xf32>, vector<20x20xf32>, vector<128x20xf32> -> vector<128x20xf32>
    %c0_45 = arith.constant 0 : index
    %c0_46 = arith.constant 0 : index
    %246 = vector.load %arg7[%c0_45, %c0_46] : memref<1x20xf32, #tpu.memory_space<vmem>>, vector<1x20xf32>
    %247 = vector.broadcast %246 : vector<1x20xf32> to vector<128x20xf32>
    %248 = arith.addf %245, %247 : vector<128x20xf32>
    %cst_47 = arith.constant 0.000000e+00 : f32
    %249 = vector.broadcast %cst_47 : f32 to vector<128x20xf32>
    %250 = arith.cmpf ogt, %248, %249 : vector<128x20xf32>
    %cst_48 = arith.constant 5.000000e-01 : f32
    %251 = vector.broadcast %cst_48 : f32 to vector<128x20xf32>
    %252 = arith.mulf %251, %248 : vector<128x20xf32>
    %253 = arith.select %250, %248, %252 : vector<128x20xi1>, vector<128x20xf32>
    %c0_49 = arith.constant 0 : index
    %c0_50 = arith.constant 0 : index
    %254 = vector.load %arg8[%c0_49, %c0_50] : memref<20x12xf32, #tpu.memory_space<vmem>>, vector<20x12xf32>
    %cst_51 = arith.constant dense<0.000000e+00> : vector<128x12xf32>
    %255 = tpu.matmul %253, %254, %cst_51 {dimension_numbers = #tpu.dot_dimension_numbers<[1], [0], [0], [1], [0, 0, 1, 1], [], []>} : vector<128x20xf32>, vector<20x12xf32>, vector<128x12xf32> -> vector<128x12xf32>
    %c0_52 = arith.constant 0 : index
    %c0_53 = arith.constant 0 : index
    %256 = vector.load %arg9[%c0_52, %c0_53] : memref<1x12xf32, #tpu.memory_space<vmem>>, vector<1x12xf32>
    %257 = vector.broadcast %256 : vector<1x12xf32> to vector<128x12xf32>
    %258 = arith.addf %255, %257 : vector<128x12xf32>
    %cst_54 = arith.constant 0.000000e+00 : f32
    %259 = vector.broadcast %cst_54 : f32 to vector<128x12xf32>
    %260 = arith.cmpf ogt, %258, %259 : vector<128x12xf32>
    %cst_55 = arith.constant 5.000000e-01 : f32
    %261 = vector.broadcast %cst_55 : f32 to vector<128x12xf32>
    %262 = arith.mulf %261, %258 : vector<128x12xf32>
    %263 = arith.select %260, %258, %262 : vector<128x12xi1>, vector<128x12xf32>
    %264 = arith.addf %263, %0 : vector<128x12xf32>
    %265 = vector.extract_strided_slice %264 {offsets = [112, 0], sizes = [16, 12], strides = [1, 1]} : vector<128x12xf32> to vector<16x12xf32>
    %266 = vector.extract_strided_slice %265 {offsets = [0, 0], sizes = [16, 6], strides = [1, 1]} : vector<16x12xf32> to vector<16x6xf32>
    %267 = vector.extract_strided_slice %265 {offsets = [0, 6], sizes = [16, 6], strides = [1, 1]} : vector<16x12xf32> to vector<16x6xf32>
    %268 = arith.mulf %267, %267 : vector<16x6xf32>
    %269 = arith.mulf %266, %266 : vector<16x6xf32>
    %270 = arith.addf %269, %268 : vector<16x6xf32>
    %cst_56 = arith.constant 9.99999993E-9 : f32
    %271 = vector.broadcast %cst_56 : f32 to vector<16x6xf32>
    %272 = arith.addf %271, %268 : vector<16x6xf32>
    %273 = math.log %272 : vector<16x6xf32>
    %274 = arith.subf %270, %273 : vector<16x6xf32>
    %cst_57 = arith.constant 1.000000e+00 : f32
    %275 = vector.broadcast %cst_57 : f32 to vector<16x6xf32>
    %276 = arith.subf %274, %275 : vector<16x6xf32>
    %277 = vector.shape_cast %276 : vector<16x6xf32> to vector<1x16x6xf32>
    %cst_58 = arith.constant dense<0.000000e+00> : vector<1xf32>
    %278 = vector.multi_reduction <add>, %277, %cst_58 [1, 2] : vector<1x16x6xf32> to vector<1xf32>
    %279 = vector.shape_cast %278 : vector<1xf32> to vector<1x1x1xf32>
    %280 = vector.extract %279[0, 0, 0] : f32 from vector<1x1x1xf32>
    %281 = vector.broadcast %280 : f32 to vector<1x1xf32>
    %cst_59 = arith.constant 5.000000e-01 : f32
    %282 = vector.broadcast %cst_59 : f32 to vector<1x1xf32>
    %283 = arith.mulf %282, %281 : vector<1x1xf32>
    %c0_60 = arith.constant 0 : index
    %c0_61 = arith.constant 0 : index
    %284 = vector.load %arg19[%c0_60, %c0_61] : memref<1x1xf32, #tpu.memory_space<vmem>>, vector<1x1xf32>
    tpu.vector_store %arg19[%c0_60, %c0_61], %283 {strides = array<i32>} : memref<1x1xf32, #tpu.memory_space<vmem>>, vector<1x1xf32>,
    %c0_62 = arith.constant 0 : index
    %c0_63 = arith.constant 0 : index
    %285 = vector.load %arg1[%c0_62, %c0_63] : memref<16x6xf32, #tpu.memory_space<vmem>>, vector<16x6xf32>
    %286 = arith.mulf %267, %285 : vector<16x6xf32>
    %287 = arith.addf %266, %286 : vector<16x6xf32>
    %c0_64 = arith.constant 0 : index
    %c0_65 = arith.constant 0 : index
    %288 = vector.load %arg10[%c0_64, %c0_65] : memref<6x384xf32, #tpu.memory_space<vmem>>, vector<6x384xf32>
    %cst_66 = arith.constant dense<0.000000e+00> : vector<16x384xf32>
    %289 = tpu.matmul %287, %288, %cst_66 {dimension_numbers = #tpu.dot_dimension_numbers<[1], [0], [0], [1], [0, 0, 1, 1], [], []>} : vector<16x6xf32>, vector<6x384xf32>, vector<16x384xf32> -> vector<16x384xf32>
    %c0_67 = arith.constant 0 : index
    %c0_68 = arith.constant 0 : index
    %290 = vector.load %arg12[%c0_67, %c0_68] : memref<1x384xf32, #tpu.memory_space<vmem>>, vector<1x384xf32>
    %291 = vector.broadcast %290 : vector<1x384xf32> to vector<16x384xf32>
    %292 = arith.addf %289, %291 : vector<16x384xf32>
    %c0_69 = arith.constant 0 : index
    %c0_70 = arith.constant 0 : index
    %293 = vector.load %arg13[%c0_69, %c0_70] : memref<1x384xf32, #tpu.memory_space<vmem>>, vector<1x384xf32>
    %294 = vector.shape_cast %293 : vector<1x384xf32> to vector<1x384xf32>
    %295 = vector.broadcast %294 : vector<1x384xf32> to vector<8x384xf32>
    %c0_71 = arith.constant 0 : index
    %c0_72 = arith.constant 0 : index
    %296 = vector.load %arg11[%c0_71, %c0_72] : memref<16x384xf32, #tpu.memory_space<vmem>>, vector<16x384xf32>
    %cst_73 = arith.constant 0.000000e+00 : f32
    %297 = vector.broadcast %cst_73 : f32 to vector<8x16xf32>
    %298 = vector.extract_strided_slice %292 {offsets = [0, 0], sizes = [8, 384], strides = [1, 1]} : vector<16x384xf32> to vector<8x384xf32>
    %cst_74 = arith.constant dense<0.000000e+00> : vector<8x384xf32>
    %299 = tpu.matmul %297, %296, %cst_74 {dimension_numbers = #tpu.dot_dimension_numbers<[1], [0], [0], [1], [0, 0, 1, 1], [], []>} : vector<8x16xf32>, vector<16x384xf32>, vector<8x384xf32> -> vector<8x384xf32>
    %300 = arith.addf %299, %295 : vector<8x384xf32>
    %301 = vector.extract_strided_slice %298 {offsets = [0, 0], sizes = [8, 16], strides = [1, 1]} : vector<8x384xf32> to vector<8x16xf32>
    %302 = vector.extract_strided_slice %300 {offsets = [0, 0], sizes = [8, 16], strides = [1, 1]} : vector<8x384xf32> to vector<8x16xf32>
    %303 = arith.addf %301, %302 : vector<8x16xf32>
    %304 = arith.negf %303 : vector<8x16xf32>
    %305 = math.exp %304 : vector<8x16xf32>
    %cst_75 = arith.constant 1.000000e+00 : f32
    %306 = vector.broadcast %cst_75 : f32 to vector<8x16xf32>
    %307 = arith.addf %306, %305 : vector<8x16xf32>
    %308 = arith.divf %306, %307 : vector<8x16xf32>
    %309 = vector.extract_strided_slice %298 {offsets = [0, 128], sizes = [8, 16], strides = [1, 1]} : vector<8x384xf32> to vector<8x16xf32>
    %310 = vector.extract_strided_slice %300 {offsets = [0, 128], sizes = [8, 16], strides = [1, 1]} : vector<8x384xf32> to vector<8x16xf32>
    %311 = arith.addf %309, %310 : vector<8x16xf32>
    %312 = arith.negf %311 : vector<8x16xf32>
    %313 = math.exp %312 : vector<8x16xf32>
    %cst_76 = arith.constant 1.000000e+00 : f32
    %314 = vector.broadcast %cst_76 : f32 to vector<8x16xf32>
    %315 = arith.addf %314, %313 : vector<8x16xf32>
    %316 = arith.divf %314, %315 : vector<8x16xf32>
    %317 = vector.extract_strided_slice %298 {offsets = [0, 256], sizes = [8, 16], strides = [1, 1]} : vector<8x384xf32> to vector<8x16xf32>
    %318 = vector.extract_strided_slice %300 {offsets = [0, 256], sizes = [8, 16], strides = [1, 1]} : vector<8x384xf32> to vector<8x16xf32>
    %319 = arith.mulf %308, %318 : vector<8x16xf32>
    %320 = arith.addf %317, %319 : vector<8x16xf32>
    %321 = math.tanh %320 : vector<8x16xf32>
    %cst_77 = arith.constant 1.000000e+00 : f32
    %322 = vector.broadcast %cst_77 : f32 to vector<8x16xf32>
    %323 = arith.subf %322, %316 : vector<8x16xf32>
    %324 = arith.mulf %323, %321 : vector<8x16xf32>
    %325 = arith.mulf %316, %297 : vector<8x16xf32>
    %326 = arith.addf %324, %325 : vector<8x16xf32>
    %327 = vector.extract_strided_slice %292 {offsets = [1, 0], sizes = [8, 384], strides = [1, 1]} : vector<16x384xf32> to vector<8x384xf32>
    %cst_78 = arith.constant dense<0.000000e+00> : vector<8x384xf32>
    %328 = tpu.matmul %326, %296, %cst_78 {dimension_numbers = #tpu.dot_dimension_numbers<[1], [0], [0], [1], [0, 0, 1, 1], [], []>} : vector<8x16xf32>, vector<16x384xf32>, vector<8x384xf32> -> vector<8x384xf32>
    %329 = arith.addf %328, %295 : vector<8x384xf32>
    %330 = vector.extract_strided_slice %327 {offsets = [0, 0], sizes = [8, 16], strides = [1, 1]} : vector<8x384xf32> to vector<8x16xf32>
    %331 = vector.extract_strided_slice %329 {offsets = [0, 0], sizes = [8, 16], strides = [1, 1]} : vector<8x384xf32> to vector<8x16xf32>
    %332 = arith.addf %330, %331 : vector<8x16xf32>
    %333 = arith.negf %332 : vector<8x16xf32>
    %334 = math.exp %333 : vector<8x16xf32>
    %cst_79 = arith.constant 1.000000e+00 : f32
    %335 = vector.broadcast %cst_79 : f32 to vector<8x16xf32>
    %336 = arith.addf %335, %334 : vector<8x16xf32>
    %337 = arith.divf %335, %336 : vector<8x16xf32>
    %338 = vector.extract_strided_slice %327 {offsets = [0, 128], sizes = [8, 16], strides = [1, 1]} : vector<8x384xf32> to vector<8x16xf32>
    %339 = vector.extract_strided_slice %329 {offsets = [0, 128], sizes = [8, 16], strides = [1, 1]} : vector<8x384xf32> to vector<8x16xf32>
    %340 = arith.addf %338, %339 : vector<8x16xf32>
    %341 = arith.negf %340 : vector<8x16xf32>
    %342 = math.exp %341 : vector<8x16xf32>
    %cst_80 = arith.constant 1.000000e+00 : f32
    %343 = vector.broadcast %cst_80 : f32 to vector<8x16xf32>
    %344 = arith.addf %343, %342 : vector<8x16xf32>
    %345 = arith.divf %343, %344 : vector<8x16xf32>
    %346 = vector.extract_strided_slice %327 {offsets = [0, 256], sizes = [8, 16], strides = [1, 1]} : vector<8x384xf32> to vector<8x16xf32>
    %347 = vector.extract_strided_slice %329 {offsets = [0, 256], sizes = [8, 16], strides = [1, 1]} : vector<8x384xf32> to vector<8x16xf32>
    %348 = arith.mulf %337, %347 : vector<8x16xf32>
    %349 = arith.addf %346, %348 : vector<8x16xf32>
    %350 = math.tanh %349 : vector<8x16xf32>
    %cst_81 = arith.constant 1.000000e+00 : f32
    %351 = vector.broadcast %cst_81 : f32 to vector<8x16xf32>
    %352 = arith.subf %351, %345 : vector<8x16xf32>
    %353 = arith.mulf %352, %350 : vector<8x16xf32>
    %354 = arith.mulf %345, %326 : vector<8x16xf32>
    %355 = arith.addf %353, %354 : vector<8x16xf32>
    %356 = vector.extract_strided_slice %292 {offsets = [2, 0], sizes = [8, 384], strides = [1, 1]} : vector<16x384xf32> to vector<8x384xf32>
    %cst_82 = arith.constant dense<0.000000e+00> : vector<8x384xf32>
    %357 = tpu.matmul %355, %296, %cst_82 {dimension_numbers = #tpu.dot_dimension_numbers<[1], [0], [0], [1], [0, 0, 1, 1], [], []>} : vector<8x16xf32>, vector<16x384xf32>, vector<8x384xf32> -> vector<8x384xf32>
    %358 = arith.addf %357, %295 : vector<8x384xf32>
    %359 = vector.extract_strided_slice %356 {offsets = [0, 0], sizes = [8, 16], strides = [1, 1]} : vector<8x384xf32> to vector<8x16xf32>
    %360 = vector.extract_strided_slice %358 {offsets = [0, 0], sizes = [8, 16], strides = [1, 1]} : vector<8x384xf32> to vector<8x16xf32>
    %361 = arith.addf %359, %360 : vector<8x16xf32>
    %362 = arith.negf %361 : vector<8x16xf32>
    %363 = math.exp %362 : vector<8x16xf32>
    %cst_83 = arith.constant 1.000000e+00 : f32
    %364 = vector.broadcast %cst_83 : f32 to vector<8x16xf32>
    %365 = arith.addf %364, %363 : vector<8x16xf32>
    %366 = arith.divf %364, %365 : vector<8x16xf32>
    %367 = vector.extract_strided_slice %356 {offsets = [0, 128], sizes = [8, 16], strides = [1, 1]} : vector<8x384xf32> to vector<8x16xf32>
    %368 = vector.extract_strided_slice %358 {offsets = [0, 128], sizes = [8, 16], strides = [1, 1]} : vector<8x384xf32> to vector<8x16xf32>
    %369 = arith.addf %367, %368 : vector<8x16xf32>
    %370 = arith.negf %369 : vector<8x16xf32>
    %371 = math.exp %370 : vector<8x16xf32>
    %cst_84 = arith.constant 1.000000e+00 : f32
    %372 = vector.broadcast %cst_84 : f32 to vector<8x16xf32>
    %373 = arith.addf %372, %371 : vector<8x16xf32>
    %374 = arith.divf %372, %373 : vector<8x16xf32>
    %375 = vector.extract_strided_slice %356 {offsets = [0, 256], sizes = [8, 16], strides = [1, 1]} : vector<8x384xf32> to vector<8x16xf32>
    %376 = vector.extract_strided_slice %358 {offsets = [0, 256], sizes = [8, 16], strides = [1, 1]} : vector<8x384xf32> to vector<8x16xf32>
    %377 = arith.mulf %366, %376 : vector<8x16xf32>
    %378 = arith.addf %375, %377 : vector<8x16xf32>
    %379 = math.tanh %378 : vector<8x16xf32>
    %cst_85 = arith.constant 1.000000e+00 : f32
    %380 = vector.broadcast %cst_85 : f32 to vector<8x16xf32>
    %381 = arith.subf %380, %374 : vector<8x16xf32>
    %382 = arith.mulf %381, %379 : vector<8x16xf32>
    %383 = arith.mulf %374, %355 : vector<8x16xf32>
    %384 = arith.addf %382, %383 : vector<8x16xf32>
    %385 = vector.extract_strided_slice %292 {offsets = [3, 0], sizes = [8, 384], strides = [1, 1]} : vector<16x384xf32> to vector<8x384xf32>
    %cst_86 = arith.constant dense<0.000000e+00> : vector<8x384xf32>
    %386 = tpu.matmul %384, %296, %cst_86 {dimension_numbers = #tpu.dot_dimension_numbers<[1], [0], [0], [1], [0, 0, 1, 1], [], []>} : vector<8x16xf32>, vector<16x384xf32>, vector<8x384xf32> -> vector<8x384xf32>
    %387 = arith.addf %386, %295 : vector<8x384xf32>
    %388 = vector.extract_strided_slice %385 {offsets = [0, 0], sizes = [8, 16], strides = [1, 1]} : vector<8x384xf32> to vector<8x16xf32>
    %389 = vector.extract_strided_slice %387 {offsets = [0, 0], sizes = [8, 16], strides = [1, 1]} : vector<8x384xf32> to vector<8x16xf32>
    %390 = arith.addf %388, %389 : vector<8x16xf32>
    %391 = arith.negf %390 : vector<8x16xf32>
    %392 = math.exp %391 : vector<8x16xf32>
    %cst_87 = arith.constant 1.000000e+00 : f32
    %393 = vector.broadcast %cst_87 : f32 to vector<8x16xf32>
    %394 = arith.addf %393, %392 : vector<8x16xf32>
    %395 = arith.divf %393, %394 : vector<8x16xf32>
    %396 = vector.extract_strided_slice %385 {offsets = [0, 128], sizes = [8, 16], strides = [1, 1]} : vector<8x384xf32> to vector<8x16xf32>
    %397 = vector.extract_strided_slice %387 {offsets = [0, 128], sizes = [8, 16], strides = [1, 1]} : vector<8x384xf32> to vector<8x16xf32>
    %398 = arith.addf %396, %397 : vector<8x16xf32>
    %399 = arith.negf %398 : vector<8x16xf32>
    %400 = math.exp %399 : vector<8x16xf32>
    %cst_88 = arith.constant 1.000000e+00 : f32
    %401 = vector.broadcast %cst_88 : f32 to vector<8x16xf32>
    %402 = arith.addf %401, %400 : vector<8x16xf32>
    %403 = arith.divf %401, %402 : vector<8x16xf32>
    %404 = vector.extract_strided_slice %385 {offsets = [0, 256], sizes = [8, 16], strides = [1, 1]} : vector<8x384xf32> to vector<8x16xf32>
    %405 = vector.extract_strided_slice %387 {offsets = [0, 256], sizes = [8, 16], strides = [1, 1]} : vector<8x384xf32> to vector<8x16xf32>
    %406 = arith.mulf %395, %405 : vector<8x16xf32>
    %407 = arith.addf %404, %406 : vector<8x16xf32>
    %408 = math.tanh %407 : vector<8x16xf32>
    %cst_89 = arith.constant 1.000000e+00 : f32
    %409 = vector.broadcast %cst_89 : f32 to vector<8x16xf32>
    %410 = arith.subf %409, %403 : vector<8x16xf32>
    %411 = arith.mulf %410, %408 : vector<8x16xf32>
    %412 = arith.mulf %403, %384 : vector<8x16xf32>
    %413 = arith.addf %411, %412 : vector<8x16xf32>
    %414 = vector.extract_strided_slice %292 {offsets = [4, 0], sizes = [8, 384], strides = [1, 1]} : vector<16x384xf32> to vector<8x384xf32>
    %cst_90 = arith.constant dense<0.000000e+00> : vector<8x384xf32>
    %415 = tpu.matmul %413, %296, %cst_90 {dimension_numbers = #tpu.dot_dimension_numbers<[1], [0], [0], [1], [0, 0, 1, 1], [], []>} : vector<8x16xf32>, vector<16x384xf32>, vector<8x384xf32> -> vector<8x384xf32>
    %416 = arith.addf %415, %295 : vector<8x384xf32>
    %417 = vector.extract_strided_slice %414 {offsets = [0, 0], sizes = [8, 16], strides = [1, 1]} : vector<8x384xf32> to vector<8x16xf32>
    %418 = vector.extract_strided_slice %416 {offsets = [0, 0], sizes = [8, 16], strides = [1, 1]} : vector<8x384xf32> to vector<8x16xf32>
    %419 = arith.addf %417, %418 : vector<8x16xf32>
    %420 = arith.negf %419 : vector<8x16xf32>
    %421 = math.exp %420 : vector<8x16xf32>
    %cst_91 = arith.constant 1.000000e+00 : f32
    %422 = vector.broadcast %cst_91 : f32 to vector<8x16xf32>
    %423 = arith.addf %422, %421 : vector<8x16xf32>
    %424 = arith.divf %422, %423 : vector<8x16xf32>
    %425 = vector.extract_strided_slice %414 {offsets = [0, 128], sizes = [8, 16], strides = [1, 1]} : vector<8x384xf32> to vector<8x16xf32>
    %426 = vector.extract_strided_slice %416 {offsets = [0, 128], sizes = [8, 16], strides = [1, 1]} : vector<8x384xf32> to vector<8x16xf32>
    %427 = arith.addf %425, %426 : vector<8x16xf32>
    %428 = arith.negf %427 : vector<8x16xf32>
    %429 = math.exp %428 : vector<8x16xf32>
    %cst_92 = arith.constant 1.000000e+00 : f32
    %430 = vector.broadcast %cst_92 : f32 to vector<8x16xf32>
    %431 = arith.addf %430, %429 : vector<8x16xf32>
    %432 = arith.divf %430, %431 : vector<8x16xf32>
    %433 = vector.extract_strided_slice %414 {offsets = [0, 256], sizes = [8, 16], strides = [1, 1]} : vector<8x384xf32> to vector<8x16xf32>
    %434 = vector.extract_strided_slice %416 {offsets = [0, 256], sizes = [8, 16], strides = [1, 1]} : vector<8x384xf32> to vector<8x16xf32>
    %435 = arith.mulf %424, %434 : vector<8x16xf32>
    %436 = arith.addf %433, %435 : vector<8x16xf32>
    %437 = math.tanh %436 : vector<8x16xf32>
    %cst_93 = arith.constant 1.000000e+00 : f32
    %438 = vector.broadcast %cst_93 : f32 to vector<8x16xf32>
    %439 = arith.subf %438, %432 : vector<8x16xf32>
    %440 = arith.mulf %439, %437 : vector<8x16xf32>
    %441 = arith.mulf %432, %413 : vector<8x16xf32>
    %442 = arith.addf %440, %441 : vector<8x16xf32>
    %443 = vector.extract_strided_slice %292 {offsets = [5, 0], sizes = [8, 384], strides = [1, 1]} : vector<16x384xf32> to vector<8x384xf32>
    %cst_94 = arith.constant dense<0.000000e+00> : vector<8x384xf32>
    %444 = tpu.matmul %442, %296, %cst_94 {dimension_numbers = #tpu.dot_dimension_numbers<[1], [0], [0], [1], [0, 0, 1, 1], [], []>} : vector<8x16xf32>, vector<16x384xf32>, vector<8x384xf32> -> vector<8x384xf32>
    %445 = arith.addf %444, %295 : vector<8x384xf32>
    %446 = vector.extract_strided_slice %443 {offsets = [0, 0], sizes = [8, 16], strides = [1, 1]} : vector<8x384xf32> to vector<8x16xf32>
    %447 = vector.extract_strided_slice %445 {offsets = [0, 0], sizes = [8, 16], strides = [1, 1]} : vector<8x384xf32> to vector<8x16xf32>
    %448 = arith.addf %446, %447 : vector<8x16xf32>
    %449 = arith.negf %448 : vector<8x16xf32>
    %450 = math.exp %449 : vector<8x16xf32>
    %cst_95 = arith.constant 1.000000e+00 : f32
    %451 = vector.broadcast %cst_95 : f32 to vector<8x16xf32>
    %452 = arith.addf %451, %450 : vector<8x16xf32>
    %453 = arith.divf %451, %452 : vector<8x16xf32>
    %454 = vector.extract_strided_slice %443 {offsets = [0, 128], sizes = [8, 16], strides = [1, 1]} : vector<8x384xf32> to vector<8x16xf32>
    %455 = vector.extract_strided_slice %445 {offsets = [0, 128], sizes = [8, 16], strides = [1, 1]} : vector<8x384xf32> to vector<8x16xf32>
    %456 = arith.addf %454, %455 : vector<8x16xf32>
    %457 = arith.negf %456 : vector<8x16xf32>
    %458 = math.exp %457 : vector<8x16xf32>
    %cst_96 = arith.constant 1.000000e+00 : f32
    %459 = vector.broadcast %cst_96 : f32 to vector<8x16xf32>
    %460 = arith.addf %459, %458 : vector<8x16xf32>
    %461 = arith.divf %459, %460 : vector<8x16xf32>
    %462 = vector.extract_strided_slice %443 {offsets = [0, 256], sizes = [8, 16], strides = [1, 1]} : vector<8x384xf32> to vector<8x16xf32>
    %463 = vector.extract_strided_slice %445 {offsets = [0, 256], sizes = [8, 16], strides = [1, 1]} : vector<8x384xf32> to vector<8x16xf32>
    %464 = arith.mulf %453, %463 : vector<8x16xf32>
    %465 = arith.addf %462, %464 : vector<8x16xf32>
    %466 = math.tanh %465 : vector<8x16xf32>
    %cst_97 = arith.constant 1.000000e+00 : f32
    %467 = vector.broadcast %cst_97 : f32 to vector<8x16xf32>
    %468 = arith.subf %467, %461 : vector<8x16xf32>
    %469 = arith.mulf %468, %466 : vector<8x16xf32>
    %470 = arith.mulf %461, %442 : vector<8x16xf32>
    %471 = arith.addf %469, %470 : vector<8x16xf32>
    %472 = vector.extract_strided_slice %292 {offsets = [6, 0], sizes = [8, 384], strides = [1, 1]} : vector<16x384xf32> to vector<8x384xf32>
    %cst_98 = arith.constant dense<0.000000e+00> : vector<8x384xf32>
    %473 = tpu.matmul %471, %296, %cst_98 {dimension_numbers = #tpu.dot_dimension_numbers<[1], [0], [0], [1], [0, 0, 1, 1], [], []>} : vector<8x16xf32>, vector<16x384xf32>, vector<8x384xf32> -> vector<8x384xf32>
    %474 = arith.addf %473, %295 : vector<8x384xf32>
    %475 = vector.extract_strided_slice %472 {offsets = [0, 0], sizes = [8, 16], strides = [1, 1]} : vector<8x384xf32> to vector<8x16xf32>
    %476 = vector.extract_strided_slice %474 {offsets = [0, 0], sizes = [8, 16], strides = [1, 1]} : vector<8x384xf32> to vector<8x16xf32>
    %477 = arith.addf %475, %476 : vector<8x16xf32>
    %478 = arith.negf %477 : vector<8x16xf32>
    %479 = math.exp %478 : vector<8x16xf32>
    %cst_99 = arith.constant 1.000000e+00 : f32
    %480 = vector.broadcast %cst_99 : f32 to vector<8x16xf32>
    %481 = arith.addf %480, %479 : vector<8x16xf32>
    %482 = arith.divf %480, %481 : vector<8x16xf32>
    %483 = vector.extract_strided_slice %472 {offsets = [0, 128], sizes = [8, 16], strides = [1, 1]} : vector<8x384xf32> to vector<8x16xf32>
    %484 = vector.extract_strided_slice %474 {offsets = [0, 128], sizes = [8, 16], strides = [1, 1]} : vector<8x384xf32> to vector<8x16xf32>
    %485 = arith.addf %483, %484 : vector<8x16xf32>
    %486 = arith.negf %485 : vector<8x16xf32>
    %487 = math.exp %486 : vector<8x16xf32>
    %cst_100 = arith.constant 1.000000e+00 : f32
    %488 = vector.broadcast %cst_100 : f32 to vector<8x16xf32>
    %489 = arith.addf %488, %487 : vector<8x16xf32>
    %490 = arith.divf %488, %489 : vector<8x16xf32>
    %491 = vector.extract_strided_slice %472 {offsets = [0, 256], sizes = [8, 16], strides = [1, 1]} : vector<8x384xf32> to vector<8x16xf32>
    %492 = vector.extract_strided_slice %474 {offsets = [0, 256], sizes = [8, 16], strides = [1, 1]} : vector<8x384xf32> to vector<8x16xf32>
    %493 = arith.mulf %482, %492 : vector<8x16xf32>
    %494 = arith.addf %491, %493 : vector<8x16xf32>
    %495 = math.tanh %494 : vector<8x16xf32>
    %cst_101 = arith.constant 1.000000e+00 : f32
    %496 = vector.broadcast %cst_101 : f32 to vector<8x16xf32>
    %497 = arith.subf %496, %490 : vector<8x16xf32>
    %498 = arith.mulf %497, %495 : vector<8x16xf32>
    %499 = arith.mulf %490, %471 : vector<8x16xf32>
    %500 = arith.addf %498, %499 : vector<8x16xf32>
    %501 = vector.extract_strided_slice %292 {offsets = [7, 0], sizes = [8, 384], strides = [1, 1]} : vector<16x384xf32> to vector<8x384xf32>
    %cst_102 = arith.constant dense<0.000000e+00> : vector<8x384xf32>
    %502 = tpu.matmul %500, %296, %cst_102 {dimension_numbers = #tpu.dot_dimension_numbers<[1], [0], [0], [1], [0, 0, 1, 1], [], []>} : vector<8x16xf32>, vector<16x384xf32>, vector<8x384xf32> -> vector<8x384xf32>
    %503 = arith.addf %502, %295 : vector<8x384xf32>
    %504 = vector.extract_strided_slice %501 {offsets = [0, 0], sizes = [8, 16], strides = [1, 1]} : vector<8x384xf32> to vector<8x16xf32>
    %505 = vector.extract_strided_slice %503 {offsets = [0, 0], sizes = [8, 16], strides = [1, 1]} : vector<8x384xf32> to vector<8x16xf32>
    %506 = arith.addf %504, %505 : vector<8x16xf32>
    %507 = arith.negf %506 : vector<8x16xf32>
    %508 = math.exp %507 : vector<8x16xf32>
    %cst_103 = arith.constant 1.000000e+00 : f32
    %509 = vector.broadcast %cst_103 : f32 to vector<8x16xf32>
    %510 = arith.addf %509, %508 : vector<8x16xf32>
    %511 = arith.divf %509, %510 : vector<8x16xf32>
    %512 = vector.extract_strided_slice %501 {offsets = [0, 128], sizes = [8, 16], strides = [1, 1]} : vector<8x384xf32> to vector<8x16xf32>
    %513 = vector.extract_strided_slice %503 {offsets = [0, 128], sizes = [8, 16], strides = [1, 1]} : vector<8x384xf32> to vector<8x16xf32>
    %514 = arith.addf %512, %513 : vector<8x16xf32>
    %515 = arith.negf %514 : vector<8x16xf32>
    %516 = math.exp %515 : vector<8x16xf32>
    %cst_104 = arith.constant 1.000000e+00 : f32
    %517 = vector.broadcast %cst_104 : f32 to vector<8x16xf32>
    %518 = arith.addf %517, %516 : vector<8x16xf32>
    %519 = arith.divf %517, %518 : vector<8x16xf32>
    %520 = vector.extract_strided_slice %501 {offsets = [0, 256], sizes = [8, 16], strides = [1, 1]} : vector<8x384xf32> to vector<8x16xf32>
    %521 = vector.extract_strided_slice %503 {offsets = [0, 256], sizes = [8, 16], strides = [1, 1]} : vector<8x384xf32> to vector<8x16xf32>
    %522 = arith.mulf %511, %521 : vector<8x16xf32>
    %523 = arith.addf %520, %522 : vector<8x16xf32>
    %524 = math.tanh %523 : vector<8x16xf32>
    %cst_105 = arith.constant 1.000000e+00 : f32
    %525 = vector.broadcast %cst_105 : f32 to vector<8x16xf32>
    %526 = arith.subf %525, %519 : vector<8x16xf32>
    %527 = arith.mulf %526, %524 : vector<8x16xf32>
    %528 = arith.mulf %519, %500 : vector<8x16xf32>
    %529 = arith.addf %527, %528 : vector<8x16xf32>
    %530 = tpu.concatenate %326, %355, %384, %413, %442, %471, %500, %529 in 0 : vector<8x16xf32>, vector<8x16xf32>, vector<8x16xf32>, vector<8x16xf32>, vector<8x16xf32>, vector<8x16xf32>, vector<8x16xf32>, vector<8x16xf32> -> vector<64x16xf32>
    %c0_106 = arith.constant 0 : index
    %c0_107 = arith.constant 0 : index
    %531 = vector.load %arg14[%c0_106, %c0_107] : memref<16x12xf32, #tpu.memory_space<vmem>>, vector<16x12xf32>
    %cst_108 = arith.constant dense<0.000000e+00> : vector<64x12xf32>
    %532 = tpu.matmul %530, %531, %cst_108 {dimension_numbers = #tpu.dot_dimension_numbers<[1], [0], [0], [1], [0, 0, 1, 1], [], []>} : vector<64x16xf32>, vector<16x12xf32>, vector<64x12xf32> -> vector<64x12xf32>
    %c0_109 = arith.constant 0 : index
    %c0_110 = arith.constant 0 : index
    %533 = vector.load %arg15[%c0_109, %c0_110] : memref<1x12xf32, #tpu.memory_space<vmem>>, vector<1x12xf32>
    %534 = vector.broadcast %533 : vector<1x12xf32> to vector<64x12xf32>
    %535 = arith.addf %532, %534 : vector<64x12xf32>
    %cst_111 = arith.constant 0.000000e+00 : f32
    %536 = vector.broadcast %cst_111 : f32 to vector<64x12xf32>
    %537 = arith.cmpf ogt, %535, %536 : vector<64x12xf32>
    %cst_112 = arith.constant 5.000000e-01 : f32
    %538 = vector.broadcast %cst_112 : f32 to vector<64x12xf32>
    %539 = arith.mulf %538, %535 : vector<64x12xf32>
    %540 = arith.select %537, %535, %539 : vector<64x12xi1>, vector<64x12xf32>
    %541 = vector.extract_strided_slice %264 {offsets = [8, 0], sizes = [8, 12], strides = [1, 1]} : vector<128x12xf32> to vector<8x12xf32>
    %542 = vector.extract_strided_slice %264 {offsets = [24, 0], sizes = [8, 12], strides = [1, 1]} : vector<128x12xf32> to vector<8x12xf32>
    %543 = vector.extract_strided_slice %264 {offsets = [40, 0], sizes = [8, 12], strides = [1, 1]} : vector<128x12xf32> to vector<8x12xf32>
    %544 = vector.extract_strided_slice %264 {offsets = [56, 0], sizes = [8, 12], strides = [1, 1]} : vector<128x12xf32> to vector<8x12xf32>
    %545 = vector.extract_strided_slice %264 {offsets = [72, 0], sizes = [8, 12], strides = [1, 1]} : vector<128x12xf32> to vector<8x12xf32>
    %546 = vector.extract_strided_slice %264 {offsets = [88, 0], sizes = [8, 12], strides = [1, 1]} : vector<128x12xf32> to vector<8x12xf32>
    %547 = vector.extract_strided_slice %264 {offsets = [104, 0], sizes = [8, 12], strides = [1, 1]} : vector<128x12xf32> to vector<8x12xf32>
    %548 = vector.extract_strided_slice %264 {offsets = [120, 0], sizes = [8, 12], strides = [1, 1]} : vector<128x12xf32> to vector<8x12xf32>
    %549 = tpu.concatenate %541, %542, %543, %544, %545, %546, %547, %548 in 0 : vector<8x12xf32>, vector<8x12xf32>, vector<8x12xf32>, vector<8x12xf32>, vector<8x12xf32>, vector<8x12xf32>, vector<8x12xf32>, vector<8x12xf32> -> vector<64x12xf32>
    %550 = arith.addf %540, %549 : vector<64x12xf32>
    %c0_113 = arith.constant 0 : index
    %c0_114 = arith.constant 0 : index
    %551 = vector.load %arg16[%c0_113, %c0_114] : memref<12x12xf32, #tpu.memory_space<vmem>>, vector<12x12xf32>
    %cst_115 = arith.constant dense<0.000000e+00> : vector<64x12xf32>
    %552 = tpu.matmul %550, %551, %cst_115 {dimension_numbers = #tpu.dot_dimension_numbers<[1], [0], [0], [1], [0, 0, 1, 1], [], []>} : vector<64x12xf32>, vector<12x12xf32>, vector<64x12xf32> -> vector<64x12xf32>
    %c0_116 = arith.constant 0 : index
    %c0_117 = arith.constant 0 : index
    %553 = vector.load %arg17[%c0_116, %c0_117] : memref<1x12xf32, #tpu.memory_space<vmem>>, vector<1x12xf32>
    %554 = vector.broadcast %553 : vector<1x12xf32> to vector<64x12xf32>
    %555 = arith.addf %552, %554 : vector<64x12xf32>
    %556 = arith.negf %555 : vector<64x12xf32>
    %557 = math.exp %556 : vector<64x12xf32>
    %cst_118 = arith.constant 1.000000e+00 : f32
    %558 = vector.broadcast %cst_118 : f32 to vector<64x12xf32>
    %559 = arith.addf %558, %557 : vector<64x12xf32>
    %560 = arith.divf %558, %559 : vector<64x12xf32>
    %c0_119 = arith.constant 0 : index
    %c0_120 = arith.constant 0 : index
    %561 = vector.load %arg18[%c0_119, %c0_120] : memref<64x12xf32, #tpu.memory_space<vmem>>, vector<64x12xf32>
    tpu.vector_store %arg18[%c0_119, %c0_120], %560 {strides = array<i32>} : memref<64x12xf32, #tpu.memory_space<vmem>>, vector<64x12xf32>,
    return
  }
}

</mosaic_0001>

<llo_original>
// kernel: gruvae2_forward.1
$region0: #{gruvae2_forward.1}
  #allocation0 [shape = 'u32[]', space=smem, size = 0x4, offset = 0x4, fixed_abs, tag = 'smem constant byte address 0x4 - core index']
  #allocation1 [shape = 'u32[144,128]{1,0:T(1,128)}', space=vmem, size = 0x12000, scoped, tag = 'internal scratch']
  %s0 = inlined_call_operand.vmem [shape: f32[128,12], index: 0, kind: input, shape index: {}]
  %s1 = inlined_call_operand.vmem [shape: f32[16,6], index: 1, kind: input, shape index: {}]
  %s2 = inlined_call_operand.vmem [shape: f32[12,384], index: 2, kind: input, shape index: {}]
  %s3 = inlined_call_operand.vmem [shape: f32[20,384], index: 3, kind: input, shape index: {}]
  %s4 = inlined_call_operand.vmem [shape: f32[1,384], index: 4, kind: input, shape index: {}]
  %s5 = inlined_call_operand.vmem [shape: f32[1,384], index: 5, kind: input, shape index: {}]
  %s6 = inlined_call_operand.vmem [shape: f32[20,20], index: 6, kind: input, shape index: {}]
  %s7 = inlined_call_operand.vmem [shape: f32[1,20], index: 7, kind: input, shape index: {}]
  %s8 = inlined_call_operand.vmem [shape: f32[20,12], index: 8, kind: input, shape index: {}]
  %s9 = inlined_call_operand.vmem [shape: f32[1,12], index: 9, kind: input, shape index: {}]
  %s10 = inlined_call_operand.vmem [shape: f32[6,384], index: 10, kind: input, shape index: {}]
  %s11 = inlined_call_operand.vmem [shape: f32[16,384], index: 11, kind: input, shape index: {}]
  %s12 = inlined_call_operand.vmem [shape: f32[1,384], index: 12, kind: input, shape index: {}]
  %s13 = inlined_call_operand.vmem [shape: f32[1,384], index: 13, kind: input, shape index: {}]
  %s14 = inlined_call_operand.vmem [shape: f32[16,12], index: 14, kind: input, shape index: {}]
  %s15 = inlined_call_operand.vmem [shape: f32[1,12], index: 15, kind: input, shape index: {}]
  %s16 = inlined_call_operand.vmem [shape: f32[12,12], index: 16, kind: input, shape index: {}]
  %s17 = inlined_call_operand.vmem [shape: f32[1,12], index: 17, kind: input, shape index: {}]
  %s18 = inlined_call_operand.vmem [shape: f32[64,12], index: 18, kind: output, shape index: {0}]
  %s19 = inlined_call_operand.hbm [shape: f32[1,1], index: 19, kind: output, shape index: {1}]
  %20 = xla_tuple %s18, %s19
  %s21 = sld [smem:[#allocation0]]
  $region90: #{gruvae2_forward.1} parent=0
    _
  %s23 = ssub.s32 1, %s21
  %s24 = scalar_select 0, %s23, %s21
  $region1: #{gruvae2_forward.1} parent=0
    #allocation2 [shape = 'u8[512]{0}', space=vmem, size = 0x400, scoped, tag = 'output window, operand 1, single buffered']
    #allocation3 [shape = 's32[1]{0}', space=sflag, size = 0x4, scoped, tag = 'scoped memory for gruvae2_forward.1']
    %25 = vsyncpa [#allocation3], 0
    // Predicated region
    $region2: #{gruvae2_forward.1} parent=1 // pred_check
      _
    $region3: #{gruvae2_forward.1} parent=1 // pred_check_branch
      %27 = sbr.rel (0) target = $region5
    $region4: #{gruvae2_forward.1} parent=1 // pred_region
      _
    $region5: #{gruvae2_forward.1} parent=1 // pred_fallthru
      _
    // Predicated region
    $region6: #{gruvae2_forward.1} parent=1 // pred_check
      _
    $region7: #{gruvae2_forward.1} parent=1 // pred_check_branch
      %29 = sbr.rel (0) target = $region9
    $region8: #{gruvae2_forward.1} parent=1 // pred_region
      _
    $region9: #{gruvae2_forward.1} parent=1 // pred_fallthru
      _
    // Predicated region
    $region10: #{gruvae2_forward.1} parent=1 // pred_check
      _
    $region11: #{gruvae2_forward.1} parent=1 // pred_check_branch
      %31 = sbr.rel (0) target = $region13
    $region12: #{gruvae2_forward.1} parent=1 // pred_region
      _
    $region13: #{gruvae2_forward.1} parent=1 // pred_fallthru
      _
    // Predicated region
    $region14: #{gruvae2_forward.1} parent=1 // pred_check
      _
    $region15: #{gruvae2_forward.1} parent=1 // pred_check_branch
      %33 = sbr.rel (0) target = $region17
    $region16: #{gruvae2_forward.1} parent=1 // pred_region
      _
    $region17: #{gruvae2_forward.1} parent=1 // pred_fallthru
      _
    // Predicated region
    $region18: #{gruvae2_forward.1} parent=1 // pred_check
      _
    $region19: #{gruvae2_forward.1} parent=1 // pred_check_branch
      %35 = sbr.rel (0) target = $region21
    $region20: #{gruvae2_forward.1} parent=1 // pred_region
      _
    $region21: #{gruvae2_forward.1} parent=1 // pred_fallthru
      _
    // Predicated region
    $region22: #{gruvae2_forward.1} parent=1 // pred_check
      _
    $region23: #{gruvae2_forward.1} parent=1 // pred_check_branch
      %37 = sbr.rel (0) target = $region25
    $region24: #{gruvae2_forward.1} parent=1 // pred_region
      _
    $region25: #{gruvae2_forward.1} parent=1 // pred_fallthru
      _
    // Predicated region
    $region26: #{gruvae2_forward.1} parent=1 // pred_check
      _
    $region27: #{gruvae2_forward.1} parent=1 // pred_check_branch
      %39 = sbr.rel (0) target = $region29
    $region28: #{gruvae2_forward.1} parent=1 // pred_region
      _
    $region29: #{gruvae2_forward.1} parent=1 // pred_fallthru
      _
    // Predicated region
    $region30: #{gruvae2_forward.1} parent=1 // pred_check
      _
    $region31: #{gruvae2_forward.1} parent=1 // pred_check_branch
      %41 = sbr.rel (0) target = $region33
    $region32: #{gruvae2_forward.1} parent=1 // pred_region
      _
    $region33: #{gruvae2_forward.1} parent=1 // pred_fallthru
      _
    // Predicated region
    $region34: #{gruvae2_forward.1} parent=1 // pred_check
      _
    $region35: #{gruvae2_forward.1} parent=1 // pred_check_branch
      %43 = sbr.rel (0) target = $region37
    $region36: #{gruvae2_forward.1} parent=1 // pred_region
      _
    $region37: #{gruvae2_forward.1} parent=1 // pred_fallthru
      _
    // Predicated region
    $region38: #{gruvae2_forward.1} parent=1 // pred_check
      _
    $region39: #{gruvae2_forward.1} parent=1 // pred_check_branch
      %45 = sbr.rel (0) target = $region41
    $region40: #{gruvae2_forward.1} parent=1 // pred_region
      _
    $region41: #{gruvae2_forward.1} parent=1 // pred_fallthru
      _
    // Predicated region
    $region42: #{gruvae2_forward.1} parent=1 // pred_check
      _
    $region43: #{gruvae2_forward.1} parent=1 // pred_check_branch
      %47 = sbr.rel (0) target = $region45
    $region44: #{gruvae2_forward.1} parent=1 // pred_region
      _
    $region45: #{gruvae2_forward.1} parent=1 // pred_fallthru
      _
    // Predicated region
    $region46: #{gruvae2_forward.1} parent=1 // pred_check
      _
    $region47: #{gruvae2_forward.1} parent=1 // pred_check_branch
      %49 = sbr.rel (0) target = $region49
    $region48: #{gruvae2_forward.1} parent=1 // pred_region
      _
    $region49: #{gruvae2_forward.1} parent=1 // pred_fallthru
      _
    // Predicated region
    $region50: #{gruvae2_forward.1} parent=1 // pred_check
      _
    $region51: #{gruvae2_forward.1} parent=1 // pred_check_branch
      %51 = sbr.rel (0) target = $region53
    $region52: #{gruvae2_forward.1} parent=1 // pred_region
      _
    $region53: #{gruvae2_forward.1} parent=1 // pred_fallthru
      _
    // Predicated region
    $region54: #{gruvae2_forward.1} parent=1 // pred_check
      _
    $region55: #{gruvae2_forward.1} parent=1 // pred_check_branch
      %53 = sbr.rel (0) target = $region57
    $region56: #{gruvae2_forward.1} parent=1 // pred_region
      _
    $region57: #{gruvae2_forward.1} parent=1 // pred_fallthru
      _
    // Predicated region
    $region58: #{gruvae2_forward.1} parent=1 // pred_check
      _
    $region59: #{gruvae2_forward.1} parent=1 // pred_check_branch
      %55 = sbr.rel (0) target = $region61
    $region60: #{gruvae2_forward.1} parent=1 // pred_region
      _
    $region61: #{gruvae2_forward.1} parent=1 // pred_fallthru
      _
    // Predicated region
    $region62: #{gruvae2_forward.1} parent=1 // pred_check
      _
    $region63: #{gruvae2_forward.1} parent=1 // pred_check_branch
      %57 = sbr.rel (0) target = $region65
    $region64: #{gruvae2_forward.1} parent=1 // pred_region
      _
    $region65: #{gruvae2_forward.1} parent=1 // pred_fallthru
      _
    // Predicated region
    $region66: #{gruvae2_forward.1} parent=1 // pred_check
      _
    $region67: #{gruvae2_forward.1} parent=1 // pred_check_branch
      %59 = sbr.rel (0) target = $region69
    $region68: #{gruvae2_forward.1} parent=1 // pred_region
      _
    $region69: #{gruvae2_forward.1} parent=1 // pred_fallthru
      _
    // Predicated region
    $region70: #{gruvae2_forward.1} parent=1 // pred_check
      _
    $region71: #{gruvae2_forward.1} parent=1 // pred_check_branch
      %61 = sbr.rel (0) target = $region73
    $region72: #{gruvae2_forward.1} parent=1 // pred_region
      _
    $region73: #{gruvae2_forward.1} parent=1 // pred_fallthru
      _
    %v62 = vld [vmem:[%s0] sm:$0xff]
    %v63 = vld [vmem:[%s0 + $0x8] sm:$0xff]
    %v64 = vld [vmem:[%s0 + $0x10] sm:$0xff]
    %v65 = vld [vmem:[%s0 + $0x18] sm:$0xff]
    %v66 = vld [vmem:[%s0 + $0x20] sm:$0xff]
    %v67 = vld [vmem:[%s0 + $0x28] sm:$0xff]
    %v68 = vld [vmem:[%s0 + $0x30] sm:$0xff]
    %v69 = vld [vmem:[%s0 + $0x38] sm:$0xff]
    %v70 = vld [vmem:[%s0 + $0x40] sm:$0xff]
    %v71 = vld [vmem:[%s0 + $0x48] sm:$0xff]
    %v72 = vld [vmem:[%s0 + $0x50] sm:$0xff]
    %v73 = vld [vmem:[%s0 + $0x58] sm:$0xff]
    %v74 = vld [vmem:[%s0 + $0x60] sm:$0xff]
    %v75 = vld [vmem:[%s0 + $0x68] sm:$0xff]
    %v76 = vld [vmem:[%s0 + $0x70] sm:$0xff]
    %v77 = vld [vmem:[%s0 + $0x78] sm:$0xff]
    %v78 = vld [vmem:[%s2] sm:$0xff]
    %v79 = vld [vmem:[%s2 + $0x8] sm:$0xff]
    %v80 = vld [vmem:[%s2 + $0x10] sm:$0xff]
    %v81 = vld [vmem:[%s2 + $0x18] sm:$0xf]
    %v82 = vld [vmem:[%s2 + $0x20] sm:$0xf]
    %v83 = vld [vmem:[%s2 + $0x28] sm:$0xf]
    %v84 = vld [vmem:[%s4] sm:$0x7]
    %v86 = vlaneseq
    %v87 = vshrl.u32 %v86, 7
    %v88 = vsub.s32 0, %v87
    %v89 = vrot.slane %v84, %v88
    %v90 = vlaneseq
    %v91 = vshrl.u32 %v90, 7
    %v92 = vsub.s32 1, %v91
    %v93 = vrot.slane %v84, %v92
    %v94 = vlaneseq
    %v95 = vshrl.u32 %v94, 7
    %v96 = vsub.s32 2, %v95
    %v97 = vrot.slane %v84, %v96
    %vm101 = vcmask 97280
    %v103 = vsel %vm101, %v62, 0
    %v106 = vsel %vm101, %v63, 0
    %v109 = vsel %vm101, %v64, 0
    %v112 = vsel %vm101, %v65, 0
    %v115 = vsel %vm101, %v66, 0
    %v118 = vsel %vm101, %v67, 0
    %v121 = vsel %vm101, %v68, 0
    %v124 = vsel %vm101, %v69, 0
    %v127 = vsel %vm101, %v70, 0
    %v130 = vsel %vm101, %v71, 0
    %v133 = vsel %vm101, %v72, 0
    %v136 = vsel %vm101, %v73, 0
    %v139 = vsel %vm101, %v74, 0
    %v142 = vsel %vm101, %v75, 0
    %v145 = vsel %vm101, %v76, 0
    %v148 = vsel %vm101, %v77, 0
    %vm150 = vcmask 1043456
    %v152 = vsel %vm150, %v81, 0
    %v155 = vsel %vm150, %v82, 0
    %v158 = vsel %vm150, %v83, 0
    %160 = vmatprep.subr.mxu0 %v79
    %161 = vmatpush1.msra.mxu0 %v78
    %162 = vmatprep.subr.mxu0 %v155
    %163 = vmatpush1.msra.mxu0 %v152
    %164 = vmatprep.subr.mxu0 0.0
    %165 = vmatpush1.msra.mxu0 0.0
    %166 = vmatprep.subr.mxu0 0.0
    %167 = vmatpush1.msra.mxu0 0.0
    %168 = vmatprep.subr.mxu0 0.0
    %169 = vmatpush1.msra.mxu0 0.0
    %170 = vmatprep.subr.mxu0 0.0
    %171 = vmatpush1.msra.mxu0 0.0
    %172 = vmatprep.subr.mxu0 0.0
    %173 = vmatpush1.msra.mxu0 0.0
    %174 = vmatprep.subr.mxu0 0.0
    %175 = vmatpush1.msra.mxu0 0.0
    %176 = vmatprep.subr.mxu0 0.0
    %177 = vmatpush1.msra.mxu0 0.0
    %178 = vmatprep.subr.mxu0 0.0
    %179 = vmatpush1.msra.mxu0 0.0
    %180 = vmatprep.subr.mxu0 0.0
    %181 = vmatpush1.msra.mxu0 0.0
    %182 = vmatprep.subr.mxu0 0.0
    %183 = vmatpush1.msra.mxu0 0.0
    %184 = vmatprep.subr.mxu0 0.0
    %185 = vmatpush1.msra.mxu0 0.0
    %186 = vmatprep.subr.mxu0 0.0
    %187 = vmatpush1.msra.mxu0 0.0
    %188 = vmatprep.subr.mxu0 0.0
    %189 = vmatpush1.msra.mxu0 0.0
    %190 = vmatprep.subr.mxu0 0.0
    %191 = vmatpush1.msra.mxu0 0.0
    %192 = vmatprep.subr.mxu0 0.0
    %193 = vmatpush1.msra.mxu0 0.0
    %194 = vmatprep.subr.mxu0 0.0
    %195 = vmatpush1.msra.mxu0 0.0
    %196 = vmatprep.subr.mxu0 0.0
    %197 = vmatpush1.msra.mxu0 0.0
    %198 = vmatprep.subr.mxu0 0.0
    %199 = vmatpush1.msra.mxu0 0.0
    %200 = vmatprep.subr.mxu0 0.0
    %201 = vmatpush1.msra.mxu0 0.0
    %202 = vmatprep.subr.mxu0 0.0
    %203 = vmatpush1.msra.mxu0 0.0
    %204 = vmatprep.subr.mxu0 0.0
    %205 = vmatpush1.msra.mxu0 0.0
    %206 = vmatprep.subr.mxu0 0.0
    %207 = vmatpush1.msra.mxu0 0.0
    %208 = vmatprep.subr.mxu0 0.0
    %209 = vmatpush1.msra.mxu0 0.0
    %210 = vmatprep.subr.mxu0 0.0
    %211 = vmatpush1.msra.mxu0 0.0
    %212 = vmatprep.subr.mxu0 0.0
    %213 = vmatpush1.msra.mxu0 0.0
    %214 = vmatprep.subr.mxu0 0.0
    %215 = vmatpush1.msra.mxu0 0.0
    %216 = vmatprep.subr.mxu0 0.0
    %217 = vmatpush1.msra.mxu0 0.0
    %218 = vmatprep.subr.mxu0 0.0
    %219 = vmatpush1.msra.mxu0 0.0
    %220 = vmatprep.subr.mxu0 0.0
    %221 = vmatpush1.msra.mxu0 0.0
    %222 = vmatprep.subr.mxu0 0.0
    %223 = vmatpush1.msra.mxu0 0.0
    %224 = vmatprep.mubr.f32.mxu0 0.0
    %225 = vmatmul.mubr.f32.gmra.mrb[0].mxu0 %v103
    %v226 = vpop.f32.mrb[0].mxu0
    %v227 = vadd.f32 %v89, %v226
    %v228 = vpop.f32.mrb[0].mxu0
    %v229 = vadd.f32 %v93, %v228
    %230 = vmatprep.mubr.f32.mxu0 0.0
    %231 = vmatmul.mubr.f32.gmra.mrb[0].mxu0 %v106
    %v232 = vpop.f32.mrb[0].mxu0
    %v233 = vadd.f32 %v89, %v232
    %v234 = vpop.f32.mrb[0].mxu0
    %v235 = vadd.f32 %v93, %v234
    %236 = vmatprep.mubr.f32.mxu0 0.0
    %237 = vmatmul.mubr.f32.gmra.mrb[0].mxu0 %v109
    %v238 = vpop.f32.mrb[0].mxu0
    %v239 = vadd.f32 %v89, %v238
    %v240 = vpop.f32.mrb[0].mxu0
    %v241 = vadd.f32 %v93, %v240
    %242 = vmatprep.mubr.f32.mxu0 0.0
    %243 = vmatmul.mubr.f32.gmra.mrb[0].mxu0 %v112
    %v244 = vpop.f32.mrb[0].mxu0
    %v245 = vadd.f32 %v89, %v244
    %v246 = vpop.f32.mrb[0].mxu0
    %v247 = vadd.f32 %v93, %v246
    %248 = vmatprep.mubr.f32.mxu0 0.0
    %249 = vmatmul.mubr.f32.gmra.mrb[0].mxu0 %v115
    %v250 = vpop.f32.mrb[0].mxu0
    %v251 = vadd.f32 %v89, %v250
    %v252 = vpop.f32.mrb[0].mxu0
    %v253 = vadd.f32 %v93, %v252
    %254 = vmatprep.mubr.f32.mxu0 0.0
    %255 = vmatmul.mubr.f32.gmra.mrb[0].mxu0 %v118
    %v256 = vpop.f32.mrb[0].mxu0
    %v257 = vadd.f32 %v89, %v256
    %v258 = vpop.f32.mrb[0].mxu0
    %v259 = vadd.f32 %v93, %v258
    %260 = vmatprep.mubr.f32.mxu0 0.0
    %261 = vmatmul.mubr.f32.gmra.mrb[0].mxu0 %v121
    %v262 = vpop.f32.mrb[0].mxu0
    %v263 = vadd.f32 %v89, %v262
    %v264 = vpop.f32.mrb[0].mxu0
    %v265 = vadd.f32 %v93, %v264
    %266 = vmatprep.mubr.f32.mxu0 0.0
    %267 = vmatmul.mubr.f32.gmra.mrb[0].mxu0 %v124
    %v268 = vpop.f32.mrb[0].mxu0
    %v269 = vadd.f32 %v89, %v268
    %v270 = vpop.f32.mrb[0].mxu0
    %v271 = vadd.f32 %v93, %v270
    %272 = vmatprep.mubr.f32.mxu0 0.0
    %273 = vmatmul.mubr.f32.gmra.mrb[0].mxu0 %v127
    %v274 = vpop.f32.mrb[0].mxu0
    %v275 = vadd.f32 %v89, %v274
    %v276 = vpop.f32.mrb[0].mxu0
    %v277 = vadd.f32 %v93, %v276
    %278 = vmatprep.mubr.f32.mxu0 0.0
    %279 = vmatmul.mubr.f32.gmra.mrb[0].mxu0 %v130
    %v280 = vpop.f32.mrb[0].mxu0
    %v281 = vadd.f32 %v89, %v280
    %v282 = vpop.f32.mrb[0].mxu0
    %v283 = vadd.f32 %v93, %v282
    %284 = vmatprep.mubr.f32.mxu0 0.0
    %285 = vmatmul.mubr.f32.gmra.mrb[0].mxu0 %v133
    %v286 = vpop.f32.mrb[0].mxu0
    %v287 = vadd.f32 %v89, %v286
    %v288 = vpop.f32.mrb[0].mxu0
    %v289 = vadd.f32 %v93, %v288
    %290 = vmatprep.mubr.f32.mxu0 0.0
    %291 = vmatmul.mubr.f32.gmra.mrb[0].mxu0 %v136
    %v292 = vpop.f32.mrb[0].mxu0
    %v293 = vadd.f32 %v89, %v292
    %v294 = vpop.f32.mrb[0].mxu0
    %v295 = vadd.f32 %v93, %v294
    %296 = vmatprep.mubr.f32.mxu0 0.0
    %297 = vmatmul.mubr.f32.gmra.mrb[0].mxu0 %v139
    %v298 = vpop.f32.mrb[0].mxu0
    %v299 = vadd.f32 %v89, %v298
    %v300 = vpop.f32.mrb[0].mxu0
    %v301 = vadd.f32 %v93, %v300
    %302 = vmatprep.mubr.f32.mxu0 0.0
    %303 = vmatmul.mubr.f32.gmra.mrb[0].mxu0 %v142
    %v304 = vpop.f32.mrb[0].mxu0
    %v305 = vadd.f32 %v89, %v304
    %v306 = vpop.f32.mrb[0].mxu0
    %v307 = vadd.f32 %v93, %v306
    %308 = vmatprep.mubr.f32.mxu0 0.0
    %309 = vmatmul.mubr.f32.gmra.mrb[0].mxu0 %v145
    %v310 = vpop.f32.mrb[0].mxu0
    %v311 = vadd.f32 %v89, %v310
    %v312 = vpop.f32.mrb[0].mxu0
    %v313 = vadd.f32 %v93, %v312
    %314 = vmatprep.mubr.f32.mxu0 0.0
    %315 = vmatmul.mubr.f32.gmra.mrb[0].mxu0 %v148
    %v316 = vpop.f32.mrb[0].mxu0
    %v317 = vadd.f32 %v89, %v316
    %v318 = vpop.f32.mrb[0].mxu0
    %v319 = vadd.f32 %v93, %v318
    %320 = vdwg.mxu0
    %321 = vmatprep.subr.mxu0 0.0
    %322 = vmatpush1.msra.mxu0 %v80
    %323 = vmatprep.subr.mxu0 0.0
    %324 = vmatpush1.msra.mxu0 %v158
    %325 = vmatprep.subr.mxu0 0.0
    %326 = vmatpush1.msra.mxu0 0.0
    %327 = vmatprep.subr.mxu0 0.0
    %328 = vmatpush1.msra.mxu0 0.0
    %329 = vmatprep.subr.mxu0 0.0
    %330 = vmatpush1.msra.mxu0 0.0
    %331 = vmatprep.subr.mxu0 0.0
    %332 = vmatpush1.msra.mxu0 0.0
    %333 = vmatprep.subr.mxu0 0.0
    %334 = vmatpush1.msra.mxu0 0.0
    %335 = vmatprep.subr.mxu0 0.0
    %336 = vmatpush1.msra.mxu0 0.0
    %337 = vmatprep.subr.mxu0 0.0
    %338 = vmatpush1.msra.mxu0 0.0
    %339 = vmatprep.subr.mxu0 0.0
    %340 = vmatpush1.msra.mxu0 0.0
    %341 = vmatprep.subr.mxu0 0.0
    %342 = vmatpush1.msra.mxu0 0.0
    %343 = vmatprep.subr.mxu0 0.0
    %344 = vmatpush1.msra.mxu0 0.0
    %345 = vmatprep.subr.mxu0 0.0
    %346 = vmatpush1.msra.mxu0 0.0
    %347 = vmatprep.subr.mxu0 0.0
    %348 = vmatpush1.msra.mxu0 0.0
    %349 = vmatprep.subr.mxu0 0.0
    %350 = vmatpush1.msra.mxu0 0.0
    %351 = vmatprep.subr.mxu0 0.0
    %352 = vmatpush1.msra.mxu0 0.0
    %353 = vmatprep.subr.mxu0 0.0
    %354 = vmatpush1.msra.mxu0 0.0
    %355 = vmatprep.subr.mxu0 0.0
    %356 = vmatpush1.msra.mxu0 0.0
    %357 = vmatprep.subr.mxu0 0.0
    %358 = vmatpush1.msra.mxu0 0.0
    %359 = vmatprep.subr.mxu0 0.0
    %360 = vmatpush1.msra.mxu0 0.0
    %361 = vmatprep.subr.mxu0 0.0
    %362 = vmatpush1.msra.mxu0 0.0
    %363 = vmatprep.subr.mxu0 0.0
    %364 = vmatpush1.msra.mxu0 0.0
    %365 = vmatprep.subr.mxu0 0.0
    %366 = vmatpush1.msra.mxu0 0.0
    %367 = vmatprep.subr.mxu0 0.0
    %368 = vmatpush1.msra.mxu0 0.0
    %369 = vmatprep.subr.mxu0 0.0
    %370 = vmatpush1.msra.mxu0 0.0
    %371 = vmatprep.subr.mxu0 0.0
    %372 = vmatpush1.msra.mxu0 0.0
    %373 = vmatprep.subr.mxu0 0.0
    %374 = vmatpush1.msra.mxu0 0.0
    %375 = vmatprep.subr.mxu0 0.0
    %376 = vmatpush1.msra.mxu0 0.0
    %377 = vmatprep.subr.mxu0 0.0
    %378 = vmatpush1.msra.mxu0 0.0
    %379 = vmatprep.subr.mxu0 0.0
    %380 = vmatpush1.msra.mxu0 0.0
    %381 = vmatprep.subr.mxu0 0.0
    %382 = vmatpush1.msra.mxu0 0.0
    %383 = vmatprep.subr.mxu0 0.0
    %384 = vmatpush1.msra.mxu0 0.0
    %385 = vmatprep.mubr.f32.mxu0 0.0
    %386 = vmatmul.mubr.f32.gmra.mrb[0].mxu0 %v103
    %v387 = vpop.f32.mrb[0].mxu0
    %v388 = vadd.f32 %v97, %v387
    %v389 = vpop.f32.mrb[0].mxu0
    %390 = vmatprep.mubr.f32.mxu0 0.0
    %391 = vmatmul.mubr.f32.gmra.mrb[0].mxu0 %v106
    %v392 = vpop.f32.mrb[0].mxu0
    %v393 = vadd.f32 %v97, %v392
    %v394 = vpop.f32.mrb[0].mxu0
    %395 = vmatprep.mubr.f32.mxu0 0.0
    %396 = vmatmul.mubr.f32.gmra.mrb[0].mxu0 %v109
    %v397 = vpop.f32.mrb[0].mxu0
    %v398 = vadd.f32 %v97, %v397
    %v399 = vpop.f32.mrb[0].mxu0
    %400 = vmatprep.mubr.f32.mxu0 0.0
    %401 = vmatmul.mubr.f32.gmra.mrb[0].mxu0 %v112
    %v402 = vpop.f32.mrb[0].mxu0
    %v403 = vadd.f32 %v97, %v402
    %v404 = vpop.f32.mrb[0].mxu0
    %405 = vmatprep.mubr.f32.mxu0 0.0
    %406 = vmatmul.mubr.f32.gmra.mrb[0].mxu0 %v115
    %v407 = vpop.f32.mrb[0].mxu0
    %v408 = vadd.f32 %v97, %v407
    %v409 = vpop.f32.mrb[0].mxu0
    %410 = vmatprep.mubr.f32.mxu0 0.0
    %411 = vmatmul.mubr.f32.gmra.mrb[0].mxu0 %v118
    %v412 = vpop.f32.mrb[0].mxu0
    %v413 = vadd.f32 %v97, %v412
    %v414 = vpop.f32.mrb[0].mxu0
    %415 = vmatprep.mubr.f32.mxu0 0.0
    %416 = vmatmul.mubr.f32.gmra.mrb[0].mxu0 %v121
    %v417 = vpop.f32.mrb[0].mxu0
    %v418 = vadd.f32 %v97, %v417
    %v419 = vpop.f32.mrb[0].mxu0
    %420 = vmatprep.mubr.f32.mxu0 0.0
    %421 = vmatmul.mubr.f32.gmra.mrb[0].mxu0 %v124
    %v422 = vpop.f32.mrb[0].mxu0
    %v423 = vadd.f32 %v97, %v422
    %v424 = vpop.f32.mrb[0].mxu0
    %425 = vmatprep.mubr.f32.mxu0 0.0
    %426 = vmatmul.mubr.f32.gmra.mrb[0].mxu0 %v127
    %v427 = vpop.f32.mrb[0].mxu0
    %v428 = vadd.f32 %v97, %v427
    %v429 = vpop.f32.mrb[0].mxu0
    %430 = vmatprep.mubr.f32.mxu0 0.0
    %431 = vmatmul.mubr.f32.gmra.mrb[0].mxu0 %v130
    %v432 = vpop.f32.mrb[0].mxu0
    %v433 = vadd.f32 %v97, %v432
    %v434 = vpop.f32.mrb[0].mxu0
    %435 = vmatprep.mubr.f32.mxu0 0.0
    %436 = vmatmul.mubr.f32.gmra.mrb[0].mxu0 %v133
    %v437 = vpop.f32.mrb[0].mxu0
    %v438 = vadd.f32 %v97, %v437
    %v439 = vpop.f32.mrb[0].mxu0
    %440 = vmatprep.mubr.f32.mxu0 0.0
    %441 = vmatmul.mubr.f32.gmra.mrb[0].mxu0 %v136
    %v442 = vpop.f32.mrb[0].mxu0
    %v443 = vadd.f32 %v97, %v442
    %v444 = vpop.f32.mrb[0].mxu0
    %445 = vmatprep.mubr.f32.mxu0 0.0
    %446 = vmatmul.mubr.f32.gmra.mrb[0].mxu0 %v139
    %v447 = vpop.f32.mrb[0].mxu0
    %v448 = vadd.f32 %v97, %v447
    %v449 = vpop.f32.mrb[0].mxu0
    %450 = vmatprep.mubr.f32.mxu0 0.0
    %451 = vmatmul.mubr.f32.gmra.mrb[0].mxu0 %v142
    %v452 = vpop.f32.mrb[0].mxu0
    %v453 = vadd.f32 %v97, %v452
    %v454 = vpop.f32.mrb[0].mxu0
    %455 = vmatprep.mubr.f32.mxu0 0.0
    %456 = vmatmul.mubr.f32.gmra.mrb[0].mxu0 %v145
    %v457 = vpop.f32.mrb[0].mxu0
    %v458 = vadd.f32 %v97, %v457
    %v459 = vpop.f32.mrb[0].mxu0
    %460 = vmatprep.mubr.f32.mxu0 0.0
    %461 = vmatmul.mubr.f32.gmra.mrb[0].mxu0 %v148
    %v462 = vpop.f32.mrb[0].mxu0
    %v463 = vadd.f32 %v97, %v462
    %v464 = vpop.f32.mrb[0].mxu0
    %465 = vdwg.mxu0
    %v466 = vld [vmem:[%s5] sm:$0x7]
    %v468 = vlaneseq
    %v469 = vshrl.u32 %v468, 7
    %v470 = vsub.s32 0, %v469
    %v471 = vrot.slane %v466, %v470
    %v472 = vlaneseq
    %v473 = vshrl.u32 %v472, 7
    %v474 = vsub.s32 1, %v473
    %v475 = vrot.slane %v466, %v474
    %v476 = vlaneseq
    %v477 = vshrl.u32 %v476, 7
    %v478 = vsub.s32 2, %v477
    %v479 = vrot.slane %v466, %v478
    %v483 = vld [vmem:[%s3] sm:$0xff]
    %v484 = vld [vmem:[%s3 + $0x8] sm:$0xff]
    %v485 = vld [vmem:[%s3 + $0x10] sm:$0xff]
    %v486 = vld [vmem:[%s3 + $0x18] sm:$0xff]
    %v487 = vld [vmem:[%s3 + $0x20] sm:$0xff]
    %v488 = vld [vmem:[%s3 + $0x28] sm:$0xff]
    %v489 = vld [vmem:[%s3 + $0x30] sm:$0xf]
    %v490 = vld [vmem:[%s3 + $0x38] sm:$0xf]
    %v491 = vld [vmem:[%s3 + $0x40] sm:$0xf]
    %vm492 = vcmask 162816
    %v494 = vsel %vm492, 0.0, 0
    %v497 = vsel %vm150, %v489, 0
    %v500 = vsel %vm150, %v490, 0
    %v503 = vsel %vm150, %v491, 0
    %505 = vmatprep.subr.mxu0 %v484
    %506 = vmatpush1.msra.mxu0 %v483
    %507 = vmatprep.subr.mxu0 %v487
    %508 = vmatpush1.msra.mxu0 %v486
    %509 = vmatprep.subr.mxu0 %v500
    %510 = vmatpush1.msra.mxu0 %v497
    %511 = vmatprep.subr.mxu0 0.0
    %512 = vmatpush1.msra.mxu0 0.0
    %513 = vmatprep.subr.mxu0 0.0
    %514 = vmatpush1.msra.mxu0 0.0
    %515 = vmatprep.subr.mxu0 0.0
    %516 = vmatpush1.msra.mxu0 0.0
    %517 = vmatprep.subr.mxu0 0.0
    %518 = vmatpush1.msra.mxu0 0.0
    %519 = vmatprep.subr.mxu0 0.0
    %520 = vmatpush1.msra.mxu0 0.0
    %521 = vmatprep.subr.mxu0 0.0
    %522 = vmatpush1.msra.mxu0 0.0
    %523 = vmatprep.subr.mxu0 0.0
    %524 = vmatpush1.msra.mxu0 0.0
    %525 = vmatprep.subr.mxu0 0.0
    %526 = vmatpush1.msra.mxu0 0.0
    %527 = vmatprep.subr.mxu0 0.0
    %528 = vmatpush1.msra.mxu0 0.0
    %529 = vmatprep.subr.mxu0 0.0
    %530 = vmatpush1.msra.mxu0 0.0
    %531 = vmatprep.subr.mxu0 0.0
    %532 = vmatpush1.msra.mxu0 0.0
    %533 = vmatprep.subr.mxu0 0.0
    %534 = vmatpush1.msra.mxu0 0.0
    %535 = vmatprep.subr.mxu0 0.0
    %536 = vmatpush1.msra.mxu0 0.0
    %537 = vmatprep.subr.mxu0 0.0
    %538 = vmatpush1.msra.mxu0 0.0
    %539 = vmatprep.subr.mxu0 0.0
    %540 = vmatpush1.msra.mxu0 0.0
    %541 = vmatprep.subr.mxu0 0.0
    %542 = vmatpush1.msra.mxu0 0.0
    %543 = vmatprep.subr.mxu0 0.0
    %544 = vmatpush1.msra.mxu0 0.0
    %545 = vmatprep.subr.mxu0 0.0
    %546 = vmatpush1.msra.mxu0 0.0
    %547 = vmatprep.subr.mxu0 0.0
    %548 = vmatpush1.msra.mxu0 0.0
    %549 = vmatprep.subr.mxu0 0.0
    %550 = vmatpush1.msra.mxu0 0.0
    %551 = vmatprep.subr.mxu0 0.0
    %552 = vmatpush1.msra.mxu0 0.0
    %553 = vmatprep.subr.mxu0 0.0
    %554 = vmatpush1.msra.mxu0 0.0
    %555 = vmatprep.subr.mxu0 0.0
    %556 = vmatpush1.msra.mxu0 0.0
    %557 = vmatprep.subr.mxu0 0.0
    %558 = vmatpush1.msra.mxu0 0.0
    %559 = vmatprep.subr.mxu0 0.0
    %560 = vmatpush1.msra.mxu0 0.0
    %561 = vmatprep.subr.mxu0 0.0
    %562 = vmatpush1.msra.mxu0 0.0
    %563 = vmatprep.subr.mxu0 0.0
    %564 = vmatpush1.msra.mxu0 0.0
    %565 = vmatprep.subr.mxu0 0.0
    %566 = vmatpush1.msra.mxu0 0.0
    %567 = vmatprep.subr.mxu0 0.0
    %568 = vmatpush1.msra.mxu0 0.0
    %569 = vmatprep.mubr.f32.mxu0 0.0
    %570 = vmatmul.mubr.f32.gmra.mrb[0].mxu0 %v494
    %v571 = vpop.f32.mrb[0].mxu0
    %v572 = vadd.f32 %v471, %v571
    %v573 = vpop.f32.mrb[0].mxu0
    %v574 = vadd.f32 %v475, %v573
    %575 = vmatprep.mubr.f32.mxu0 0.0
    %576 = vmatmul.mubr.f32.gmra.mrb[0].mxu0 %v494
    %v577 = vpop.f32.mrb[0].mxu0
    %v578 = vadd.f32 %v471, %v577
    %v579 = vpop.f32.mrb[0].mxu0
    %v580 = vadd.f32 %v475, %v579
    %581 = vdwg.mxu0
    %582 = vmatprep.subr.mxu0 0.0
    %583 = vmatpush1.msra.mxu0 %v485
    %584 = vmatprep.subr.mxu0 0.0
    %585 = vmatpush1.msra.mxu0 %v488
    %586 = vmatprep.subr.mxu0 0.0
    %587 = vmatpush1.msra.mxu0 %v503
    %588 = vmatprep.subr.mxu0 0.0
    %589 = vmatpush1.msra.mxu0 0.0
    %590 = vmatprep.subr.mxu0 0.0
    %591 = vmatpush1.msra.mxu0 0.0
    %592 = vmatprep.subr.mxu0 0.0
    %593 = vmatpush1.msra.mxu0 0.0
    %594 = vmatprep.subr.mxu0 0.0
    %595 = vmatpush1.msra.mxu0 0.0
    %596 = vmatprep.subr.mxu0 0.0
    %597 = vmatpush1.msra.mxu0 0.0
    %598 = vmatprep.subr.mxu0 0.0
    %599 = vmatpush1.msra.mxu0 0.0
    %600 = vmatprep.subr.mxu0 0.0
    %601 = vmatpush1.msra.mxu0 0.0
    %602 = vmatprep.subr.mxu0 0.0
    %603 = vmatpush1.msra.mxu0 0.0
    %604 = vmatprep.subr.mxu0 0.0
    %605 = vmatpush1.msra.mxu0 0.0
    %606 = vmatprep.subr.mxu0 0.0
    %607 = vmatpush1.msra.mxu0 0.0
    %608 = vmatprep.subr.mxu0 0.0
    %609 = vmatpush1.msra.mxu0 0.0
    %610 = vmatprep.subr.mxu0 0.0
    %611 = vmatpush1.msra.mxu0 0.0
    %612 = vmatprep.subr.mxu0 0.0
    %613 = vmatpush1.msra.mxu0 0.0
    %614 = vmatprep.subr.mxu0 0.0
    %615 = vmatpush1.msra.mxu0 0.0
    %616 = vmatprep.subr.mxu0 0.0
    %617 = vmatpush1.msra.mxu0 0.0
    %618 = vmatprep.subr.mxu0 0.0
    %619 = vmatpush1.msra.mxu0 0.0
    %620 = vmatprep.subr.mxu0 0.0
    %621 = vmatpush1.msra.mxu0 0.0
    %622 = vmatprep.subr.mxu0 0.0
    %623 = vmatpush1.msra.mxu0 0.0
    %624 = vmatprep.subr.mxu0 0.0
    %625 = vmatpush1.msra.mxu0 0.0
    %626 = vmatprep.subr.mxu0 0.0
    %627 = vmatpush1.msra.mxu0 0.0
    %628 = vmatprep.subr.mxu0 0.0
    %629 = vmatpush1.msra.mxu0 0.0
    %630 = vmatprep.subr.mxu0 0.0
    %631 = vmatpush1.msra.mxu0 0.0
    %632 = vmatprep.subr.mxu0 0.0
    %633 = vmatpush1.msra.mxu0 0.0
    %634 = vmatprep.subr.mxu0 0.0
    %635 = vmatpush1.msra.mxu0 0.0
    %636 = vmatprep.subr.mxu0 0.0
    %637 = vmatpush1.msra.mxu0 0.0
    %638 = vmatprep.subr.mxu0 0.0
    %639 = vmatpush1.msra.mxu0 0.0
    %640 = vmatprep.subr.mxu0 0.0
    %641 = vmatpush1.msra.mxu0 0.0
    %642 = vmatprep.subr.mxu0 0.0
    %643 = vmatpush1.msra.mxu0 0.0
    %644 = vmatprep.subr.mxu0 0.0
    %645 = vmatpush1.msra.mxu0 0.0
    %646 = vmatprep.mubr.f32.mxu0 0.0
    %647 = vmatmul.mubr.f32.gmra.mrb[0].mxu0 %v494
    %v648 = vpop.f32.mrb[0].mxu0
    %v649 = vadd.f32 %v479, %v648
    %v650 = vpop.f32.mrb[0].mxu0
    %651 = vmatprep.mubr.f32.mxu0 0.0
    %652 = vmatmul.mubr.f32.gmra.mrb[0].mxu0 %v494
    %v653 = vpop.f32.mrb[0].mxu0
    %v654 = vadd.f32 %v479, %v653
    %v655 = vpop.f32.mrb[0].mxu0
    %656 = vdwg.mxu0
    %v657 = vadd.f32 %v227, %v572
    %v658 = vadd.f32 %v233, %v578
    %v659 = vxor.u32 %v657, 2147483648
    %v660 = vxor.u32 %v658, 2147483648
    %v661 = vmul.f32 %v659, 1.442695
    %v662 = vpow.pop %v661
    %v663 = vmul.f32 %v660, 1.442695
    %v664 = vpow.pop %v663
    %v665 = vadd.f32 %v662, 1.0
    %v666 = vadd.f32 %v664, 1.0
    %v667 = vrcp.pop %v665
    %v668 = vmul.f32 1.0, %v667
    %v669 = vrcp.pop %v666
    %v670 = vmul.f32 1.0, %v669
    %v671 = vadd.f32 %v229, %v574
    %v672 = vadd.f32 %v235, %v580
    %v673 = vxor.u32 %v671, 2147483648
    %v674 = vxor.u32 %v672, 2147483648
    %v675 = vmul.f32 %v673, 1.442695
    %v676 = vpow.pop %v675
    %v677 = vmul.f32 %v674, 1.442695
    %v678 = vpow.pop %v677
    %v679 = vadd.f32 %v676, 1.0
    %v680 = vadd.f32 %v678, 1.0
    %v681 = vrcp.pop %v679
    %v682 = vmul.f32 1.0, %v681
    %v683 = vrcp.pop %v680
    %v684 = vmul.f32 1.0, %v683
    %v685 = vmul.f32 %v668, %v649
    %v686 = vmul.f32 %v670, %v654
    %v687 = vadd.f32 %v388, %v685
    %v688 = vadd.f32 %v393, %v686
    %v689 = vtanh.pop %v687
    %v690 = vtanh.pop %v688
    %v691 = vsub.f32 1.0, %v682
    %v692 = vsub.f32 1.0, %v684
    %v693 = vmul.f32 %v691, %v689
    %v694 = vmul.f32 %v692, %v690
    %v695 = vmul.f32 %v682, 0.0
    %v696 = vmul.f32 %v684, 0.0
    %v697 = vadd.f32 %v693, %v695
    %v698 = vadd.f32 %v694, %v696
    %v700 = vsel %vm492, %v697, 0
    %v703 = vsel %vm492, %v698, 0
    %705 = vmatprep.subr.mxu0 %v484
    %706 = vmatpush1.msra.mxu0 %v483
    %707 = vmatprep.subr.mxu0 %v487
    %708 = vmatpush1.msra.mxu0 %v486
    %709 = vmatprep.subr.mxu0 %v500
    %710 = vmatpush1.msra.mxu0 %v497
    %711 = vmatprep.subr.mxu0 0.0
    %712 = vmatpush1.msra.mxu0 0.0
    %713 = vmatprep.subr.mxu0 0.0
    %714 = vmatpush1.msra.mxu0 0.0
    %715 = vmatprep.subr.mxu0 0.0
    %716 = vmatpush1.msra.mxu0 0.0
    %717 = vmatprep.subr.mxu0 0.0
    %718 = vmatpush1.msra.mxu0 0.0
    %719 = vmatprep.subr.mxu0 0.0
    %720 = vmatpush1.msra.mxu0 0.0
    %721 = vmatprep.subr.mxu0 0.0
    %722 = vmatpush1.msra.mxu0 0.0
    %723 = vmatprep.subr.mxu0 0.0
    %724 = vmatpush1.msra.mxu0 0.0
    %725 = vmatprep.subr.mxu0 0.0
    %726 = vmatpush1.msra.mxu0 0.0
    %727 = vmatprep.subr.mxu0 0.0
    %728 = vmatpush1.msra.mxu0 0.0
    %729 = vmatprep.subr.mxu0 0.0
    %730 = vmatpush1.msra.mxu0 0.0
    %731 = vmatprep.subr.mxu0 0.0
    %732 = vmatpush1.msra.mxu0 0.0
    %733 = vmatprep.subr.mxu0 0.0
    %734 = vmatpush1.msra.mxu0 0.0
    %735 = vmatprep.subr.mxu0 0.0
    %736 = vmatpush1.msra.mxu0 0.0
    %737 = vmatprep.subr.mxu0 0.0
    %738 = vmatpush1.msra.mxu0 0.0
    %739 = vmatprep.subr.mxu0 0.0
    %740 = vmatpush1.msra.mxu0 0.0
    %741 = vmatprep.subr.mxu0 0.0
    %742 = vmatpush1.msra.mxu0 0.0
    %743 = vmatprep.subr.mxu0 0.0
    %744 = vmatpush1.msra.mxu0 0.0
    %745 = vmatprep.subr.mxu0 0.0
    %746 = vmatpush1.msra.mxu0 0.0
    %747 = vmatprep.subr.mxu0 0.0
    %748 = vmatpush1.msra.mxu0 0.0
    %749 = vmatprep.subr.mxu0 0.0
    %750 = vmatpush1.msra.mxu0 0.0
    %751 = vmatprep.subr.mxu0 0.0
    %752 = vmatpush1.msra.mxu0 0.0
    %753 = vmatprep.subr.mxu0 0.0
    %754 = vmatpush1.msra.mxu0 0.0
    %755 = vmatprep.subr.mxu0 0.0
    %756 = vmatpush1.msra.mxu0 0.0
    %757 = vmatprep.subr.mxu0 0.0
    %758 = vmatpush1.msra.mxu0 0.0
    %759 = vmatprep.subr.mxu0 0.0
    %760 = vmatpush1.msra.mxu0 0.0
    %761 = vmatprep.subr.mxu0 0.0
    %762 = vmatpush1.msra.mxu0 0.0
    %763 = vmatprep.subr.mxu0 0.0
    %764 = vmatpush1.msra.mxu0 0.0
    %765 = vmatprep.subr.mxu0 0.0
    %766 = vmatpush1.msra.mxu0 0.0
    %767 = vmatprep.subr.mxu0 0.0
    %768 = vmatpush1.msra.mxu0 0.0
    %769 = vmatprep.mubr.f32.mxu0 0.0
    %770 = vmatmul.mubr.f32.gmra.mrb[0].mxu0 %v700
    %v771 = vpop.f32.mrb[0].mxu0
    %v772 = vadd.f32 %v471, %v771
    %v773 = vpop.f32.mrb[0].mxu0
    %v774 = vadd.f32 %v475, %v773
    %775 = vmatprep.mubr.f32.mxu0 0.0
    %776 = vmatmul.mubr.f32.gmra.mrb[0].mxu0 %v703
    %v777 = vpop.f32.mrb[0].mxu0
    %v778 = vadd.f32 %v471, %v777
    %v779 = vpop.f32.mrb[0].mxu0
    %v780 = vadd.f32 %v475, %v779
    %781 = vdwg.mxu0
    %782 = vmatprep.subr.mxu0 0.0
    %783 = vmatpush1.msra.mxu0 %v485
    %784 = vmatprep.subr.mxu0 0.0
    %785 = vmatpush1.msra.mxu0 %v488
    %786 = vmatprep.subr.mxu0 0.0
    %787 = vmatpush1.msra.mxu0 %v503
    %788 = vmatprep.subr.mxu0 0.0
    %789 = vmatpush1.msra.mxu0 0.0
    %790 = vmatprep.subr.mxu0 0.0
    %791 = vmatpush1.msra.mxu0 0.0
    %792 = vmatprep.subr.mxu0 0.0
    %793 = vmatpush1.msra.mxu0 0.0
    %794 = vmatprep.subr.mxu0 0.0
    %795 = vmatpush1.msra.mxu0 0.0
    %796 = vmatprep.subr.mxu0 0.0
    %797 = vmatpush1.msra.mxu0 0.0
    %798 = vmatprep.subr.mxu0 0.0
    %799 = vmatpush1.msra.mxu0 0.0
    %800 = vmatprep.subr.mxu0 0.0
    %801 = vmatpush1.msra.mxu0 0.0
    %802 = vmatprep.subr.mxu0 0.0
    %803 = vmatpush1.msra.mxu0 0.0
    %804 = vmatprep.subr.mxu0 0.0
    %805 = vmatpush1.msra.mxu0 0.0
    %806 = vmatprep.subr.mxu0 0.0
    %807 = vmatpush1.msra.mxu0 0.0
    %808 = vmatprep.subr.mxu0 0.0
    %809 = vmatpush1.msra.mxu0 0.0
    %810 = vmatprep.subr.mxu0 0.0
    %811 = vmatpush1.msra.mxu0 0.0
    %812 = vmatprep.subr.mxu0 0.0
    %813 = vmatpush1.msra.mxu0 0.0
    %814 = vmatprep.subr.mxu0 0.0
    %815 = vmatpush1.msra.mxu0 0.0
    %816 = vmatprep.subr.mxu0 0.0
    %817 = vmatpush1.msra.mxu0 0.0
    %818 = vmatprep.subr.mxu0 0.0
    %819 = vmatpush1.msra.mxu0 0.0
    %820 = vmatprep.subr.mxu0 0.0
    %821 = vmatpush1.msra.mxu0 0.0
    %822 = vmatprep.subr.mxu0 0.0
    %823 = vmatpush1.msra.mxu0 0.0
    %824 = vmatprep.subr.mxu0 0.0
    %825 = vmatpush1.msra.mxu0 0.0
    %826 = vmatprep.subr.mxu0 0.0
    %827 = vmatpush1.msra.mxu0 0.0
    %828 = vmatprep.subr.mxu0 0.0
    %829 = vmatpush1.msra.mxu0 0.0
    %830 = vmatprep.subr.mxu0 0.0
    %831 = vmatpush1.msra.mxu0 0.0
    %832 = vmatprep.subr.mxu0 0.0
    %833 = vmatpush1.msra.mxu0 0.0
    %834 = vmatprep.subr.mxu0 0.0
    %835 = vmatpush1.msra.mxu0 0.0
    %836 = vmatprep.subr.mxu0 0.0
    %837 = vmatpush1.msra.mxu0 0.0
    %838 = vmatprep.subr.mxu0 0.0
    %839 = vmatpush1.msra.mxu0 0.0
    %840 = vmatprep.subr.mxu0 0.0
    %841 = vmatpush1.msra.mxu0 0.0
    %842 = vmatprep.subr.mxu0 0.0
    %843 = vmatpush1.msra.mxu0 0.0
    %844 = vmatprep.subr.mxu0 0.0
    %845 = vmatpush1.msra.mxu0 0.0
    %846 = vmatprep.mubr.f32.mxu0 0.0
    %847 = vmatmul.mubr.f32.gmra.mrb[0].mxu0 %v700
    %v848 = vpop.f32.mrb[0].mxu0
    %v849 = vadd.f32 %v479, %v848
    %v850 = vpop.f32.mrb[0].mxu0
    %851 = vmatprep.mubr.f32.mxu0 0.0
    %852 = vmatmul.mubr.f32.gmra.mrb[0].mxu0 %v703
    %v853 = vpop.f32.mrb[0].mxu0
    %v854 = vadd.f32 %v479, %v853
    %v855 = vpop.f32.mrb[0].mxu0
    %856 = vdwg.mxu0
    %v857 = vadd.f32 %v239, %v772
    %v858 = vadd.f32 %v245, %v778
    %v859 = vxor.u32 %v857, 2147483648
    %v860 = vxor.u32 %v858, 2147483648
    %v861 = vmul.f32 %v859, 1.442695
    %v862 = vpow.pop %v861
    %v863 = vmul.f32 %v860, 1.442695
    %v864 = vpow.pop %v863
    %v865 = vadd.f32 %v862, 1.0
    %v866 = vadd.f32 %v864, 1.0
    %v867 = vrcp.pop %v865
    %v868 = vmul.f32 1.0, %v867
    %v869 = vrcp.pop %v866
    %v870 = vmul.f32 1.0, %v869
    %v871 = vadd.f32 %v241, %v774
    %v872 = vadd.f32 %v247, %v780
    %v873 = vxor.u32 %v871, 2147483648
    %v874 = vxor.u32 %v872, 2147483648
    %v875 = vmul.f32 %v873, 1.442695
    %v876 = vpow.pop %v875
    %v877 = vmul.f32 %v874, 1.442695
    %v878 = vpow.pop %v877
    %v879 = vadd.f32 %v876, 1.0
    %v880 = vadd.f32 %v878, 1.0
    %v881 = vrcp.pop %v879
    %v882 = vmul.f32 1.0, %v881
    %v883 = vrcp.pop %v880
    %v884 = vmul.f32 1.0, %v883
    %v885 = vmul.f32 %v868, %v849
    %v886 = vmul.f32 %v870, %v854
    %v887 = vadd.f32 %v398, %v885
    %v888 = vadd.f32 %v403, %v886
    %v889 = vtanh.pop %v887
    %v890 = vtanh.pop %v888
    %v891 = vsub.f32 1.0, %v882
    %v892 = vsub.f32 1.0, %v884
    %v893 = vmul.f32 %v891, %v889
    %v894 = vmul.f32 %v892, %v890
    %v895 = vmul.f32 %v882, %v697
    %v896 = vmul.f32 %v884, %v698
    %v897 = vadd.f32 %v893, %v895
    %v898 = vadd.f32 %v894, %v896
    %v900 = vsel %vm492, %v897, 0
    %v903 = vsel %vm492, %v898, 0
    %905 = vmatprep.subr.mxu0 %v484
    %906 = vmatpush1.msra.mxu0 %v483
    %907 = vmatprep.subr.mxu0 %v487
    %908 = vmatpush1.msra.mxu0 %v486
    %909 = vmatprep.subr.mxu0 %v500
    %910 = vmatpush1.msra.mxu0 %v497
    %911 = vmatprep.subr.mxu0 0.0
    %912 = vmatpush1.msra.mxu0 0.0
    %913 = vmatprep.subr.mxu0 0.0
    %914 = vmatpush1.msra.mxu0 0.0
    %915 = vmatprep.subr.mxu0 0.0
    %916 = vmatpush1.msra.mxu0 0.0
    %917 = vmatprep.subr.mxu0 0.0
    %918 = vmatpush1.msra.mxu0 0.0
    %919 = vmatprep.subr.mxu0 0.0
    %920 = vmatpush1.msra.mxu0 0.0
    %921 = vmatprep.subr.mxu0 0.0
    %922 = vmatpush1.msra.mxu0 0.0
    %923 = vmatprep.subr.mxu0 0.0
    %924 = vmatpush1.msra.mxu0 0.0
    %925 = vmatprep.subr.mxu0 0.0
    %926 = vmatpush1.msra.mxu0 0.0
    %927 = vmatprep.subr.mxu0 0.0
    %928 = vmatpush1.msra.mxu0 0.0
    %929 = vmatprep.subr.mxu0 0.0
    %930 = vmatpush1.msra.mxu0 0.0
    %931 = vmatprep.subr.mxu0 0.0
    %932 = vmatpush1.msra.mxu0 0.0
    %933 = vmatprep.subr.mxu0 0.0
    %934 = vmatpush1.msra.mxu0 0.0
    %935 = vmatprep.subr.mxu0 0.0
    %936 = vmatpush1.msra.mxu0 0.0
    %937 = vmatprep.subr.mxu0 0.0
    %938 = vmatpush1.msra.mxu0 0.0
    %939 = vmatprep.subr.mxu0 0.0
    %940 = vmatpush1.msra.mxu0 0.0
    %941 = vmatprep.subr.mxu0 0.0
    %942 = vmatpush1.msra.mxu0 0.0
    %943 = vmatprep.subr.mxu0 0.0
    %944 = vmatpush1.msra.mxu0 0.0
    %945 = vmatprep.subr.mxu0 0.0
    %946 = vmatpush1.msra.mxu0 0.0
    %947 = vmatprep.subr.mxu0 0.0
    %948 = vmatpush1.msra.mxu0 0.0
    %949 = vmatprep.subr.mxu0 0.0
    %950 = vmatpush1.msra.mxu0 0.0
    %951 = vmatprep.subr.mxu0 0.0
    %952 = vmatpush1.msra.mxu0 0.0
    %953 = vmatprep.subr.mxu0 0.0
    %954 = vmatpush1.msra.mxu0 0.0
    %955 = vmatprep.subr.mxu0 0.0
    %956 = vmatpush1.msra.mxu0 0.0
    %957 = vmatprep.subr.mxu0 0.0
    %958 = vmatpush1.msra.mxu0 0.0
    %959 = vmatprep.subr.mxu0 0.0
    %960 = vmatpush1.msra.mxu0 0.0
    %961 = vmatprep.subr.mxu0 0.0
    %962 = vmatpush1.msra.mxu0 0.0
    %963 = vmatprep.subr.mxu0 0.0
    %964 = vmatpush1.msra.mxu0 0.0
    %965 = vmatprep.subr.mxu0 0.0
    %966 = vmatpush1.msra.mxu0 0.0
    %967 = vmatprep.subr.mxu0 0.0
    %968 = vmatpush1.msra.mxu0 0.0
    %969 = vmatprep.mubr.f32.mxu0 0.0
    %970 = vmatmul.mubr.f32.gmra.mrb[0].mxu0 %v900
    %v971 = vpop.f32.mrb[0].mxu0
    %v972 = vadd.f32 %v471, %v971
    %v973 = vpop.f32.mrb[0].mxu0
    %v974 = vadd.f32 %v475, %v973
    %975 = vmatprep.mubr.f32.mxu0 0.0
    %976 = vmatmul.mubr.f32.gmra.mrb[0].mxu0 %v903
    %v977 = vpop.f32.mrb[0].mxu0
    %v978 = vadd.f32 %v471, %v977
    %v979 = vpop.f32.mrb[0].mxu0
    %v980 = vadd.f32 %v475, %v979
    %981 = vdwg.mxu0
    %982 = vmatprep.subr.mxu0 0.0
    %983 = vmatpush1.msra.mxu0 %v485
    %984 = vmatprep.subr.mxu0 0.0
    %985 = vmatpush1.msra.mxu0 %v488
    %986 = vmatprep.subr.mxu0 0.0
    %987 = vmatpush1.msra.mxu0 %v503
    %988 = vmatprep.subr.mxu0 0.0
    %989 = vmatpush1.msra.mxu0 0.0
    %990 = vmatprep.subr.mxu0 0.0
    %991 = vmatpush1.msra.mxu0 0.0
    %992 = vmatprep.subr.mxu0 0.0
    %993 = vmatpush1.msra.mxu0 0.0
    %994 = vmatprep.subr.mxu0 0.0
    %995 = vmatpush1.msra.mxu0 0.0
    %996 = vmatprep.subr.mxu0 0.0
    %997 = vmatpush1.msra.mxu0 0.0
    %998 = vmatprep.subr.mxu0 0.0
    %999 = vmatpush1.msra.mxu0 0.0
    %1000 = vmatprep.subr.mxu0 0.0
    %1001 = vmatpush1.msra.mxu0 0.0
    %1002 = vmatprep.subr.mxu0 0.0
    %1003 = vmatpush1.msra.mxu0 0.0
    %1004 = vmatprep.subr.mxu0 0.0
    %1005 = vmatpush1.msra.mxu0 0.0
    %1006 = vmatprep.subr.mxu0 0.0
    %1007 = vmatpush1.msra.mxu0 0.0
    %1008 = vmatprep.subr.mxu0 0.0
    %1009 = vmatpush1.msra.mxu0 0.0
    %1010 = vmatprep.subr.mxu0 0.0
    %1011 = vmatpush1.msra.mxu0 0.0
    %1012 = vmatprep.subr.mxu0 0.0
    %1013 = vmatpush1.msra.mxu0 0.0
    %1014 = vmatprep.subr.mxu0 0.0
    %1015 = vmatpush1.msra.mxu0 0.0
    %1016 = vmatprep.subr.mxu0 0.0
    %1017 = vmatpush1.msra.mxu0 0.0
    %1018 = vmatprep.subr.mxu0 0.0
    %1019 = vmatpush1.msra.mxu0 0.0
    %1020 = vmatprep.subr.mxu0 0.0
    %1021 = vmatpush1.msra.mxu0 0.0
    %1022 = vmatprep.subr.mxu0 0.0
    %1023 = vmatpush1.msra.mxu0 0.0
    %1024 = vmatprep.subr.mxu0 0.0
    %1025 = vmatpush1.msra.mxu0 0.0
    %1026 = vmatprep.subr.mxu0 0.0
    %1027 = vmatpush1.msra.mxu0 0.0
    %1028 = vmatprep.subr.mxu0 0.0
    %1029 = vmatpush1.msra.mxu0 0.0
    %1030 = vmatprep.subr.mxu0 0.0
    %1031 = vmatpush1.msra.mxu0 0.0
    %1032 = vmatprep.subr.mxu0 0.0
    %1033 = vmatpush1.msra.mxu0 0.0
    %1034 = vmatprep.subr.mxu0 0.0
    %1035 = vmatpush1.msra.mxu0 0.0
    %1036 = vmatprep.subr.mxu0 0.0
    %1037 = vmatpush1.msra.mxu0 0.0
    %1038 = vmatprep.subr.mxu0 0.0
    %1039 = vmatpush1.msra.mxu0 0.0
    %1040 = vmatprep.subr.mxu0 0.0
    %1041 = vmatpush1.msra.mxu0 0.0
    %1042 = vmatprep.subr.mxu0 0.0
    %1043 = vmatpush1.msra.mxu0 0.0
    %1044 = vmatprep.subr.mxu0 0.0
    %1045 = vmatpush1.msra.mxu0 0.0
    %1046 = vmatprep.mubr.f32.mxu0 0.0
    %1047 = vmatmul.mubr.f32.gmra.mrb[0].mxu0 %v900
    %v1048 = vpop.f32.mrb[0].mxu0
    %v1049 = vadd.f32 %v479, %v1048
    %v1050 = vpop.f32.mrb[0].mxu0
    %1051 = vmatprep.mubr.f32.mxu0 0.0
    %1052 = vmatmul.mubr.f32.gmra.mrb[0].mxu0 %v903
    %v1053 = vpop.f32.mrb[0].mxu0
    %v1054 = vadd.f32 %v479, %v1053
    %v1055 = vpop.f32.mrb[0].mxu0
    %1056 = vdwg.mxu0
    %v1057 = vadd.f32 %v251, %v972
    %v1058 = vadd.f32 %v257, %v978
    %v1059 = vxor.u32 %v1057, 2147483648
    %v1060 = vxor.u32 %v1058, 2147483648
    %v1061 = vmul.f32 %v1059, 1.442695
    %v1062 = vpow.pop %v1061
    %v1063 = vmul.f32 %v1060, 1.442695
    %v1064 = vpow.pop %v1063
    %v1065 = vadd.f32 %v1062, 1.0
    %v1066 = vadd.f32 %v1064, 1.0
    %v1067 = vrcp.pop %v1065
    %v1068 = vmul.f32 1.0, %v1067
    %v1069 = vrcp.pop %v1066
    %v1070 = vmul.f32 1.0, %v1069
    %v1071 = vadd.f32 %v253, %v974
    %v1072 = vadd.f32 %v259, %v980
    %v1073 = vxor.u32 %v1071, 2147483648
    %v1074 = vxor.u32 %v1072, 2147483648
    %v1075 = vmul.f32 %v1073, 1.442695
    %v1076 = vpow.pop %v1075
    %v1077 = vmul.f32 %v1074, 1.442695
    %v1078 = vpow.pop %v1077
    %v1079 = vadd.f32 %v1076, 1.0
    %v1080 = vadd.f32 %v1078, 1.0
    %v1081 = vrcp.pop %v1079
    %v1082 = vmul.f32 1.0, %v1081
    %v1083 = vrcp.pop %v1080
    %v1084 = vmul.f32 1.0, %v1083
    %v1085 = vmul.f32 %v1068, %v1049
    %v1086 = vmul.f32 %v1070, %v1054
    %v1087 = vadd.f32 %v408, %v1085
    %v1088 = vadd.f32 %v413, %v1086
    %v1089 = vtanh.pop %v1087
    %v1090 = vtanh.pop %v1088
    %v1091 = vsub.f32 1.0, %v1082
    %v1092 = vsub.f32 1.0, %v1084
    %v1093 = vmul.f32 %v1091, %v1089
    %v1094 = vmul.f32 %v1092, %v1090
    %v1095 = vmul.f32 %v1082, %v897
    %v1096 = vmul.f32 %v1084, %v898
    %v1097 = vadd.f32 %v1093, %v1095
    %v1098 = vadd.f32 %v1094, %v1096
    %v1100 = vsel %vm492, %v1097, 0
    %v1103 = vsel %vm492, %v1098, 0
    %1105 = vmatprep.subr.mxu0 %v484
    %1106 = vmatpush1.msra.mxu0 %v483
    %1107 = vmatprep.subr.mxu0 %v487
    %1108 = vmatpush1.msra.mxu0 %v486
    %1109 = vmatprep.subr.mxu0 %v500
    %1110 = vmatpush1.msra.mxu0 %v497
    %1111 = vmatprep.subr.mxu0 0.0
    %1112 = vmatpush1.msra.mxu0 0.0
    %1113 = vmatprep.subr.mxu0 0.0
    %1114 = vmatpush1.msra.mxu0 0.0
    %1115 = vmatprep.subr.mxu0 0.0
    %1116 = vmatpush1.msra.mxu0 0.0
    %1117 = vmatprep.subr.mxu0 0.0
    %1118 = vmatpush1.msra.mxu0 0.0
    %1119 = vmatprep.subr.mxu0 0.0
    %1120 = vmatpush1.msra.mxu0 0.0
    %1121 = vmatprep.subr.mxu0 0.0
    %1122 = vmatpush1.msra.mxu0 0.0
    %1123 = vmatprep.subr.mxu0 0.0
    %1124 = vmatpush1.msra.mxu0 0.0
    %1125 = vmatprep.subr.mxu0 0.0
    %1126 = vmatpush1.msra.mxu0 0.0
    %1127 = vmatprep.subr.mxu0 0.0
    %1128 = vmatpush1.msra.mxu0 0.0
    %1129 = vmatprep.subr.mxu0 0.0
    %1130 = vmatpush1.msra.mxu0 0.0
    %1131 = vmatprep.subr.mxu0 0.0
    %1132 = vmatpush1.msra.mxu0 0.0
    %1133 = vmatprep.subr.mxu0 0.0
    %1134 = vmatpush1.msra.mxu0 0.0
    %1135 = vmatprep.subr.mxu0 0.0
    %1136 = vmatpush1.msra.mxu0 0.0
    %1137 = vmatprep.subr.mxu0 0.0
    %1138 = vmatpush1.msra.mxu0 0.0
    %1139 = vmatprep.subr.mxu0 0.0
    %1140 = vmatpush1.msra.mxu0 0.0
    %1141 = vmatprep.subr.mxu0 0.0
    %1142 = vmatpush1.msra.mxu0 0.0
    %1143 = vmatprep.subr.mxu0 0.0
    %1144 = vmatpush1.msra.mxu0 0.0
    %1145 = vmatprep.subr.mxu0 0.0
    %1146 = vmatpush1.msra.mxu0 0.0
    %1147 = vmatprep.subr.mxu0 0.0
    %1148 = vmatpush1.msra.mxu0 0.0
    %1149 = vmatprep.subr.mxu0 0.0
    %1150 = vmatpush1.msra.mxu0 0.0
    %1151 = vmatprep.subr.mxu0 0.0
    %1152 = vmatpush1.msra.mxu0 0.0
    %1153 = vmatprep.subr.mxu0 0.0
    %1154 = vmatpush1.msra.mxu0 0.0
    %1155 = vmatprep.subr.mxu0 0.0
    %1156 = vmatpush1.msra.mxu0 0.0
    %1157 = vmatprep.subr.mxu0 0.0
    %1158 = vmatpush1.msra.mxu0 0.0
    %1159 = vmatprep.subr.mxu0 0.0
    %1160 = vmatpush1.msra.mxu0 0.0
    %1161 = vmatprep.subr.mxu0 0.0
    %1162 = vmatpush1.msra.mxu0 0.0
    %1163 = vmatprep.subr.mxu0 0.0
    %1164 = vmatpush1.msra.mxu0 0.0
    %1165 = vmatprep.subr.mxu0 0.0
    %1166 = vmatpush1.msra.mxu0 0.0
    %1167 = vmatprep.subr.mxu0 0.0
    %1168 = vmatpush1.msra.mxu0 0.0
    %1169 = vmatprep.mubr.f32.mxu0 0.0
    %1170 = vmatmul.mubr.f32.gmra.mrb[0].mxu0 %v1100
    %v1171 = vpop.f32.mrb[0].mxu0
    %v1172 = vadd.f32 %v471, %v1171
    %v1173 = vpop.f32.mrb[0].mxu0
    %v1174 = vadd.f32 %v475, %v1173
    %1175 = vmatprep.mubr.f32.mxu0 0.0
    %1176 = vmatmul.mubr.f32.gmra.mrb[0].mxu0 %v1103
    %v1177 = vpop.f32.mrb[0].mxu0
    %v1178 = vadd.f32 %v471, %v1177
    %v1179 = vpop.f32.mrb[0].mxu0
    %v1180 = vadd.f32 %v475, %v1179
    %1181 = vdwg.mxu0
    %1182 = vmatprep.subr.mxu0 0.0
    %1183 = vmatpush1.msra.mxu0 %v485
    %1184 = vmatprep.subr.mxu0 0.0
    %1185 = vmatpush1.msra.mxu0 %v488
    %1186 = vmatprep.subr.mxu0 0.0
    %1187 = vmatpush1.msra.mxu0 %v503
    %1188 = vmatprep.subr.mxu0 0.0
    %1189 = vmatpush1.msra.mxu0 0.0
    %1190 = vmatprep.subr.mxu0 0.0
    %1191 = vmatpush1.msra.mxu0 0.0
    %1192 = vmatprep.subr.mxu0 0.0
    %1193 = vmatpush1.msra.mxu0 0.0
    %1194 = vmatprep.subr.mxu0 0.0
    %1195 = vmatpush1.msra.mxu0 0.0
    %1196 = vmatprep.subr.mxu0 0.0
    %1197 = vmatpush1.msra.mxu0 0.0
    %1198 = vmatprep.subr.mxu0 0.0
    %1199 = vmatpush1.msra.mxu0 0.0
    %1200 = vmatprep.subr.mxu0 0.0
    %1201 = vmatpush1.msra.mxu0 0.0
    %1202 = vmatprep.subr.mxu0 0.0
    %1203 = vmatpush1.msra.mxu0 0.0
    %1204 = vmatprep.subr.mxu0 0.0
    %1205 = vmatpush1.msra.mxu0 0.0
    %1206 = vmatprep.subr.mxu0 0.0
    %1207 = vmatpush1.msra.mxu0 0.0
    %1208 = vmatprep.subr.mxu0 0.0
    %1209 = vmatpush1.msra.mxu0 0.0
    %1210 = vmatprep.subr.mxu0 0.0
    %1211 = vmatpush1.msra.mxu0 0.0
    %1212 = vmatprep.subr.mxu0 0.0
    %1213 = vmatpush1.msra.mxu0 0.0
    %1214 = vmatprep.subr.mxu0 0.0
    %1215 = vmatpush1.msra.mxu0 0.0
    %1216 = vmatprep.subr.mxu0 0.0
    %1217 = vmatpush1.msra.mxu0 0.0
    %1218 = vmatprep.subr.mxu0 0.0
    %1219 = vmatpush1.msra.mxu0 0.0
    %1220 = vmatprep.subr.mxu0 0.0
    %1221 = vmatpush1.msra.mxu0 0.0
    %1222 = vmatprep.subr.mxu0 0.0
    %1223 = vmatpush1.msra.mxu0 0.0
    %1224 = vmatprep.subr.mxu0 0.0
    %1225 = vmatpush1.msra.mxu0 0.0
    %1226 = vmatprep.subr.mxu0 0.0
    %1227 = vmatpush1.msra.mxu0 0.0
    %1228 = vmatprep.subr.mxu0 0.0
    %1229 = vmatpush1.msra.mxu0 0.0
    %1230 = vmatprep.subr.mxu0 0.0
    %1231 = vmatpush1.msra.mxu0 0.0
    %1232 = vmatprep.subr.mxu0 0.0
    %1233 = vmatpush1.msra.mxu0 0.0
    %1234 = vmatprep.subr.mxu0 0.0
    %1235 = vmatpush1.msra.mxu0 0.0
    %1236 = vmatprep.subr.mxu0 0.0
    %1237 = vmatpush1.msra.mxu0 0.0
    %1238 = vmatprep.subr.mxu0 0.0
    %1239 = vmatpush1.msra.mxu0 0.0
    %1240 = vmatprep.subr.mxu0 0.0
    %1241 = vmatpush1.msra.mxu0 0.0
    %1242 = vmatprep.subr.mxu0 0.0
    %1243 = vmatpush1.msra.mxu0 0.0
    %1244 = vmatprep.subr.mxu0 0.0
    %1245 = vmatpush1.msra.mxu0 0.0
    %1246 = vmatprep.mubr.f32.mxu0 0.0
    %1247 = vmatmul.mubr.f32.gmra.mrb[0].mxu0 %v1100
    %v1248 = vpop.f32.mrb[0].mxu0
    %v1249 = vadd.f32 %v479, %v1248
    %v1250 = vpop.f32.mrb[0].mxu0
    %1251 = vmatprep.mubr.f32.mxu0 0.0
    %1252 = vmatmul.mubr.f32.gmra.mrb[0].mxu0 %v1103
    %v1253 = vpop.f32.mrb[0].mxu0
    %v1254 = vadd.f32 %v479, %v1253
    %v1255 = vpop.f32.mrb[0].mxu0
    %1256 = vdwg.mxu0
    %v1257 = vadd.f32 %v263, %v1172
    %v1258 = vadd.f32 %v269, %v1178
    %v1259 = vxor.u32 %v1257, 2147483648
    %v1260 = vxor.u32 %v1258, 2147483648
    %v1261 = vmul.f32 %v1259, 1.442695
    %v1262 = vpow.pop %v1261
    %v1263 = vmul.f32 %v1260, 1.442695
    %v1264 = vpow.pop %v1263
    %v1265 = vadd.f32 %v1262, 1.0
    %v1266 = vadd.f32 %v1264, 1.0
    %v1267 = vrcp.pop %v1265
    %v1268 = vmul.f32 1.0, %v1267
    %v1269 = vrcp.pop %v1266
    %v1270 = vmul.f32 1.0, %v1269
    %v1271 = vadd.f32 %v265, %v1174
    %v1272 = vadd.f32 %v271, %v1180
    %v1273 = vxor.u32 %v1271, 2147483648
    %v1274 = vxor.u32 %v1272, 2147483648
    %v1275 = vmul.f32 %v1273, 1.442695
    %v1276 = vpow.pop %v1275
    %v1277 = vmul.f32 %v1274, 1.442695
    %v1278 = vpow.pop %v1277
    %v1279 = vadd.f32 %v1276, 1.0
    %v1280 = vadd.f32 %v1278, 1.0
    %v1281 = vrcp.pop %v1279
    %v1282 = vmul.f32 1.0, %v1281
    %v1283 = vrcp.pop %v1280
    %v1284 = vmul.f32 1.0, %v1283
    %v1285 = vmul.f32 %v1268, %v1249
    %v1286 = vmul.f32 %v1270, %v1254
    %v1287 = vadd.f32 %v418, %v1285
    %v1288 = vadd.f32 %v423, %v1286
    %v1289 = vtanh.pop %v1287
    %v1290 = vtanh.pop %v1288
    %v1291 = vsub.f32 1.0, %v1282
    %v1292 = vsub.f32 1.0, %v1284
    %v1293 = vmul.f32 %v1291, %v1289
    %v1294 = vmul.f32 %v1292, %v1290
    %v1295 = vmul.f32 %v1282, %v1097
    %v1296 = vmul.f32 %v1284, %v1098
    %v1297 = vadd.f32 %v1293, %v1295
    %v1298 = vadd.f32 %v1294, %v1296
    %v1300 = vsel %vm492, %v1297, 0
    %v1303 = vsel %vm492, %v1298, 0
    %1305 = vmatprep.subr.mxu0 %v484
    %1306 = vmatpush1.msra.mxu0 %v483
    %1307 = vmatprep.subr.mxu0 %v487
    %1308 = vmatpush1.msra.mxu0 %v486
    %1309 = vmatprep.subr.mxu0 %v500
    %1310 = vmatpush1.msra.mxu0 %v497
    %1311 = vmatprep.subr.mxu0 0.0
    %1312 = vmatpush1.msra.mxu0 0.0
    %1313 = vmatprep.subr.mxu0 0.0
    %1314 = vmatpush1.msra.mxu0 0.0
    %1315 = vmatprep.subr.mxu0 0.0
    %1316 = vmatpush1.msra.mxu0 0.0
    %1317 = vmatprep.subr.mxu0 0.0
    %1318 = vmatpush1.msra.mxu0 0.0
    %1319 = vmatprep.subr.mxu0 0.0
    %1320 = vmatpush1.msra.mxu0 0.0
    %1321 = vmatprep.subr.mxu0 0.0
    %1322 = vmatpush1.msra.mxu0 0.0
    %1323 = vmatprep.subr.mxu0 0.0
    %1324 = vmatpush1.msra.mxu0 0.0
    %1325 = vmatprep.subr.mxu0 0.0
    %1326 = vmatpush1.msra.mxu0 0.0
    %1327 = vmatprep.subr.mxu0 0.0
    %1328 = vmatpush1.msra.mxu0 0.0
    %1329 = vmatprep.subr.mxu0 0.0
    %1330 = vmatpush1.msra.mxu0 0.0
    %1331 = vmatprep.subr.mxu0 0.0
    %1332 = vmatpush1.msra.mxu0 0.0
    %1333 = vmatprep.subr.mxu0 0.0
    %1334 = vmatpush1.msra.mxu0 0.0
    %1335 = vmatprep.subr.mxu0 0.0
    %1336 = vmatpush1.msra.mxu0 0.0
    %1337 = vmatprep.subr.mxu0 0.0
    %1338 = vmatpush1.msra.mxu0 0.0
    %1339 = vmatprep.subr.mxu0 0.0
    %1340 = vmatpush1.msra.mxu0 0.0
    %1341 = vmatprep.subr.mxu0 0.0
    %1342 = vmatpush1.msra.mxu0 0.0
    %1343 = vmatprep.subr.mxu0 0.0
    %1344 = vmatpush1.msra.mxu0 0.0
    %1345 = vmatprep.subr.mxu0 0.0
    %1346 = vmatpush1.msra.mxu0 0.0
    %1347 = vmatprep.subr.mxu0 0.0
    %1348 = vmatpush1.msra.mxu0 0.0
    %1349 = vmatprep.subr.mxu0 0.0
    %1350 = vmatpush1.msra.mxu0 0.0
    %1351 = vmatprep.subr.mxu0 0.0
    %1352 = vmatpush1.msra.mxu0 0.0
    %1353 = vmatprep.subr.mxu0 0.0
    %1354 = vmatpush1.msra.mxu0 0.0
    %1355 = vmatprep.subr.mxu0 0.0
    %1356 = vmatpush1.msra.mxu0 0.0
    %1357 = vmatprep.subr.mxu0 0.0
    %1358 = vmatpush1.msra.mxu0 0.0
    %1359 = vmatprep.subr.mxu0 0.0
    %1360 = vmatpush1.msra.mxu0 0.0
    %1361 = vmatprep.subr.mxu0 0.0
    %1362 = vmatpush1.msra.mxu0 0.0
    %1363 = vmatprep.subr.mxu0 0.0
    %1364 = vmatpush1.msra.mxu0 0.0
    %1365 = vmatprep.subr.mxu0 0.0
    %1366 = vmatpush1.msra.mxu0 0.0
    %1367 = vmatprep.subr.mxu0 0.0
    %1368 = vmatpush1.msra.mxu0 0.0
    %1369 = vmatprep.mubr.f32.mxu0 0.0
    %1370 = vmatmul.mubr.f32.gmra.mrb[0].mxu0 %v1300
    %v1371 = vpop.f32.mrb[0].mxu0
    %v1372 = vadd.f32 %v471, %v1371
    %v1373 = vpop.f32.mrb[0].mxu0
    %v1374 = vadd.f32 %v475, %v1373
    %1375 = vmatprep.mubr.f32.mxu0 0.0
    %1376 = vmatmul.mubr.f32.gmra.mrb[0].mxu0 %v1303
    %v1377 = vpop.f32.mrb[0].mxu0
    %v1378 = vadd.f32 %v471, %v1377
    %v1379 = vpop.f32.mrb[0].mxu0
    %v1380 = vadd.f32 %v475, %v1379
    %1381 = vdwg.mxu0
    %1382 = vmatprep.subr.mxu0 0.0
    %1383 = vmatpush1.msra.mxu0 %v485
    %1384 = vmatprep.subr.mxu0 0.0
    %1385 = vmatpush1.msra.mxu0 %v488
    %1386 = vmatprep.subr.mxu0 0.0
    %1387 = vmatpush1.msra.mxu0 %v503
    %1388 = vmatprep.subr.mxu0 0.0
    %1389 = vmatpush1.msra.mxu0 0.0
    %1390 = vmatprep.subr.mxu0 0.0
    %1391 = vmatpush1.msra.mxu0 0.0
    %1392 = vmatprep.subr.mxu0 0.0
    %1393 = vmatpush1.msra.mxu0 0.0
    %1394 = vmatprep.subr.mxu0 0.0
    %1395 = vmatpush1.msra.mxu0 0.0
    %1396 = vmatprep.subr.mxu0 0.0
    %1397 = vmatpush1.msra.mxu0 0.0
    %1398 = vmatprep.subr.mxu0 0.0
    %1399 = vmatpush1.msra.mxu0 0.0
    %1400 = vmatprep.subr.mxu0 0.0
    %1401 = vmatpush1.msra.mxu0 0.0
    %1402 = vmatprep.subr.mxu0 0.0
    %1403 = vmatpush1.msra.mxu0 0.0
    %1404 = vmatprep.subr.mxu0 0.0
    %1405 = vmatpush1.msra.mxu0 0.0
    %1406 = vmatprep.subr.mxu0 0.0
    %1407 = vmatpush1.msra.mxu0 0.0
    %1408 = vmatprep.subr.mxu0 0.0
    %1409 = vmatpush1.msra.mxu0 0.0
    %1410 = vmatprep.subr.mxu0 0.0
    %1411 = vmatpush1.msra.mxu0 0.0
    %1412 = vmatprep.subr.mxu0 0.0
    %1413 = vmatpush1.msra.mxu0 0.0
    %1414 = vmatprep.subr.mxu0 0.0
    %1415 = vmatpush1.msra.mxu0 0.0
    %1416 = vmatprep.subr.mxu0 0.0
    %1417 = vmatpush1.msra.mxu0 0.0
    %1418 = vmatprep.subr.mxu0 0.0
    %1419 = vmatpush1.msra.mxu0 0.0
    %1420 = vmatprep.subr.mxu0 0.0
    %1421 = vmatpush1.msra.mxu0 0.0
    %1422 = vmatprep.subr.mxu0 0.0
    %1423 = vmatpush1.msra.mxu0 0.0
    %1424 = vmatprep.subr.mxu0 0.0
    %1425 = vmatpush1.msra.mxu0 0.0
    %1426 = vmatprep.subr.mxu0 0.0
    %1427 = vmatpush1.msra.mxu0 0.0
    %1428 = vmatprep.subr.mxu0 0.0
    %1429 = vmatpush1.msra.mxu0 0.0
    %1430 = vmatprep.subr.mxu0 0.0
    %1431 = vmatpush1.msra.mxu0 0.0
    %1432 = vmatprep.subr.mxu0 0.0
    %1433 = vmatpush1.msra.mxu0 0.0
    %1434 = vmatprep.subr.mxu0 0.0
    %1435 = vmatpush1.msra.mxu0 0.0
    %1436 = vmatprep.subr.mxu0 0.0
    %1437 = vmatpush1.msra.mxu0 0.0
    %1438 = vmatprep.subr.mxu0 0.0
    %1439 = vmatpush1.msra.mxu0 0.0
    %1440 = vmatprep.subr.mxu0 0.0
    %1441 = vmatpush1.msra.mxu0 0.0
    %1442 = vmatprep.subr.mxu0 0.0
    %1443 = vmatpush1.msra.mxu0 0.0
    %1444 = vmatprep.subr.mxu0 0.0
    %1445 = vmatpush1.msra.mxu0 0.0
    %1446 = vmatprep.mubr.f32.mxu0 0.0
    %1447 = vmatmul.mubr.f32.gmra.mrb[0].mxu0 %v1300
    %v1448 = vpop.f32.mrb[0].mxu0
    %v1449 = vadd.f32 %v479, %v1448
    %v1450 = vpop.f32.mrb[0].mxu0
    %1451 = vmatprep.mubr.f32.mxu0 0.0
    %1452 = vmatmul.mubr.f32.gmra.mrb[0].mxu0 %v1303
    %v1453 = vpop.f32.mrb[0].mxu0
    %v1454 = vadd.f32 %v479, %v1453
    %v1455 = vpop.f32.mrb[0].mxu0
    %1456 = vdwg.mxu0
    %v1457 = vadd.f32 %v275, %v1372
    %v1458 = vadd.f32 %v281, %v1378
    %v1459 = vxor.u32 %v1457, 2147483648
    %v1460 = vxor.u32 %v1458, 2147483648
    %v1461 = vmul.f32 %v1459, 1.442695
    %v1462 = vpow.pop %v1461
    %v1463 = vmul.f32 %v1460, 1.442695
    %v1464 = vpow.pop %v1463
    %v1465 = vadd.f32 %v1462, 1.0
    %v1466 = vadd.f32 %v1464, 1.0
    %v1467 = vrcp.pop %v1465
    %v1468 = vmul.f32 1.0, %v1467
    %v1469 = vrcp.pop %v1466
    %v1470 = vmul.f32 1.0, %v1469
    %v1471 = vadd.f32 %v277, %v1374
    %v1472 = vadd.f32 %v283, %v1380
    %v1473 = vxor.u32 %v1471, 2147483648
    %v1474 = vxor.u32 %v1472, 2147483648
    %v1475 = vmul.f32 %v1473, 1.442695
    %v1476 = vpow.pop %v1475
    %v1477 = vmul.f32 %v1474, 1.442695
    %v1478 = vpow.pop %v1477
    %v1479 = vadd.f32 %v1476, 1.0
    %v1480 = vadd.f32 %v1478, 1.0
    %v1481 = vrcp.pop %v1479
    %v1482 = vmul.f32 1.0, %v1481
    %v1483 = vrcp.pop %v1480
    %v1484 = vmul.f32 1.0, %v1483
    %v1485 = vmul.f32 %v1468, %v1449
    %v1486 = vmul.f32 %v1470, %v1454
    %v1487 = vadd.f32 %v428, %v1485
    %v1488 = vadd.f32 %v433, %v1486
    %v1489 = vtanh.pop %v1487
    %v1490 = vtanh.pop %v1488
    %v1491 = vsub.f32 1.0, %v1482
    %v1492 = vsub.f32 1.0, %v1484
    %v1493 = vmul.f32 %v1491, %v1489
    %v1494 = vmul.f32 %v1492, %v1490
    %v1495 = vmul.f32 %v1482, %v1297
    %v1496 = vmul.f32 %v1484, %v1298
    %v1497 = vadd.f32 %v1493, %v1495
    %v1498 = vadd.f32 %v1494, %v1496
    %v1500 = vsel %vm492, %v1497, 0
    %v1503 = vsel %vm492, %v1498, 0
    %1505 = vmatprep.subr.mxu0 %v484
    %1506 = vmatpush1.msra.mxu0 %v483
    %1507 = vmatprep.subr.mxu0 %v487
    %1508 = vmatpush1.msra.mxu0 %v486
    %1509 = vmatprep.subr.mxu0 %v500
    %1510 = vmatpush1.msra.mxu0 %v497
    %1511 = vmatprep.subr.mxu0 0.0
    %1512 = vmatpush1.msra.mxu0 0.0
    %1513 = vmatprep.subr.mxu0 0.0
    %1514 = vmatpush1.msra.mxu0 0.0
    %1515 = vmatprep.subr.mxu0 0.0
    %1516 = vmatpush1.msra.mxu0 0.0
    %1517 = vmatprep.subr.mxu0 0.0
    %1518 = vmatpush1.msra.mxu0 0.0
    %1519 = vmatprep.subr.mxu0 0.0
    %1520 = vmatpush1.msra.mxu0 0.0
    %1521 = vmatprep.subr.mxu0 0.0
    %1522 = vmatpush1.msra.mxu0 0.0
    %1523 = vmatprep.subr.mxu0 0.0
    %1524 = vmatpush1.msra.mxu0 0.0
    %1525 = vmatprep.subr.mxu0 0.0
    %1526 = vmatpush1.msra.mxu0 0.0
    %1527 = vmatprep.subr.mxu0 0.0
    %1528 = vmatpush1.msra.mxu0 0.0
    %1529 = vmatprep.subr.mxu0 0.0
    %1530 = vmatpush1.msra.mxu0 0.0
    %1531 = vmatprep.subr.mxu0 0.0
    %1532 = vmatpush1.msra.mxu0 0.0
    %1533 = vmatprep.subr.mxu0 0.0
    %1534 = vmatpush1.msra.mxu0 0.0
    %1535 = vmatprep.subr.mxu0 0.0
    %1536 = vmatpush1.msra.mxu0 0.0
    %1537 = vmatprep.subr.mxu0 0.0
    %1538 = vmatpush1.msra.mxu0 0.0
    %1539 = vmatprep.subr.mxu0 0.0
    %1540 = vmatpush1.msra.mxu0 0.0
    %1541 = vmatprep.subr.mxu0 0.0
    %1542 = vmatpush1.msra.mxu0 0.0
    %1543 = vmatprep.subr.mxu0 0.0
    %1544 = vmatpush1.msra.mxu0 0.0
    %1545 = vmatprep.subr.mxu0 0.0
    %1546 = vmatpush1.msra.mxu0 0.0
    %1547 = vmatprep.subr.mxu0 0.0
    %1548 = vmatpush1.msra.mxu0 0.0
    %1549 = vmatprep.subr.mxu0 0.0
    %1550 = vmatpush1.msra.mxu0 0.0
    %1551 = vmatprep.subr.mxu0 0.0
    %1552 = vmatpush1.msra.mxu0 0.0
    %1553 = vmatprep.subr.mxu0 0.0
    %1554 = vmatpush1.msra.mxu0 0.0
    %1555 = vmatprep.subr.mxu0 0.0
    %1556 = vmatpush1.msra.mxu0 0.0
    %1557 = vmatprep.subr.mxu0 0.0
    %1558 = vmatpush1.msra.mxu0 0.0
    %1559 = vmatprep.subr.mxu0 0.0
    %1560 = vmatpush1.msra.mxu0 0.0
    %1561 = vmatprep.subr.mxu0 0.0
    %1562 = vmatpush1.msra.mxu0 0.0
    %1563 = vmatprep.subr.mxu0 0.0
    %1564 = vmatpush1.msra.mxu0 0.0
    %1565 = vmatprep.subr.mxu0 0.0
    %1566 = vmatpush1.msra.mxu0 0.0
    %1567 = vmatprep.subr.mxu0 0.0
    %1568 = vmatpush1.msra.mxu0 0.0
    %1569 = vmatprep.mubr.f32.mxu0 0.0
    %1570 = vmatmul.mubr.f32.gmra.mrb[0].mxu0 %v1500
    %v1571 = vpop.f32.mrb[0].mxu0
    %v1572 = vadd.f32 %v471, %v1571
    %v1573 = vpop.f32.mrb[0].mxu0
    %v1574 = vadd.f32 %v475, %v1573
    %1575 = vmatprep.mubr.f32.mxu0 0.0
    %1576 = vmatmul.mubr.f32.gmra.mrb[0].mxu0 %v1503
    %v1577 = vpop.f32.mrb[0].mxu0
    %v1578 = vadd.f32 %v471, %v1577
    %v1579 = vpop.f32.mrb[0].mxu0
    %v1580 = vadd.f32 %v475, %v1579
    %1581 = vdwg.mxu0
    %1582 = vmatprep.subr.mxu0 0.0
    %1583 = vmatpush1.msra.mxu0 %v485
    %1584 = vmatprep.subr.mxu0 0.0
    %1585 = vmatpush1.msra.mxu0 %v488
    %1586 = vmatprep.subr.mxu0 0.0
    %1587 = vmatpush1.msra.mxu0 %v503
    %1588 = vmatprep.subr.mxu0 0.0
    %1589 = vmatpush1.msra.mxu0 0.0
    %1590 = vmatprep.subr.mxu0 0.0
    %1591 = vmatpush1.msra.mxu0 0.0
    %1592 = vmatprep.subr.mxu0 0.0
    %1593 = vmatpush1.msra.mxu0 0.0
    %1594 = vmatprep.subr.mxu0 0.0
    %1595 = vmatpush1.msra.mxu0 0.0
    %1596 = vmatprep.subr.mxu0 0.0
    %1597 = vmatpush1.msra.mxu0 0.0
    %1598 = vmatprep.subr.mxu0 0.0
    %1599 = vmatpush1.msra.mxu0 0.0
    %1600 = vmatprep.subr.mxu0 0.0
    %1601 = vmatpush1.msra.mxu0 0.0
    %1602 = vmatprep.subr.mxu0 0.0
    %1603 = vmatpush1.msra.mxu0 0.0
    %1604 = vmatprep.subr.mxu0 0.0
    %1605 = vmatpush1.msra.mxu0 0.0
    %1606 = vmatprep.subr.mxu0 0.0
    %1607 = vmatpush1.msra.mxu0 0.0
    %1608 = vmatprep.subr.mxu0 0.0
    %1609 = vmatpush1.msra.mxu0 0.0
    %1610 = vmatprep.subr.mxu0 0.0
    %1611 = vmatpush1.msra.mxu0 0.0
    %1612 = vmatprep.subr.mxu0 0.0
    %1613 = vmatpush1.msra.mxu0 0.0
    %1614 = vmatprep.subr.mxu0 0.0
    %1615 = vmatpush1.msra.mxu0 0.0
    %1616 = vmatprep.subr.mxu0 0.0
    %1617 = vmatpush1.msra.mxu0 0.0
    %1618 = vmatprep.subr.mxu0 0.0
    %1619 = vmatpush1.msra.mxu0 0.0
    %1620 = vmatprep.subr.mxu0 0.0
    %1621 = vmatpush1.msra.mxu0 0.0
    %1622 = vmatprep.subr.mxu0 0.0
    %1623 = vmatpush1.msra.mxu0 0.0
    %1624 = vmatprep.subr.mxu0 0.0
    %1625 = vmatpush1.msra.mxu0 0.0
    %1626 = vmatprep.subr.mxu0 0.0
    %1627 = vmatpush1.msra.mxu0 0.0
    %1628 = vmatprep.subr.mxu0 0.0
    %1629 = vmatpush1.msra.mxu0 0.0
    %1630 = vmatprep.subr.mxu0 0.0
    %1631 = vmatpush1.msra.mxu0 0.0
    %1632 = vmatprep.subr.mxu0 0.0
    %1633 = vmatpush1.msra.mxu0 0.0
    %1634 = vmatprep.subr.mxu0 0.0
    %1635 = vmatpush1.msra.mxu0 0.0
    %1636 = vmatprep.subr.mxu0 0.0
    %1637 = vmatpush1.msra.mxu0 0.0
    %1638 = vmatprep.subr.mxu0 0.0
    %1639 = vmatpush1.msra.mxu0 0.0
    %1640 = vmatprep.subr.mxu0 0.0
    %1641 = vmatpush1.msra.mxu0 0.0
    %1642 = vmatprep.subr.mxu0 0.0
    %1643 = vmatpush1.msra.mxu0 0.0
    %1644 = vmatprep.subr.mxu0 0.0
    %1645 = vmatpush1.msra.mxu0 0.0
    %1646 = vmatprep.mubr.f32.mxu0 0.0
    %1647 = vmatmul.mubr.f32.gmra.mrb[0].mxu0 %v1500
    %v1648 = vpop.f32.mrb[0].mxu0
    %v1649 = vadd.f32 %v479, %v1648
    %v1650 = vpop.f32.mrb[0].mxu0
    %1651 = vmatprep.mubr.f32.mxu0 0.0
    %1652 = vmatmul.mubr.f32.gmra.mrb[0].mxu0 %v1503
    %v1653 = vpop.f32.mrb[0].mxu0
    %v1654 = vadd.f32 %v479, %v1653
    %v1655 = vpop.f32.mrb[0].mxu0
    %1656 = vdwg.mxu0
    %v1657 = vadd.f32 %v287, %v1572
    %v1658 = vadd.f32 %v293, %v1578
    %v1659 = vxor.u32 %v1657, 2147483648
    %v1660 = vxor.u32 %v1658, 2147483648
    %v1661 = vmul.f32 %v1659, 1.442695
    %v1662 = vpow.pop %v1661
    %v1663 = vmul.f32 %v1660, 1.442695
    %v1664 = vpow.pop %v1663
    %v1665 = vadd.f32 %v1662, 1.0
    %v1666 = vadd.f32 %v1664, 1.0
    %v1667 = vrcp.pop %v1665
    %v1668 = vmul.f32 1.0, %v1667
    %v1669 = vrcp.pop %v1666
    %v1670 = vmul.f32 1.0, %v1669
    %v1671 = vadd.f32 %v289, %v1574
    %v1672 = vadd.f32 %v295, %v1580
    %v1673 = vxor.u32 %v1671, 2147483648
    %v1674 = vxor.u32 %v1672, 2147483648
    %v1675 = vmul.f32 %v1673, 1.442695
    %v1676 = vpow.pop %v1675
    %v1677 = vmul.f32 %v1674, 1.442695
    %v1678 = vpow.pop %v1677
    %v1679 = vadd.f32 %v1676, 1.0
    %v1680 = vadd.f32 %v1678, 1.0
    %v1681 = vrcp.pop %v1679
    %v1682 = vmul.f32 1.0, %v1681
    %v1683 = vrcp.pop %v1680
    %v1684 = vmul.f32 1.0, %v1683
    %v1685 = vmul.f32 %v1668, %v1649
    %v1686 = vmul.f32 %v1670, %v1654
    %v1687 = vadd.f32 %v438, %v1685
    %v1688 = vadd.f32 %v443, %v1686
    %v1689 = vtanh.pop %v1687
    %v1690 = vtanh.pop %v1688
    %v1691 = vsub.f32 1.0, %v1682
    %v1692 = vsub.f32 1.0, %v1684
    %v1693 = vmul.f32 %v1691, %v1689
    %v1694 = vmul.f32 %v1692, %v1690
    %v1695 = vmul.f32 %v1682, %v1497
    %v1696 = vmul.f32 %v1684, %v1498
    %v1697 = vadd.f32 %v1693, %v1695
    %v1698 = vadd.f32 %v1694, %v1696
    %v1700 = vsel %vm492, %v1697, 0
    %v1703 = vsel %vm492, %v1698, 0
    %1705 = vmatprep.subr.mxu0 %v484
    %1706 = vmatpush1.msra.mxu0 %v483
    %1707 = vmatprep.subr.mxu0 %v487
    %1708 = vmatpush1.msra.mxu0 %v486
    %1709 = vmatprep.subr.mxu0 %v500
    %1710 = vmatpush1.msra.mxu0 %v497
    %1711 = vmatprep.subr.mxu0 0.0
    %1712 = vmatpush1.msra.mxu0 0.0
    %1713 = vmatprep.subr.mxu0 0.0
    %1714 = vmatpush1.msra.mxu0 0.0
    %1715 = vmatprep.subr.mxu0 0.0
    %1716 = vmatpush1.msra.mxu0 0.0
    %1717 = vmatprep.subr.mxu0 0.0
    %1718 = vmatpush1.msra.mxu0 0.0
    %1719 = vmatprep.subr.mxu0 0.0
    %1720 = vmatpush1.msra.mxu0 0.0
    %1721 = vmatprep.subr.mxu0 0.0
    %1722 = vmatpush1.msra.mxu0 0.0
    %1723 = vmatprep.subr.mxu0 0.0
    %1724 = vmatpush1.msra.mxu0 0.0
    %1725 = vmatprep.subr.mxu0 0.0
    %1726 = vmatpush1.msra.mxu0 0.0
    %1727 = vmatprep.subr.mxu0 0.0
    %1728 = vmatpush1.msra.mxu0 0.0
    %1729 = vmatprep.subr.mxu0 0.0
    %1730 = vmatpush1.msra.mxu0 0.0
    %1731 = vmatprep.subr.mxu0 0.0
    %1732 = vmatpush1.msra.mxu0 0.0
    %1733 = vmatprep.subr.mxu0 0.0
    %1734 = vmatpush1.msra.mxu0 0.0
    %1735 = vmatprep.subr.mxu0 0.0
    %1736 = vmatpush1.msra.mxu0 0.0
    %1737 = vmatprep.subr.mxu0 0.0
    %1738 = vmatpush1.msra.mxu0 0.0
    %1739 = vmatprep.subr.mxu0 0.0
    %1740 = vmatpush1.msra.mxu0 0.0
    %1741 = vmatprep.subr.mxu0 0.0
    %1742 = vmatpush1.msra.mxu0 0.0
    %1743 = vmatprep.subr.mxu0 0.0
    %1744 = vmatpush1.msra.mxu0 0.0
    %1745 = vmatprep.subr.mxu0 0.0
    %1746 = vmatpush1.msra.mxu0 0.0
    %1747 = vmatprep.subr.mxu0 0.0
    %1748 = vmatpush1.msra.mxu0 0.0
    %1749 = vmatprep.subr.mxu0 0.0
    %1750 = vmatpush1.msra.mxu0 0.0
    %1751 = vmatprep.subr.mxu0 0.0
    %1752 = vmatpush1.msra.mxu0 0.0
    %1753 = vmatprep.subr.mxu0 0.0
    %1754 = vmatpush1.msra.mxu0 0.0
    %1755 = vmatprep.subr.mxu0 0.0
    %1756 = vmatpush1.msra.mxu0 0.0
    %1757 = vmatprep.subr.mxu0 0.0
    %1758 = vmatpush1.msra.mxu0 0.0
    %1759 = vmatprep.subr.mxu0 0.0
    %1760 = vmatpush1.msra.mxu0 0.0
    %1761 = vmatprep.subr.mxu0 0.0
    %1762 = vmatpush1.msra.mxu0 0.0
    %1763 = vmatprep.subr.mxu0 0.0
    %1764 = vmatpush1.msra.mxu0 0.0
    %1765 = vmatprep.subr.mxu0 0.0
    %1766 = vmatpush1.msra.mxu0 0.0
    %1767 = vmatprep.subr.mxu0 0.0
    %1768 = vmatpush1.msra.mxu0 0.0
    %1769 = vmatprep.mubr.f32.mxu0 0.0
    %1770 = vmatmul.mubr.f32.gmra.mrb[0].mxu0 %v1700
    %v1771 = vpop.f32.mrb[0].mxu0
    %v1772 = vadd.f32 %v471, %v1771
    %v1773 = vpop.f32.mrb[0].mxu0
    %v1774 = vadd.f32 %v475, %v1773
    %1775 = vmatprep.mubr.f32.mxu0 0.0
    %1776 = vmatmul.mubr.f32.gmra.mrb[0].mxu0 %v1703
    %v1777 = vpop.f32.mrb[0].mxu0
    %v1778 = vadd.f32 %v471, %v1777
    %v1779 = vpop.f32.mrb[0].mxu0
    %v1780 = vadd.f32 %v475, %v1779
    %1781 = vdwg.mxu0
    %1782 = vmatprep.subr.mxu0 0.0
    %1783 = vmatpush1.msra.mxu0 %v485
    %1784 = vmatprep.subr.mxu0 0.0
    %1785 = vmatpush1.msra.mxu0 %v488
    %1786 = vmatprep.subr.mxu0 0.0
    %1787 = vmatpush1.msra.mxu0 %v503
    %1788 = vmatprep.subr.mxu0 0.0
    %1789 = vmatpush1.msra.mxu0 0.0
    %1790 = vmatprep.subr.mxu0 0.0
    %1791 = vmatpush1.msra.mxu0 0.0
    %1792 = vmatprep.subr.mxu0 0.0
    %1793 = vmatpush1.msra.mxu0 0.0
    %1794 = vmatprep.subr.mxu0 0.0
    %1795 = vmatpush1.msra.mxu0 0.0
    %1796 = vmatprep.subr.mxu0 0.0
    %1797 = vmatpush1.msra.mxu0 0.0
    %1798 = vmatprep.subr.mxu0 0.0
    %1799 = vmatpush1.msra.mxu0 0.0
    %1800 = vmatprep.subr.mxu0 0.0
    %1801 = vmatpush1.msra.mxu0 0.0
    %1802 = vmatprep.subr.mxu0 0.0
    %1803 = vmatpush1.msra.mxu0 0.0
    %1804 = vmatprep.subr.mxu0 0.0
    %1805 = vmatpush1.msra.mxu0 0.0
    %1806 = vmatprep.subr.mxu0 0.0
    %1807 = vmatpush1.msra.mxu0 0.0
    %1808 = vmatprep.subr.mxu0 0.0
    %1809 = vmatpush1.msra.mxu0 0.0
    %1810 = vmatprep.subr.mxu0 0.0
    %1811 = vmatpush1.msra.mxu0 0.0
    %1812 = vmatprep.subr.mxu0 0.0
    %1813 = vmatpush1.msra.mxu0 0.0
    %1814 = vmatprep.subr.mxu0 0.0
    %1815 = vmatpush1.msra.mxu0 0.0
    %1816 = vmatprep.subr.mxu0 0.0
    %1817 = vmatpush1.msra.mxu0 0.0
    %1818 = vmatprep.subr.mxu0 0.0
    %1819 = vmatpush1.msra.mxu0 0.0
    %1820 = vmatprep.subr.mxu0 0.0
    %1821 = vmatpush1.msra.mxu0 0.0
    %1822 = vmatprep.subr.mxu0 0.0
    %1823 = vmatpush1.msra.mxu0 0.0
    %1824 = vmatprep.subr.mxu0 0.0
    %1825 = vmatpush1.msra.mxu0 0.0
    %1826 = vmatprep.subr.mxu0 0.0
    %1827 = vmatpush1.msra.mxu0 0.0
    %1828 = vmatprep.subr.mxu0 0.0
    %1829 = vmatpush1.msra.mxu0 0.0
    %1830 = vmatprep.subr.mxu0 0.0
    %1831 = vmatpush1.msra.mxu0 0.0
    %1832 = vmatprep.subr.mxu0 0.0
    %1833 = vmatpush1.msra.mxu0 0.0
    %1834 = vmatprep.subr.mxu0 0.0
    %1835 = vmatpush1.msra.mxu0 0.0
    %1836 = vmatprep.subr.mxu0 0.0
    %1837 = vmatpush1.msra.mxu0 0.0
    %1838 = vmatprep.subr.mxu0 0.0
    %1839 = vmatpush1.msra.mxu0 0.0
    %1840 = vmatprep.subr.mxu0 0.0
    %1841 = vmatpush1.msra.mxu0 0.0
    %1842 = vmatprep.subr.mxu0 0.0
    %1843 = vmatpush1.msra.mxu0 0.0
    %1844 = vmatprep.subr.mxu0 0.0
    %1845 = vmatpush1.msra.mxu0 0.0
    %1846 = vmatprep.mubr.f32.mxu0 0.0
    %1847 = vmatmul.mubr.f32.gmra.mrb[0].mxu0 %v1700
    %v1848 = vpop.f32.mrb[0].mxu0
    %v1849 = vadd.f32 %v479, %v1848
    %v1850 = vpop.f32.mrb[0].mxu0
    %1851 = vmatprep.mubr.f32.mxu0 0.0
    %1852 = vmatmul.mubr.f32.gmra.mrb[0].mxu0 %v1703
    %v1853 = vpop.f32.mrb[0].mxu0
    %v1854 = vadd.f32 %v479, %v1853
    %v1855 = vpop.f32.mrb[0].mxu0
    %1856 = vdwg.mxu0
    %v1857 = vadd.f32 %v299, %v1772
    %v1858 = vadd.f32 %v305, %v1778
    %v1859 = vxor.u32 %v1857, 2147483648
    %v1860 = vxor.u32 %v1858, 2147483648
    %v1861 = vmul.f32 %v1859, 1.442695
    %v1862 = vpow.pop %v1861
    %v1863 = vmul.f32 %v1860, 1.442695
    %v1864 = vpow.pop %v1863
    %v1865 = vadd.f32 %v1862, 1.0
    %v1866 = vadd.f32 %v1864, 1.0
    %v1867 = vrcp.pop %v1865
    %v1868 = vmul.f32 1.0, %v1867
    %v1869 = vrcp.pop %v1866
    %v1870 = vmul.f32 1.0, %v1869
    %v1871 = vadd.f32 %v301, %v1774
    %v1872 = vadd.f32 %v307, %v1780
    %v1873 = vxor.u32 %v1871, 2147483648
    %v1874 = vxor.u32 %v1872, 2147483648
    %v1875 = vmul.f32 %v1873, 1.442695
    %v1876 = vpow.pop %v1875
    %v1877 = vmul.f32 %v1874, 1.442695
    %v1878 = vpow.pop %v1877
    %v1879 = vadd.f32 %v1876, 1.0
    %v1880 = vadd.f32 %v1878, 1.0
    %v1881 = vrcp.pop %v1879
    %v1882 = vmul.f32 1.0, %v1881
    %v1883 = vrcp.pop %v1880
    %v1884 = vmul.f32 1.0, %v1883
    %v1885 = vmul.f32 %v1868, %v1849
    %v1886 = vmul.f32 %v1870, %v1854
    %v1887 = vadd.f32 %v448, %v1885
    %v1888 = vadd.f32 %v453, %v1886
    %v1889 = vtanh.pop %v1887
    %v1890 = vtanh.pop %v1888
    %v1891 = vsub.f32 1.0, %v1882
    %v1892 = vsub.f32 1.0, %v1884
    %v1893 = vmul.f32 %v1891, %v1889
    %v1894 = vmul.f32 %v1892, %v1890
    %v1895 = vmul.f32 %v1882, %v1697
    %v1896 = vmul.f32 %v1884, %v1698
    %v1897 = vadd.f32 %v1893, %v1895
    %v1898 = vadd.f32 %v1894, %v1896
    %v1900 = vsel %vm492, %v1897, 0
    %v1903 = vsel %vm492, %v1898, 0
    %1905 = vmatprep.subr.mxu0 %v484
    %1906 = vmatpush1.msra.mxu0 %v483
    %1907 = vmatprep.subr.mxu0 %v487
    %1908 = vmatpush1.msra.mxu0 %v486
    %1909 = vmatprep.subr.mxu0 %v500
    %1910 = vmatpush1.msra.mxu0 %v497
    %1911 = vmatprep.subr.mxu0 0.0
    %1912 = vmatpush1.msra.mxu0 0.0
    %1913 = vmatprep.subr.mxu0 0.0
    %1914 = vmatpush1.msra.mxu0 0.0
    %1915 = vmatprep.subr.mxu0 0.0
    %1916 = vmatpush1.msra.mxu0 0.0
    %1917 = vmatprep.subr.mxu0 0.0
    %1918 = vmatpush1.msra.mxu0 0.0
    %1919 = vmatprep.subr.mxu0 0.0
    %1920 = vmatpush1.msra.mxu0 0.0
    %1921 = vmatprep.subr.mxu0 0.0
    %1922 = vmatpush1.msra.mxu0 0.0
    %1923 = vmatprep.subr.mxu0 0.0
    %1924 = vmatpush1.msra.mxu0 0.0
    %1925 = vmatprep.subr.mxu0 0.0
    %1926 = vmatpush1.msra.mxu0 0.0
    %1927 = vmatprep.subr.mxu0 0.0
    %1928 = vmatpush1.msra.mxu0 0.0
    %1929 = vmatprep.subr.mxu0 0.0
    %1930 = vmatpush1.msra.mxu0 0.0
    %1931 = vmatprep.subr.mxu0 0.0
    %1932 = vmatpush1.msra.mxu0 0.0
    %1933 = vmatprep.subr.mxu0 0.0
    %1934 = vmatpush1.msra.mxu0 0.0
    %1935 = vmatprep.subr.mxu0 0.0
    %1936 = vmatpush1.msra.mxu0 0.0
    %1937 = vmatprep.subr.mxu0 0.0
    %1938 = vmatpush1.msra.mxu0 0.0
    %1939 = vmatprep.subr.mxu0 0.0
    %1940 = vmatpush1.msra.mxu0 0.0
    %1941 = vmatprep.subr.mxu0 0.0
    %1942 = vmatpush1.msra.mxu0 0.0
    %1943 = vmatprep.subr.mxu0 0.0
    %1944 = vmatpush1.msra.mxu0 0.0
    %1945 = vmatprep.subr.mxu0 0.0
    %1946 = vmatpush1.msra.mxu0 0.0
    %1947 = vmatprep.subr.mxu0 0.0
    %1948 = vmatpush1.msra.mxu0 0.0
    %1949 = vmatprep.subr.mxu0 0.0
    %1950 = vmatpush1.msra.mxu0 0.0
    %1951 = vmatprep.subr.mxu0 0.0
    %1952 = vmatpush1.msra.mxu0 0.0
    %1953 = vmatprep.subr.mxu0 0.0
    %1954 = vmatpush1.msra.mxu0 0.0
    %1955 = vmatprep.subr.mxu0 0.0
    %1956 = vmatpush1.msra.mxu0 0.0
    %1957 = vmatprep.subr.mxu0 0.0
    %1958 = vmatpush1.msra.mxu0 0.0
    %1959 = vmatprep.subr.mxu0 0.0
    %1960 = vmatpush1.msra.mxu0 0.0
    %1961 = vmatprep.subr.mxu0 0.0
    %1962 = vmatpush1.msra.mxu0 0.0
    %1963 = vmatprep.subr.mxu0 0.0
    %1964 = vmatpush1.msra.mxu0 0.0
    %1965 = vmatprep.subr.mxu0 0.0
    %1966 = vmatpush1.msra.mxu0 0.0
    %1967 = vmatprep.subr.mxu0 0.0
    %1968 = vmatpush1.msra.mxu0 0.0
    %1969 = vmatprep.mubr.f32.mxu0 0.0
    %1970 = vmatmul.mubr.f32.gmra.mrb[0].mxu0 %v1900
    %v1971 = vpop.f32.mrb[0].mxu0
    %v1972 = vadd.f32 %v471, %v1971
    %v1973 = vpop.f32.mrb[0].mxu0
    %v1974 = vadd.f32 %v475, %v1973
    %1975 = vmatprep.mubr.f32.mxu0 0.0
    %1976 = vmatmul.mubr.f32.gmra.mrb[0].mxu0 %v1903
    %v1977 = vpop.f32.mrb[0].mxu0
    %v1978 = vadd.f32 %v471, %v1977
    %v1979 = vpop.f32.mrb[0].mxu0
    %v1980 = vadd.f32 %v475, %v1979
    %1981 = vdwg.mxu0
    %1982 = vmatprep.subr.mxu0 0.0
    %1983 = vmatpush1.msra.mxu0 %v485
    %1984 = vmatprep.subr.mxu0 0.0
    %1985 = vmatpush1.msra.mxu0 %v488
    %1986 = vmatprep.subr.mxu0 0.0
    %1987 = vmatpush1.msra.mxu0 %v503
    %1988 = vmatprep.subr.mxu0 0.0
    %1989 = vmatpush1.msra.mxu0 0.0
    %1990 = vmatprep.subr.mxu0 0.0
    %1991 = vmatpush1.msra.mxu0 0.0
    %1992 = vmatprep.subr.mxu0 0.0
    %1993 = vmatpush1.msra.mxu0 0.0
    %1994 = vmatprep.subr.mxu0 0.0
    %1995 = vmatpush1.msra.mxu0 0.0
    %1996 = vmatprep.subr.mxu0 0.0
    %1997 = vmatpush1.msra.mxu0 0.0
    %1998 = vmatprep.subr.mxu0 0.0
    %1999 = vmatpush1.msra.mxu0 0.0
    %2000 = vmatprep.subr.mxu0 0.0
    %2001 = vmatpush1.msra.mxu0 0.0
    %2002 = vmatprep.subr.mxu0 0.0
    %2003 = vmatpush1.msra.mxu0 0.0
    %2004 = vmatprep.subr.mxu0 0.0
    %2005 = vmatpush1.msra.mxu0 0.0
    %2006 = vmatprep.subr.mxu0 0.0
    %2007 = vmatpush1.msra.mxu0 0.0
    %2008 = vmatprep.subr.mxu0 0.0
    %2009 = vmatpush1.msra.mxu0 0.0
    %2010 = vmatprep.subr.mxu0 0.0
    %2011 = vmatpush1.msra.mxu0 0.0
    %2012 = vmatprep.subr.mxu0 0.0
    %2013 = vmatpush1.msra.mxu0 0.0
    %2014 = vmatprep.subr.mxu0 0.0
    %2015 = vmatpush1.msra.mxu0 0.0
    %2016 = vmatprep.subr.mxu0 0.0
    %2017 = vmatpush1.msra.mxu0 0.0
    %2018 = vmatprep.subr.mxu0 0.0
    %2019 = vmatpush1.msra.mxu0 0.0
    %2020 = vmatprep.subr.mxu0 0.0
    %2021 = vmatpush1.msra.mxu0 0.0
    %2022 = vmatprep.subr.mxu0 0.0
    %2023 = vmatpush1.msra.mxu0 0.0
    %2024 = vmatprep.subr.mxu0 0.0
    %2025 = vmatpush1.msra.mxu0 0.0
    %2026 = vmatprep.subr.mxu0 0.0
    %2027 = vmatpush1.msra.mxu0 0.0
    %2028 = vmatprep.subr.mxu0 0.0
    %2029 = vmatpush1.msra.mxu0 0.0
    %2030 = vmatprep.subr.mxu0 0.0
    %2031 = vmatpush1.msra.mxu0 0.0
    %2032 = vmatprep.subr.mxu0 0.0
    %2033 = vmatpush1.msra.mxu0 0.0
    %2034 = vmatprep.subr.mxu0 0.0
    %2035 = vmatpush1.msra.mxu0 0.0
    %2036 = vmatprep.subr.mxu0 0.0
    %2037 = vmatpush1.msra.mxu0 0.0
    %2038 = vmatprep.subr.mxu0 0.0
    %2039 = vmatpush1.msra.mxu0 0.0
    %2040 = vmatprep.subr.mxu0 0.0
    %2041 = vmatpush1.msra.mxu0 0.0
    %2042 = vmatprep.subr.mxu0 0.0
    %2043 = vmatpush1.msra.mxu0 0.0
    %2044 = vmatprep.subr.mxu0 0.0
    %2045 = vmatpush1.msra.mxu0 0.0
    %2046 = vmatprep.mubr.f32.mxu0 0.0
    %2047 = vmatmul.mubr.f32.gmra.mrb[0].mxu0 %v1900
    %v2048 = vpop.f32.mrb[0].mxu0
    %v2049 = vadd.f32 %v479, %v2048
    %v2050 = vpop.f32.mrb[0].mxu0
    %2051 = vmatprep.mubr.f32.mxu0 0.0
    %2052 = vmatmul.mubr.f32.gmra.mrb[0].mxu0 %v1903
    %v2053 = vpop.f32.mrb[0].mxu0
    %v2054 = vadd.f32 %v479, %v2053
    %v2055 = vpop.f32.mrb[0].mxu0
    %2056 = vdwg.mxu0
    %v2057 = vadd.f32 %v311, %v1972
    %v2058 = vadd.f32 %v317, %v1978
    %v2059 = vxor.u32 %v2057, 2147483648
    %v2060 = vxor.u32 %v2058, 2147483648
    %v2061 = vmul.f32 %v2059, 1.442695
    %v2062 = vpow.pop %v2061
    %v2063 = vmul.f32 %v2060, 1.442695
    %v2064 = vpow.pop %v2063
    %v2065 = vadd.f32 %v2062, 1.0
    %v2066 = vadd.f32 %v2064, 1.0
    %v2067 = vrcp.pop %v2065
    %v2068 = vmul.f32 1.0, %v2067
    %v2069 = vrcp.pop %v2066
    %v2070 = vmul.f32 1.0, %v2069
    %v2071 = vadd.f32 %v313, %v1974
    %v2072 = vadd.f32 %v319, %v1980
    %v2073 = vxor.u32 %v2071, 2147483648
    %v2074 = vxor.u32 %v2072, 2147483648
    %v2075 = vmul.f32 %v2073, 1.442695
    %v2076 = vpow.pop %v2075
    %v2077 = vmul.f32 %v2074, 1.442695
    %v2078 = vpow.pop %v2077
    %v2079 = vadd.f32 %v2076, 1.0
    %v2080 = vadd.f32 %v2078, 1.0
    %v2081 = vrcp.pop %v2079
    %v2082 = vmul.f32 1.0, %v2081
    %v2083 = vrcp.pop %v2080
    %v2084 = vmul.f32 1.0, %v2083
    %v2085 = vmul.f32 %v2068, %v2049
    %v2086 = vmul.f32 %v2070, %v2054
    %v2087 = vadd.f32 %v458, %v2085
    %v2088 = vadd.f32 %v463, %v2086
    %v2089 = vtanh.pop %v2087
    %v2090 = vtanh.pop %v2088
    %v2091 = vsub.f32 1.0, %v2082
    %v2092 = vsub.f32 1.0, %v2084
    %v2093 = vmul.f32 %v2091, %v2089
    %v2094 = vmul.f32 %v2092, %v2090
    %v2095 = vmul.f32 %v2082, %v1897
    %v2096 = vmul.f32 %v2084, %v1898
    %v2097 = vadd.f32 %v2093, %v2095
    %v2098 = vadd.f32 %v2094, %v2096
    %v2099 = vld [vmem:[%s6] sm:$0xff]
    %v2100 = vld [vmem:[%s6 + $0x8] sm:$0xff]
    %v2101 = vld [vmem:[%s6 + $0x10] sm:$0xf]
    %v2102 = vld [vmem:[%s7] sm:$0x1]
    %v2104 = vlaneseq
    %v2105 = vshrl.u32 %v2104, 7
    %v2106 = vsub.s32 0, %v2105
    %v2107 = vrot.slane %v2102, %v2106
    %v2110 = vsel %vm492, %v2097, 0
    %v2113 = vsel %vm492, %v2098, 0
    %v2116 = vsel %vm150, %v2101, 0
    %2118 = vmatprep.subr.mxu0 0.0
    %2119 = vmatpush1.msra.mxu0 %v2099
    %2120 = vmatprep.subr.mxu0 0.0
    %2121 = vmatpush1.msra.mxu0 %v2100
    %2122 = vmatprep.subr.mxu0 0.0
    %2123 = vmatpush1.msra.mxu0 %v2116
    %2124 = vmatprep.subr.mxu0 0.0
    %2125 = vmatpush1.msra.mxu0 0.0
    %2126 = vmatprep.subr.mxu0 0.0
    %2127 = vmatpush1.msra.mxu0 0.0
    %2128 = vmatprep.subr.mxu0 0.0
    %2129 = vmatpush1.msra.mxu0 0.0
    %2130 = vmatprep.subr.mxu0 0.0
    %2131 = vmatpush1.msra.mxu0 0.0
    %2132 = vmatprep.subr.mxu0 0.0
    %2133 = vmatpush1.msra.mxu0 0.0
    %2134 = vmatprep.subr.mxu0 0.0
    %2135 = vmatpush1.msra.mxu0 0.0
    %2136 = vmatprep.subr.mxu0 0.0
    %2137 = vmatpush1.msra.mxu0 0.0
    %2138 = vmatprep.subr.mxu0 0.0
    %2139 = vmatpush1.msra.mxu0 0.0
    %2140 = vmatprep.subr.mxu0 0.0
    %2141 = vmatpush1.msra.mxu0 0.0
    %2142 = vmatprep.subr.mxu0 0.0
    %2143 = vmatpush1.msra.mxu0 0.0
    %2144 = vmatprep.subr.mxu0 0.0
    %2145 = vmatpush1.msra.mxu0 0.0
    %2146 = vmatprep.subr.mxu0 0.0
    %2147 = vmatpush1.msra.mxu0 0.0
    %2148 = vmatprep.subr.mxu0 0.0
    %2149 = vmatpush1.msra.mxu0 0.0
    %2150 = vmatprep.subr.mxu0 0.0
    %2151 = vmatpush1.msra.mxu0 0.0
    %2152 = vmatprep.subr.mxu0 0.0
    %2153 = vmatpush1.msra.mxu0 0.0
    %2154 = vmatprep.subr.mxu0 0.0
    %2155 = vmatpush1.msra.mxu0 0.0
    %2156 = vmatprep.subr.mxu0 0.0
    %2157 = vmatpush1.msra.mxu0 0.0
    %2158 = vmatprep.subr.mxu0 0.0
    %2159 = vmatpush1.msra.mxu0 0.0
    %2160 = vmatprep.subr.mxu0 0.0
    %2161 = vmatpush1.msra.mxu0 0.0
    %2162 = vmatprep.subr.mxu0 0.0
    %2163 = vmatpush1.msra.mxu0 0.0
    %2164 = vmatprep.subr.mxu0 0.0
    %2165 = vmatpush1.msra.mxu0 0.0
    %2166 = vmatprep.subr.mxu0 0.0
    %2167 = vmatpush1.msra.mxu0 0.0
    %2168 = vmatprep.subr.mxu0 0.0
    %2169 = vmatpush1.msra.mxu0 0.0
    %2170 = vmatprep.subr.mxu0 0.0
    %2171 = vmatpush1.msra.mxu0 0.0
    %2172 = vmatprep.subr.mxu0 0.0
    %2173 = vmatpush1.msra.mxu0 0.0
    %2174 = vmatprep.subr.mxu0 0.0
    %2175 = vmatpush1.msra.mxu0 0.0
    %2176 = vmatprep.subr.mxu0 0.0
    %2177 = vmatpush1.msra.mxu0 0.0
    %2178 = vmatprep.subr.mxu0 0.0
    %2179 = vmatpush1.msra.mxu0 0.0
    %2180 = vmatprep.subr.mxu0 0.0
    %2181 = vmatpush1.msra.mxu0 0.0
    %2182 = vmatprep.mubr.f32.mxu0 0.0
    %2183 = vmatmul.mubr.f32.gmra.mrb[0].mxu0 %v700
    %v2184 = vpop.f32.mrb[0].mxu0
    %v2185 = vadd.f32 %v2107, %v2184
    %v2186 = vpop.f32.mrb[0].mxu0
    %2187 = vmatprep.mubr.f32.mxu0 0.0
    %2188 = vmatmul.mubr.f32.gmra.mrb[0].mxu0 %v703
    %v2189 = vpop.f32.mrb[0].mxu0
    %v2190 = vadd.f32 %v2107, %v2189
    %v2191 = vpop.f32.mrb[0].mxu0
    %2192 = vmatprep.mubr.f32.mxu0 0.0
    %2193 = vmatmul.mubr.f32.gmra.mrb[0].mxu0 %v900
    %v2194 = vpop.f32.mrb[0].mxu0
    %v2195 = vadd.f32 %v2107, %v2194
    %v2196 = vpop.f32.mrb[0].mxu0
    %2197 = vmatprep.mubr.f32.mxu0 0.0
    %2198 = vmatmul.mubr.f32.gmra.mrb[0].mxu0 %v903
    %v2199 = vpop.f32.mrb[0].mxu0
    %v2200 = vadd.f32 %v2107, %v2199
    %v2201 = vpop.f32.mrb[0].mxu0
    %2202 = vmatprep.mubr.f32.mxu0 0.0
    %2203 = vmatmul.mubr.f32.gmra.mrb[0].mxu0 %v1100
    %v2204 = vpop.f32.mrb[0].mxu0
    %v2205 = vadd.f32 %v2107, %v2204
    %v2206 = vpop.f32.mrb[0].mxu0
    %2207 = vmatprep.mubr.f32.mxu0 0.0
    %2208 = vmatmul.mubr.f32.gmra.mrb[0].mxu0 %v1103
    %v2209 = vpop.f32.mrb[0].mxu0
    %v2210 = vadd.f32 %v2107, %v2209
    %v2211 = vpop.f32.mrb[0].mxu0
    %2212 = vmatprep.mubr.f32.mxu0 0.0
    %2213 = vmatmul.mubr.f32.gmra.mrb[0].mxu0 %v1300
    %v2214 = vpop.f32.mrb[0].mxu0
    %v2215 = vadd.f32 %v2107, %v2214
    %v2216 = vpop.f32.mrb[0].mxu0
    %2217 = vmatprep.mubr.f32.mxu0 0.0
    %2218 = vmatmul.mubr.f32.gmra.mrb[0].mxu0 %v1303
    %v2219 = vpop.f32.mrb[0].mxu0
    %v2220 = vadd.f32 %v2107, %v2219
    %v2221 = vpop.f32.mrb[0].mxu0
    %2222 = vmatprep.mubr.f32.mxu0 0.0
    %2223 = vmatmul.mubr.f32.gmra.mrb[0].mxu0 %v1500
    %v2224 = vpop.f32.mrb[0].mxu0
    %v2225 = vadd.f32 %v2107, %v2224
    %v2226 = vpop.f32.mrb[0].mxu0
    %2227 = vmatprep.mubr.f32.mxu0 0.0
    %2228 = vmatmul.mubr.f32.gmra.mrb[0].mxu0 %v1503
    %v2229 = vpop.f32.mrb[0].mxu0
    %v2230 = vadd.f32 %v2107, %v2229
    %v2231 = vpop.f32.mrb[0].mxu0
    %2232 = vmatprep.mubr.f32.mxu0 0.0
    %2233 = vmatmul.mubr.f32.gmra.mrb[0].mxu0 %v1700
    %v2234 = vpop.f32.mrb[0].mxu0
    %v2235 = vadd.f32 %v2107, %v2234
    %v2236 = vpop.f32.mrb[0].mxu0
    %2237 = vmatprep.mubr.f32.mxu0 0.0
    %2238 = vmatmul.mubr.f32.gmra.mrb[0].mxu0 %v1703
    %v2239 = vpop.f32.mrb[0].mxu0
    %v2240 = vadd.f32 %v2107, %v2239
    %v2241 = vpop.f32.mrb[0].mxu0
    %2242 = vmatprep.mubr.f32.mxu0 0.0
    %2243 = vmatmul.mubr.f32.gmra.mrb[0].mxu0 %v1900
    %v2244 = vpop.f32.mrb[0].mxu0
    %v2245 = vadd.f32 %v2107, %v2244
    %v2246 = vpop.f32.mrb[0].mxu0
    %2247 = vmatprep.mubr.f32.mxu0 0.0
    %2248 = vmatmul.mubr.f32.gmra.mrb[0].mxu0 %v1903
    %v2249 = vpop.f32.mrb[0].mxu0
    %v2250 = vadd.f32 %v2107, %v2249
    %v2251 = vpop.f32.mrb[0].mxu0
    %2252 = vmatprep.mubr.f32.mxu0 0.0
    %2253 = vmatmul.mubr.f32.gmra.mrb[0].mxu0 %v2110
    %v2254 = vpop.f32.mrb[0].mxu0
    %v2255 = vadd.f32 %v2107, %v2254
    %v2256 = vpop.f32.mrb[0].mxu0
    %2257 = vmatprep.mubr.f32.mxu0 0.0
    %2258 = vmatmul.mubr.f32.gmra.mrb[0].mxu0 %v2113
    %v2259 = vpop.f32.mrb[0].mxu0
    %v2260 = vadd.f32 %v2107, %v2259
    %v2261 = vpop.f32.mrb[0].mxu0
    %2262 = vdwg.mxu0
    %vm2263 = vcmp.gt.f32.partialorder %v2185, 0.0
    %vm2264 = vcmp.gt.f32.partialorder %v2190, 0.0
    %vm2265 = vcmp.gt.f32.partialorder %v2195, 0.0
    %vm2266 = vcmp.gt.f32.partialorder %v2200, 0.0
    %vm2267 = vcmp.gt.f32.partialorder %v2205, 0.0
    %vm2268 = vcmp.gt.f32.partialorder %v2210, 0.0
    %vm2269 = vcmp.gt.f32.partialorder %v2215, 0.0
    %vm2270 = vcmp.gt.f32.partialorder %v2220, 0.0
    %vm2271 = vcmp.gt.f32.partialorder %v2225, 0.0
    %vm2272 = vcmp.gt.f32.partialorder %v2230, 0.0
    %vm2273 = vcmp.gt.f32.partialorder %v2235, 0.0
    %vm2274 = vcmp.gt.f32.partialorder %v2240, 0.0
    %vm2275 = vcmp.gt.f32.partialorder %v2245, 0.0
    %vm2276 = vcmp.gt.f32.partialorder %v2250, 0.0
    %vm2277 = vcmp.gt.f32.partialorder %v2255, 0.0
    %vm2278 = vcmp.gt.f32.partialorder %v2260, 0.0
    %v2279 = vmul.f32 %v2185, 0.5
    %v2280 = vmul.f32 %v2190, 0.5
    %v2281 = vmul.f32 %v2195, 0.5
    %v2282 = vmul.f32 %v2200, 0.5
    %v2283 = vmul.f32 %v2205, 0.5
    %v2284 = vmul.f32 %v2210, 0.5
    %v2285 = vmul.f32 %v2215, 0.5
    %v2286 = vmul.f32 %v2220, 0.5
    %v2287 = vmul.f32 %v2225, 0.5
    %v2288 = vmul.f32 %v2230, 0.5
    %v2289 = vmul.f32 %v2235, 0.5
    %v2290 = vmul.f32 %v2240, 0.5
    %v2291 = vmul.f32 %v2245, 0.5
    %v2292 = vmul.f32 %v2250, 0.5
    %v2293 = vmul.f32 %v2255, 0.5
    %v2294 = vmul.f32 %v2260, 0.5
    %v2295 = vsel %vm2263, %v2185, %v2279
    %v2296 = vsel %vm2264, %v2190, %v2280
    %v2297 = vsel %vm2265, %v2195, %v2281
    %v2298 = vsel %vm2266, %v2200, %v2282
    %v2299 = vsel %vm2267, %v2205, %v2283
    %v2300 = vsel %vm2268, %v2210, %v2284
    %v2301 = vsel %vm2269, %v2215, %v2285
    %v2302 = vsel %vm2270, %v2220, %v2286
    %v2303 = vsel %vm2271, %v2225, %v2287
    %v2304 = vsel %vm2272, %v2230, %v2288
    %v2305 = vsel %vm2273, %v2235, %v2289
    %v2306 = vsel %vm2274, %v2240, %v2290
    %v2307 = vsel %vm2275, %v2245, %v2291
    %v2308 = vsel %vm2276, %v2250, %v2292
    %v2309 = vsel %vm2277, %v2255, %v2293
    %v2310 = vsel %vm2278, %v2260, %v2294
    %v2311 = vld [vmem:[%s8] sm:$0xff]
    %v2312 = vld [vmem:[%s8 + $0x8] sm:$0xff]
    %v2313 = vld [vmem:[%s8 + $0x10] sm:$0xf]
    %v2314 = vld [vmem:[%s9] sm:$0x1]
    %v2316 = vlaneseq
    %v2317 = vshrl.u32 %v2316, 7
    %v2318 = vsub.s32 0, %v2317
    %v2319 = vrot.slane %v2314, %v2318
    %v2322 = vsel %vm492, %v2295, 0
    %v2325 = vsel %vm492, %v2296, 0
    %v2328 = vsel %vm492, %v2297, 0
    %v2331 = vsel %vm492, %v2298, 0
    %v2334 = vsel %vm492, %v2299, 0
    %v2337 = vsel %vm492, %v2300, 0
    %v2340 = vsel %vm492, %v2301, 0
    %v2343 = vsel %vm492, %v2302, 0
    %v2346 = vsel %vm492, %v2303, 0
    %v2349 = vsel %vm492, %v2304, 0
    %v2352 = vsel %vm492, %v2305, 0
    %v2355 = vsel %vm492, %v2306, 0
    %v2358 = vsel %vm492, %v2307, 0
    %v2361 = vsel %vm492, %v2308, 0
    %v2364 = vsel %vm492, %v2309, 0
    %v2367 = vsel %vm492, %v2310, 0
    %v2370 = vsel %vm150, %v2313, 0
    %2372 = vmatprep.subr.mxu0 0.0
    %2373 = vmatpush1.msra.mxu0 %v2311
    %2374 = vmatprep.subr.mxu0 0.0
    %2375 = vmatpush1.msra.mxu0 %v2312
    %2376 = vmatprep.subr.mxu0 0.0
    %2377 = vmatpush1.msra.mxu0 %v2370
    %2378 = vmatprep.subr.mxu0 0.0
    %2379 = vmatpush1.msra.mxu0 0.0
    %2380 = vmatprep.subr.mxu0 0.0
    %2381 = vmatpush1.msra.mxu0 0.0
    %2382 = vmatprep.subr.mxu0 0.0
    %2383 = vmatpush1.msra.mxu0 0.0
    %2384 = vmatprep.subr.mxu0 0.0
    %2385 = vmatpush1.msra.mxu0 0.0
    %2386 = vmatprep.subr.mxu0 0.0
    %2387 = vmatpush1.msra.mxu0 0.0
    %2388 = vmatprep.subr.mxu0 0.0
    %2389 = vmatpush1.msra.mxu0 0.0
    %2390 = vmatprep.subr.mxu0 0.0
    %2391 = vmatpush1.msra.mxu0 0.0
    %2392 = vmatprep.subr.mxu0 0.0
    %2393 = vmatpush1.msra.mxu0 0.0
    %2394 = vmatprep.subr.mxu0 0.0
    %2395 = vmatpush1.msra.mxu0 0.0
    %2396 = vmatprep.subr.mxu0 0.0
    %2397 = vmatpush1.msra.mxu0 0.0
    %2398 = vmatprep.subr.mxu0 0.0
    %2399 = vmatpush1.msra.mxu0 0.0
    %2400 = vmatprep.subr.mxu0 0.0
    %2401 = vmatpush1.msra.mxu0 0.0
    %2402 = vmatprep.subr.mxu0 0.0
    %2403 = vmatpush1.msra.mxu0 0.0
    %2404 = vmatprep.subr.mxu0 0.0
    %2405 = vmatpush1.msra.mxu0 0.0
    %2406 = vmatprep.subr.mxu0 0.0
    %2407 = vmatpush1.msra.mxu0 0.0
    %2408 = vmatprep.subr.mxu0 0.0
    %2409 = vmatpush1.msra.mxu0 0.0
    %2410 = vmatprep.subr.mxu0 0.0
    %2411 = vmatpush1.msra.mxu0 0.0
    %2412 = vmatprep.subr.mxu0 0.0
    %2413 = vmatpush1.msra.mxu0 0.0
    %2414 = vmatprep.subr.mxu0 0.0
    %2415 = vmatpush1.msra.mxu0 0.0
    %2416 = vmatprep.subr.mxu0 0.0
    %2417 = vmatpush1.msra.mxu0 0.0
    %2418 = vmatprep.subr.mxu0 0.0
    %2419 = vmatpush1.msra.mxu0 0.0
    %2420 = vmatprep.subr.mxu0 0.0
    %2421 = vmatpush1.msra.mxu0 0.0
    %2422 = vmatprep.subr.mxu0 0.0
    %2423 = vmatpush1.msra.mxu0 0.0
    %2424 = vmatprep.subr.mxu0 0.0
    %2425 = vmatpush1.msra.mxu0 0.0
    %2426 = vmatprep.subr.mxu0 0.0
    %2427 = vmatpush1.msra.mxu0 0.0
    %2428 = vmatprep.subr.mxu0 0.0
    %2429 = vmatpush1.msra.mxu0 0.0
    %2430 = vmatprep.subr.mxu0 0.0
    %2431 = vmatpush1.msra.mxu0 0.0
    %2432 = vmatprep.subr.mxu0 0.0
    %2433 = vmatpush1.msra.mxu0 0.0
    %2434 = vmatprep.subr.mxu0 0.0
    %2435 = vmatpush1.msra.mxu0 0.0
    %2436 = vmatprep.mubr.f32.mxu0 0.0
    %2437 = vmatmul.mubr.f32.gmra.mrb[0].mxu0 %v2322
    %v2438 = vpop.f32.mrb[0].mxu0
    %v2439 = vpop.f32.mrb[0].mxu0
    %2440 = vmatprep.mubr.f32.mxu0 0.0
    %2441 = vmatmul.mubr.f32.gmra.mrb[0].mxu0 %v2325
    %v2442 = vpop.f32.mrb[0].mxu0
    %v2443 = vadd.f32 %v2319, %v2442
    %v2444 = vpop.f32.mrb[0].mxu0
    %2445 = vmatprep.mubr.f32.mxu0 0.0
    %2446 = vmatmul.mubr.f32.gmra.mrb[0].mxu0 %v2328
    %v2447 = vpop.f32.mrb[0].mxu0
    %v2448 = vpop.f32.mrb[0].mxu0
    %2449 = vmatprep.mubr.f32.mxu0 0.0
    %2450 = vmatmul.mubr.f32.gmra.mrb[0].mxu0 %v2331
    %v2451 = vpop.f32.mrb[0].mxu0
    %v2452 = vadd.f32 %v2319, %v2451
    %v2453 = vpop.f32.mrb[0].mxu0
    %2454 = vmatprep.mubr.f32.mxu0 0.0
    %2455 = vmatmul.mubr.f32.gmra.mrb[0].mxu0 %v2334
    %v2456 = vpop.f32.mrb[0].mxu0
    %v2457 = vpop.f32.mrb[0].mxu0
    %2458 = vmatprep.mubr.f32.mxu0 0.0
    %2459 = vmatmul.mubr.f32.gmra.mrb[0].mxu0 %v2337
    %v2460 = vpop.f32.mrb[0].mxu0
    %v2461 = vadd.f32 %v2319, %v2460
    %v2462 = vpop.f32.mrb[0].mxu0
    %2463 = vmatprep.mubr.f32.mxu0 0.0
    %2464 = vmatmul.mubr.f32.gmra.mrb[0].mxu0 %v2340
    %v2465 = vpop.f32.mrb[0].mxu0
    %v2466 = vpop.f32.mrb[0].mxu0
    %2467 = vmatprep.mubr.f32.mxu0 0.0
    %2468 = vmatmul.mubr.f32.gmra.mrb[0].mxu0 %v2343
    %v2469 = vpop.f32.mrb[0].mxu0
    %v2470 = vadd.f32 %v2319, %v2469
    %v2471 = vpop.f32.mrb[0].mxu0
    %2472 = vmatprep.mubr.f32.mxu0 0.0
    %2473 = vmatmul.mubr.f32.gmra.mrb[0].mxu0 %v2346
    %v2474 = vpop.f32.mrb[0].mxu0
    %v2475 = vpop.f32.mrb[0].mxu0
    %2476 = vmatprep.mubr.f32.mxu0 0.0
    %2477 = vmatmul.mubr.f32.gmra.mrb[0].mxu0 %v2349
    %v2478 = vpop.f32.mrb[0].mxu0
    %v2479 = vadd.f32 %v2319, %v2478
    %v2480 = vpop.f32.mrb[0].mxu0
    %2481 = vmatprep.mubr.f32.mxu0 0.0
    %2482 = vmatmul.mubr.f32.gmra.mrb[0].mxu0 %v2352
    %v2483 = vpop.f32.mrb[0].mxu0
    %v2484 = vpop.f32.mrb[0].mxu0
    %2485 = vmatprep.mubr.f32.mxu0 0.0
    %2486 = vmatmul.mubr.f32.gmra.mrb[0].mxu0 %v2355
    %v2487 = vpop.f32.mrb[0].mxu0
    %v2488 = vadd.f32 %v2319, %v2487
    %v2489 = vpop.f32.mrb[0].mxu0
    %2490 = vmatprep.mubr.f32.mxu0 0.0
    %2491 = vmatmul.mubr.f32.gmra.mrb[0].mxu0 %v2358
    %v2492 = vpop.f32.mrb[0].mxu0
    %v2493 = vpop.f32.mrb[0].mxu0
    %2494 = vmatprep.mubr.f32.mxu0 0.0
    %2495 = vmatmul.mubr.f32.gmra.mrb[0].mxu0 %v2361
    %v2496 = vpop.f32.mrb[0].mxu0
    %v2497 = vadd.f32 %v2319, %v2496
    %v2498 = vpop.f32.mrb[0].mxu0
    %2499 = vmatprep.mubr.f32.mxu0 0.0
    %2500 = vmatmul.mubr.f32.gmra.mrb[0].mxu0 %v2364
    %v2501 = vpop.f32.mrb[0].mxu0
    %v2502 = vadd.f32 %v2319, %v2501
    %v2503 = vpop.f32.mrb[0].mxu0
    %2504 = vmatprep.mubr.f32.mxu0 0.0
    %2505 = vmatmul.mubr.f32.gmra.mrb[0].mxu0 %v2367
    %v2506 = vpop.f32.mrb[0].mxu0
    %v2507 = vadd.f32 %v2319, %v2506
    %v2508 = vpop.f32.mrb[0].mxu0
    %2509 = vdwg.mxu0
    %vm2510 = vcmp.gt.f32.partialorder %v2443, 0.0
    %vm2511 = vcmp.gt.f32.partialorder %v2452, 0.0
    %vm2512 = vcmp.gt.f32.partialorder %v2461, 0.0
    %vm2513 = vcmp.gt.f32.partialorder %v2470, 0.0
    %vm2514 = vcmp.gt.f32.partialorder %v2479, 0.0
    %vm2515 = vcmp.gt.f32.partialorder %v2488, 0.0
    %vm2516 = vcmp.gt.f32.partialorder %v2497, 0.0
    %vm2517 = vcmp.gt.f32.partialorder %v2502, 0.0
    %vm2518 = vcmp.gt.f32.partialorder %v2507, 0.0
    %v2519 = vmul.f32 %v2443, 0.5
    %v2520 = vmul.f32 %v2452, 0.5
    %v2521 = vmul.f32 %v2461, 0.5
    %v2522 = vmul.f32 %v2470, 0.5
    %v2523 = vmul.f32 %v2479, 0.5
    %v2524 = vmul.f32 %v2488, 0.5
    %v2525 = vmul.f32 %v2497, 0.5
    %v2526 = vmul.f32 %v2502, 0.5
    %v2527 = vmul.f32 %v2507, 0.5
    %v2528 = vsel %vm2510, %v2443, %v2519
    %v2529 = vsel %vm2511, %v2452, %v2520
    %v2530 = vsel %vm2512, %v2461, %v2521
    %v2531 = vsel %vm2513, %v2470, %v2522
    %v2532 = vsel %vm2514, %v2479, %v2523
    %v2533 = vsel %vm2515, %v2488, %v2524
    %v2534 = vsel %vm2516, %v2497, %v2525
    %v2535 = vsel %vm2517, %v2502, %v2526
    %v2536 = vsel %vm2518, %v2507, %v2527
    %v2537 = vadd.f32 %v2528, %v63
    %v2538 = vadd.f32 %v2529, %v65
    %v2539 = vadd.f32 %v2530, %v67
    %v2540 = vadd.f32 %v2531, %v69
    %v2541 = vadd.f32 %v2532, %v71
    %v2542 = vadd.f32 %v2533, %v73
    %v2543 = vadd.f32 %v2534, %v75
    %v2544 = vadd.f32 %v2535, %v76
    %v2545 = vadd.f32 %v2536, %v77
    %v2546 = vmul.f32 %v2544, %v2544
    %v2547 = vmul.f32 %v2545, %v2545
    %2550 = vrot.lane.b32.xlu0 %v2546, 122
    %v2551 = vpop.permute.xlu0 %2550
    %2552 = vrot.lane.b32.xlu0 %v2547, 122
    %v2553 = vpop.permute.xlu0 %2552
    %v2556 = vadd.f32 %v2546, %v2551
    %v2557 = vadd.f32 %v2547, %v2553
    %v2558 = vadd.f32 %v2546, 1e-08
    %v2559 = vadd.f32 %v2547, 1e-08
    %v2560 = vlog2.pop %v2558
    %v2561 = vmul.f32 %v2560, 0.6931472
    %v2562 = vlog2.pop %v2559
    %v2563 = vmul.f32 %v2562, 0.6931472
    %2566 = vrot.lane.b32.xlu0 %v2561, 122
    %v2567 = vpop.permute.xlu0 %2566
    %2568 = vrot.lane.b32.xlu0 %v2563, 122
    %v2569 = vpop.permute.xlu0 %2568
    %v2572 = vsub.f32 %v2556, %v2567
    %v2573 = vsub.f32 %v2557, %v2569
    %v2574 = vsub.f32 %v2572, 1.0
    %v2575 = vsub.f32 %v2573, 1.0
    %vm2576 = vcmask 48128
    %v2577 = vsel %vm2576, %v2574, 0.0
    %v2578 = vsel %vm2576, %v2575, 0.0
    %v2579 = vadd.f32 %v2577, %v2578
    %2580 = vadd.xlane.f32.xlu0 %v2579
    %v2581 = vpop.xlane.xlu0 %2580
    %v2582 = vrot.slane %v2581, 4
    %v2583 = vadd.f32 %v2581, %v2582
    %v2584 = vrot.slane %v2583, 2
    %v2585 = vadd.f32 %v2583, %v2584
    %v2586 = vrot.slane %v2585, 1
    %v2587 = vadd.f32 %v2585, %v2586
    %s2588 = vtos %v2587
    %v2589 = vstv %s2588
    %v2590 = vmul.f32 %v2589, 0.5
    %vm2591 = vcmask 0
    %2592 = vst.msk [vmem:[#allocation2] sm:$0x1] %vm2591, %v2590
    %v2593 = vld [vmem:[%s1] sm:$0xff]
    %v2594 = vld [vmem:[%s1 + $0x8] sm:$0xff]
    %2597 = vrot.lane.b32.xlu0 %v2593, 6
    %v2598 = vpop.permute.xlu0 %2597
    %2599 = vrot.lane.b32.xlu0 %v2594, 6
    %v2600 = vpop.permute.xlu0 %2599
    %v2603 = vmul.f32 %v2544, %v2598
    %v2604 = vmul.f32 %v2545, %v2600
    %2607 = vrot.lane.b32.xlu0 %v2603, 122
    %v2608 = vpop.permute.xlu0 %2607
    %2609 = vrot.lane.b32.xlu0 %v2604, 122
    %v2610 = vpop.permute.xlu0 %2609
    %v2613 = vadd.f32 %v2544, %v2608
    %v2614 = vadd.f32 %v2545, %v2610
    %v2615 = vld [vmem:[%s10] sm:$0x3f]
    %v2616 = vld [vmem:[%s10 + $0x8] sm:$0x3f]
    %v2617 = vld [vmem:[%s10 + $0x10] sm:$0x3f]
    %v2618 = vld [vmem:[%s12] sm:$0x7]
    %v2620 = vlaneseq
    %v2621 = vshrl.u32 %v2620, 7
    %v2622 = vsub.s32 0, %v2621
    %v2623 = vrot.slane %v2618, %v2622
    %v2624 = vlaneseq
    %v2625 = vshrl.u32 %v2624, 7
    %v2626 = vsub.s32 1, %v2625
    %v2627 = vrot.slane %v2618, %v2626
    %v2628 = vlaneseq
    %v2629 = vshrl.u32 %v2628, 7
    %v2630 = vsub.s32 2, %v2629
    %v2631 = vrot.slane %v2618, %v2630
    %v2636 = vsel %vm2576, %v2613, 0
    %v2639 = vsel %vm2576, %v2614, 0
    %vm2641 = vcmask 1045504
    %v2643 = vsel %vm2641, %v2615, 0
    %v2646 = vsel %vm2641, %v2616, 0
    %v2649 = vsel %vm2641, %v2617, 0
    %2651 = vmatprep.subr.mxu0 %v2646
    %2652 = vmatpush1.msra.mxu0 %v2643
    %2653 = vmatprep.subr.mxu0 0.0
    %2654 = vmatpush1.msra.mxu0 0.0
    %2655 = vmatprep.subr.mxu0 0.0
    %2656 = vmatpush1.msra.mxu0 0.0
    %2657 = vmatprep.subr.mxu0 0.0
    %2658 = vmatpush1.msra.mxu0 0.0
    %2659 = vmatprep.subr.mxu0 0.0
    %2660 = vmatpush1.msra.mxu0 0.0
    %2661 = vmatprep.subr.mxu0 0.0
    %2662 = vmatpush1.msra.mxu0 0.0
    %2663 = vmatprep.subr.mxu0 0.0
    %2664 = vmatpush1.msra.mxu0 0.0
    %2665 = vmatprep.subr.mxu0 0.0
    %2666 = vmatpush1.msra.mxu0 0.0
    %2667 = vmatprep.subr.mxu0 0.0
    %2668 = vmatpush1.msra.mxu0 0.0
    %2669 = vmatprep.subr.mxu0 0.0
    %2670 = vmatpush1.msra.mxu0 0.0
    %2671 = vmatprep.subr.mxu0 0.0
    %2672 = vmatpush1.msra.mxu0 0.0
    %2673 = vmatprep.subr.mxu0 0.0
    %2674 = vmatpush1.msra.mxu0 0.0
    %2675 = vmatprep.subr.mxu0 0.0
    %2676 = vmatpush1.msra.mxu0 0.0
    %2677 = vmatprep.subr.mxu0 0.0
    %2678 = vmatpush1.msra.mxu0 0.0
    %2679 = vmatprep.subr.mxu0 0.0
    %2680 = vmatpush1.msra.mxu0 0.0
    %2681 = vmatprep.subr.mxu0 0.0
    %2682 = vmatpush1.msra.mxu0 0.0
    %2683 = vmatprep.subr.mxu0 0.0
    %2684 = vmatpush1.msra.mxu0 0.0
    %2685 = vmatprep.subr.mxu0 0.0
    %2686 = vmatpush1.msra.mxu0 0.0
    %2687 = vmatprep.subr.mxu0 0.0
    %2688 = vmatpush1.msra.mxu0 0.0
    %2689 = vmatprep.subr.mxu0 0.0
    %2690 = vmatpush1.msra.mxu0 0.0
    %2691 = vmatprep.subr.mxu0 0.0
    %2692 = vmatpush1.msra.mxu0 0.0
    %2693 = vmatprep.subr.mxu0 0.0
    %2694 = vmatpush1.msra.mxu0 0.0
    %2695 = vmatprep.subr.mxu0 0.0
    %2696 = vmatpush1.msra.mxu0 0.0
    %2697 = vmatprep.subr.mxu0 0.0
    %2698 = vmatpush1.msra.mxu0 0.0
    %2699 = vmatprep.subr.mxu0 0.0
    %2700 = vmatpush1.msra.mxu0 0.0
    %2701 = vmatprep.subr.mxu0 0.0
    %2702 = vmatpush1.msra.mxu0 0.0
    %2703 = vmatprep.subr.mxu0 0.0
    %2704 = vmatpush1.msra.mxu0 0.0
    %2705 = vmatprep.subr.mxu0 0.0
    %2706 = vmatpush1.msra.mxu0 0.0
    %2707 = vmatprep.subr.mxu0 0.0
    %2708 = vmatpush1.msra.mxu0 0.0
    %2709 = vmatprep.subr.mxu0 0.0
    %2710 = vmatpush1.msra.mxu0 0.0
    %2711 = vmatprep.subr.mxu0 0.0
    %2712 = vmatpush1.msra.mxu0 0.0
    %2713 = vmatprep.subr.mxu0 0.0
    %2714 = vmatpush1.msra.mxu0 0.0
    %2715 = vmatprep.mubr.f32.mxu0 0.0
    %2716 = vmatmul.mubr.f32.gmra.mrb[0].mxu0 %v2636
    %v2717 = vpop.f32.mrb[0].mxu0
    %v2718 = vadd.f32 %v2623, %v2717
    %v2719 = vpop.f32.mrb[0].mxu0
    %v2720 = vadd.f32 %v2627, %v2719
    %2721 = vmatprep.mubr.f32.mxu0 0.0
    %2722 = vmatmul.mubr.f32.gmra.mrb[0].mxu0 %v2639
    %v2723 = vpop.f32.mrb[0].mxu0
    %v2724 = vadd.f32 %v2623, %v2723
    %v2725 = vpop.f32.mrb[0].mxu0
    %v2726 = vadd.f32 %v2627, %v2725
    %2727 = vdwg.mxu0
    %2728 = vmatprep.subr.mxu0 0.0
    %2729 = vmatpush1.msra.mxu0 %v2649
    %2730 = vmatprep.subr.mxu0 0.0
    %2731 = vmatpush1.msra.mxu0 0.0
    %2732 = vmatprep.subr.mxu0 0.0
    %2733 = vmatpush1.msra.mxu0 0.0
    %2734 = vmatprep.subr.mxu0 0.0
    %2735 = vmatpush1.msra.mxu0 0.0
    %2736 = vmatprep.subr.mxu0 0.0
    %2737 = vmatpush1.msra.mxu0 0.0
    %2738 = vmatprep.subr.mxu0 0.0
    %2739 = vmatpush1.msra.mxu0 0.0
    %2740 = vmatprep.subr.mxu0 0.0
    %2741 = vmatpush1.msra.mxu0 0.0
    %2742 = vmatprep.subr.mxu0 0.0
    %2743 = vmatpush1.msra.mxu0 0.0
    %2744 = vmatprep.subr.mxu0 0.0
    %2745 = vmatpush1.msra.mxu0 0.0
    %2746 = vmatprep.subr.mxu0 0.0
    %2747 = vmatpush1.msra.mxu0 0.0
    %2748 = vmatprep.subr.mxu0 0.0
    %2749 = vmatpush1.msra.mxu0 0.0
    %2750 = vmatprep.subr.mxu0 0.0
    %2751 = vmatpush1.msra.mxu0 0.0
    %2752 = vmatprep.subr.mxu0 0.0
    %2753 = vmatpush1.msra.mxu0 0.0
    %2754 = vmatprep.subr.mxu0 0.0
    %2755 = vmatpush1.msra.mxu0 0.0
    %2756 = vmatprep.subr.mxu0 0.0
    %2757 = vmatpush1.msra.mxu0 0.0
    %2758 = vmatprep.subr.mxu0 0.0
    %2759 = vmatpush1.msra.mxu0 0.0
    %2760 = vmatprep.subr.mxu0 0.0
    %2761 = vmatpush1.msra.mxu0 0.0
    %2762 = vmatprep.subr.mxu0 0.0
    %2763 = vmatpush1.msra.mxu0 0.0
    %2764 = vmatprep.subr.mxu0 0.0
    %2765 = vmatpush1.msra.mxu0 0.0
    %2766 = vmatprep.subr.mxu0 0.0
    %2767 = vmatpush1.msra.mxu0 0.0
    %2768 = vmatprep.subr.mxu0 0.0
    %2769 = vmatpush1.msra.mxu0 0.0
    %2770 = vmatprep.subr.mxu0 0.0
    %2771 = vmatpush1.msra.mxu0 0.0
    %2772 = vmatprep.subr.mxu0 0.0
    %2773 = vmatpush1.msra.mxu0 0.0
    %2774 = vmatprep.subr.mxu0 0.0
    %2775 = vmatpush1.msra.mxu0 0.0
    %2776 = vmatprep.subr.mxu0 0.0
    %2777 = vmatpush1.msra.mxu0 0.0
    %2778 = vmatprep.subr.mxu0 0.0
    %2779 = vmatpush1.msra.mxu0 0.0
    %2780 = vmatprep.subr.mxu0 0.0
    %2781 = vmatpush1.msra.mxu0 0.0
    %2782 = vmatprep.subr.mxu0 0.0
    %2783 = vmatpush1.msra.mxu0 0.0
    %2784 = vmatprep.subr.mxu0 0.0
    %2785 = vmatpush1.msra.mxu0 0.0
    %2786 = vmatprep.subr.mxu0 0.0
    %2787 = vmatpush1.msra.mxu0 0.0
    %2788 = vmatprep.subr.mxu0 0.0
    %2789 = vmatpush1.msra.mxu0 0.0
    %2790 = vmatprep.subr.mxu0 0.0
    %2791 = vmatpush1.msra.mxu0 0.0
    %2792 = vmatprep.mubr.f32.mxu0 0.0
    %2793 = vmatmul.mubr.f32.gmra.mrb[0].mxu0 %v2636
    %v2794 = vpop.f32.mrb[0].mxu0
    %v2795 = vadd.f32 %v2631, %v2794
    %v2796 = vpop.f32.mrb[0].mxu0
    %2797 = vmatprep.mubr.f32.mxu0 0.0
    %2798 = vmatmul.mubr.f32.gmra.mrb[0].mxu0 %v2639
    %v2799 = vpop.f32.mrb[0].mxu0
    %v2800 = vadd.f32 %v2631, %v2799
    %v2801 = vpop.f32.mrb[0].mxu0
    %2802 = vdwg.mxu0
    %v2803 = vld [vmem:[%s13] sm:$0x7]
    %v2805 = vlaneseq
    %v2806 = vshrl.u32 %v2805, 7
    %v2807 = vsub.s32 0, %v2806
    %v2808 = vrot.slane %v2803, %v2807
    %v2809 = vlaneseq
    %v2810 = vshrl.u32 %v2809, 7
    %v2811 = vsub.s32 1, %v2810
    %v2812 = vrot.slane %v2803, %v2811
    %v2813 = vlaneseq
    %v2814 = vshrl.u32 %v2813, 7
    %v2815 = vsub.s32 2, %v2814
    %v2816 = vrot.slane %v2803, %v2815
    %v2820 = vld [vmem:[%s11] sm:$0xff]
    %v2821 = vld [vmem:[%s11 + $0x8] sm:$0xff]
    %v2822 = vld [vmem:[%s11 + $0x10] sm:$0xff]
    %v2823 = vld [vmem:[%s11 + $0x18] sm:$0xff]
    %v2824 = vld [vmem:[%s11 + $0x20] sm:$0xff]
    %v2825 = vld [vmem:[%s11 + $0x28] sm:$0xff]
    %vm2826 = vcmask 130048
    %v2827 = vsel %vm2826, 0.0, 0
    %2829 = vmatprep.subr.mxu0 %v2821
    %2830 = vmatpush1.msra.mxu0 %v2820
    %2831 = vmatprep.subr.mxu0 %v2824
    %2832 = vmatpush1.msra.mxu0 %v2823
    %2833 = vmatprep.subr.mxu0 0.0
    %2834 = vmatpush1.msra.mxu0 0.0
    %2835 = vmatprep.subr.mxu0 0.0
    %2836 = vmatpush1.msra.mxu0 0.0
    %2837 = vmatprep.subr.mxu0 0.0
    %2838 = vmatpush1.msra.mxu0 0.0
    %2839 = vmatprep.subr.mxu0 0.0
    %2840 = vmatpush1.msra.mxu0 0.0
    %2841 = vmatprep.subr.mxu0 0.0
    %2842 = vmatpush1.msra.mxu0 0.0
    %2843 = vmatprep.subr.mxu0 0.0
    %2844 = vmatpush1.msra.mxu0 0.0
    %2845 = vmatprep.subr.mxu0 0.0
    %2846 = vmatpush1.msra.mxu0 0.0
    %2847 = vmatprep.subr.mxu0 0.0
    %2848 = vmatpush1.msra.mxu0 0.0
    %2849 = vmatprep.subr.mxu0 0.0
    %2850 = vmatpush1.msra.mxu0 0.0
    %2851 = vmatprep.subr.mxu0 0.0
    %2852 = vmatpush1.msra.mxu0 0.0
    %2853 = vmatprep.subr.mxu0 0.0
    %2854 = vmatpush1.msra.mxu0 0.0
    %2855 = vmatprep.subr.mxu0 0.0
    %2856 = vmatpush1.msra.mxu0 0.0
    %2857 = vmatprep.subr.mxu0 0.0
    %2858 = vmatpush1.msra.mxu0 0.0
    %2859 = vmatprep.subr.mxu0 0.0
    %2860 = vmatpush1.msra.mxu0 0.0
    %2861 = vmatprep.subr.mxu0 0.0
    %2862 = vmatpush1.msra.mxu0 0.0
    %2863 = vmatprep.subr.mxu0 0.0
    %2864 = vmatpush1.msra.mxu0 0.0
    %2865 = vmatprep.subr.mxu0 0.0
    %2866 = vmatpush1.msra.mxu0 0.0
    %2867 = vmatprep.subr.mxu0 0.0
    %2868 = vmatpush1.msra.mxu0 0.0
    %2869 = vmatprep.subr.mxu0 0.0
    %2870 = vmatpush1.msra.mxu0 0.0
    %2871 = vmatprep.subr.mxu0 0.0
    %2872 = vmatpush1.msra.mxu0 0.0
    %2873 = vmatprep.subr.mxu0 0.0
    %2874 = vmatpush1.msra.mxu0 0.0
    %2875 = vmatprep.subr.mxu0 0.0
    %2876 = vmatpush1.msra.mxu0 0.0
    %2877 = vmatprep.subr.mxu0 0.0
    %2878 = vmatpush1.msra.mxu0 0.0
    %2879 = vmatprep.subr.mxu0 0.0
    %2880 = vmatpush1.msra.mxu0 0.0
    %2881 = vmatprep.subr.mxu0 0.0
    %2882 = vmatpush1.msra.mxu0 0.0
    %2883 = vmatprep.subr.mxu0 0.0
    %2884 = vmatpush1.msra.mxu0 0.0
    %2885 = vmatprep.subr.mxu0 0.0
    %2886 = vmatpush1.msra.mxu0 0.0
    %2887 = vmatprep.subr.mxu0 0.0
    %2888 = vmatpush1.msra.mxu0 0.0
    %2889 = vmatprep.subr.mxu0 0.0
    %2890 = vmatpush1.msra.mxu0 0.0
    %2891 = vmatprep.subr.mxu0 0.0
    %2892 = vmatpush1.msra.mxu0 0.0
    %2893 = vmatprep.mubr.f32.mxu0 0.0
    %2894 = vmatmul.mubr.f32.gmra.mrb[0].mxu0 %v2827
    %v2895 = vpop.f32.mrb[0].mxu0
    %v2896 = vadd.f32 %v2808, %v2895
    %v2897 = vpop.f32.mrb[0].mxu0
    %v2898 = vadd.f32 %v2812, %v2897
    %2899 = vdwg.mxu0
    %2900 = vmatprep.subr.mxu0 0.0
    %2901 = vmatpush1.msra.mxu0 %v2822
    %2902 = vmatprep.subr.mxu0 0.0
    %2903 = vmatpush1.msra.mxu0 %v2825
    %2904 = vmatprep.subr.mxu0 0.0
    %2905 = vmatpush1.msra.mxu0 0.0
    %2906 = vmatprep.subr.mxu0 0.0
    %2907 = vmatpush1.msra.mxu0 0.0
    %2908 = vmatprep.subr.mxu0 0.0
    %2909 = vmatpush1.msra.mxu0 0.0
    %2910 = vmatprep.subr.mxu0 0.0
    %2911 = vmatpush1.msra.mxu0 0.0
    %2912 = vmatprep.subr.mxu0 0.0
    %2913 = vmatpush1.msra.mxu0 0.0
    %2914 = vmatprep.subr.mxu0 0.0
    %2915 = vmatpush1.msra.mxu0 0.0
    %2916 = vmatprep.subr.mxu0 0.0
    %2917 = vmatpush1.msra.mxu0 0.0
    %2918 = vmatprep.subr.mxu0 0.0
    %2919 = vmatpush1.msra.mxu0 0.0
    %2920 = vmatprep.subr.mxu0 0.0
    %2921 = vmatpush1.msra.mxu0 0.0
    %2922 = vmatprep.subr.mxu0 0.0
    %2923 = vmatpush1.msra.mxu0 0.0
    %2924 = vmatprep.subr.mxu0 0.0
    %2925 = vmatpush1.msra.mxu0 0.0
    %2926 = vmatprep.subr.mxu0 0.0
    %2927 = vmatpush1.msra.mxu0 0.0
    %2928 = vmatprep.subr.mxu0 0.0
    %2929 = vmatpush1.msra.mxu0 0.0
    %2930 = vmatprep.subr.mxu0 0.0
    %2931 = vmatpush1.msra.mxu0 0.0
    %2932 = vmatprep.subr.mxu0 0.0
    %2933 = vmatpush1.msra.mxu0 0.0
    %2934 = vmatprep.subr.mxu0 0.0
    %2935 = vmatpush1.msra.mxu0 0.0
    %2936 = vmatprep.subr.mxu0 0.0
    %2937 = vmatpush1.msra.mxu0 0.0
    %2938 = vmatprep.subr.mxu0 0.0
    %2939 = vmatpush1.msra.mxu0 0.0
    %2940 = vmatprep.subr.mxu0 0.0
    %2941 = vmatpush1.msra.mxu0 0.0
    %2942 = vmatprep.subr.mxu0 0.0
    %2943 = vmatpush1.msra.mxu0 0.0
    %2944 = vmatprep.subr.mxu0 0.0
    %2945 = vmatpush1.msra.mxu0 0.0
    %2946 = vmatprep.subr.mxu0 0.0
    %2947 = vmatpush1.msra.mxu0 0.0
    %2948 = vmatprep.subr.mxu0 0.0
    %2949 = vmatpush1.msra.mxu0 0.0
    %2950 = vmatprep.subr.mxu0 0.0
    %2951 = vmatpush1.msra.mxu0 0.0
    %2952 = vmatprep.subr.mxu0 0.0
    %2953 = vmatpush1.msra.mxu0 0.0
    %2954 = vmatprep.subr.mxu0 0.0
    %2955 = vmatpush1.msra.mxu0 0.0
    %2956 = vmatprep.subr.mxu0 0.0
    %2957 = vmatpush1.msra.mxu0 0.0
    %2958 = vmatprep.subr.mxu0 0.0
    %2959 = vmatpush1.msra.mxu0 0.0
    %2960 = vmatprep.subr.mxu0 0.0
    %2961 = vmatpush1.msra.mxu0 0.0
    %2962 = vmatprep.subr.mxu0 0.0
    %2963 = vmatpush1.msra.mxu0 0.0
    %2964 = vmatprep.mubr.f32.mxu0 0.0
    %2965 = vmatmul.mubr.f32.gmra.mrb[0].mxu0 %v2827
    %v2966 = vpop.f32.mrb[0].mxu0
    %v2967 = vadd.f32 %v2816, %v2966
    %v2968 = vpop.f32.mrb[0].mxu0
    %2969 = vdwg.mxu0
    %v2970 = vadd.f32 %v2718, %v2896
    %v2971 = vxor.u32 %v2970, 2147483648
    %v2972 = vmul.f32 %v2971, 1.442695
    %v2973 = vpow.pop %v2972
    %v2974 = vadd.f32 %v2973, 1.0
    %v2975 = vrcp.pop %v2974
    %v2976 = vmul.f32 1.0, %v2975
    %v2977 = vadd.f32 %v2720, %v2898
    %v2978 = vxor.u32 %v2977, 2147483648
    %v2979 = vmul.f32 %v2978, 1.442695
    %v2980 = vpow.pop %v2979
    %v2981 = vadd.f32 %v2980, 1.0
    %v2982 = vrcp.pop %v2981
    %v2983 = vmul.f32 1.0, %v2982
    %v2984 = vmul.f32 %v2976, %v2967
    %v2985 = vadd.f32 %v2795, %v2984
    %v2986 = vtanh.pop %v2985
    %v2987 = vsub.f32 1.0, %v2983
    %v2988 = vmul.f32 %v2987, %v2986
    %v2989 = vmul.f32 %v2983, 0.0
    %v2990 = vadd.f32 %v2988, %v2989
    %v2992 = vsel %vm2826, %v2990, 0
    %2994 = vmatprep.subr.mxu0 %v2821
    %2995 = vmatpush1.msra.mxu0 %v2820
    %2996 = vmatprep.subr.mxu0 %v2824
    %2997 = vmatpush1.msra.mxu0 %v2823
    %2998 = vmatprep.subr.mxu0 0.0
    %2999 = vmatpush1.msra.mxu0 0.0
    %3000 = vmatprep.subr.mxu0 0.0
    %3001 = vmatpush1.msra.mxu0 0.0
    %3002 = vmatprep.subr.mxu0 0.0
    %3003 = vmatpush1.msra.mxu0 0.0
    %3004 = vmatprep.subr.mxu0 0.0
    %3005 = vmatpush1.msra.mxu0 0.0
    %3006 = vmatprep.subr.mxu0 0.0
    %3007 = vmatpush1.msra.mxu0 0.0
    %3008 = vmatprep.subr.mxu0 0.0
    %3009 = vmatpush1.msra.mxu0 0.0
    %3010 = vmatprep.subr.mxu0 0.0
    %3011 = vmatpush1.msra.mxu0 0.0
    %3012 = vmatprep.subr.mxu0 0.0
    %3013 = vmatpush1.msra.mxu0 0.0
    %3014 = vmatprep.subr.mxu0 0.0
    %3015 = vmatpush1.msra.mxu0 0.0
    %3016 = vmatprep.subr.mxu0 0.0
    %3017 = vmatpush1.msra.mxu0 0.0
    %3018 = vmatprep.subr.mxu0 0.0
    %3019 = vmatpush1.msra.mxu0 0.0
    %3020 = vmatprep.subr.mxu0 0.0
    %3021 = vmatpush1.msra.mxu0 0.0
    %3022 = vmatprep.subr.mxu0 0.0
    %3023 = vmatpush1.msra.mxu0 0.0
    %3024 = vmatprep.subr.mxu0 0.0
    %3025 = vmatpush1.msra.mxu0 0.0
    %3026 = vmatprep.subr.mxu0 0.0
    %3027 = vmatpush1.msra.mxu0 0.0
    %3028 = vmatprep.subr.mxu0 0.0
    %3029 = vmatpush1.msra.mxu0 0.0
    %3030 = vmatprep.subr.mxu0 0.0
    %3031 = vmatpush1.msra.mxu0 0.0
    %3032 = vmatprep.subr.mxu0 0.0
    %3033 = vmatpush1.msra.mxu0 0.0
    %3034 = vmatprep.subr.mxu0 0.0
    %3035 = vmatpush1.msra.mxu0 0.0
    %3036 = vmatprep.subr.mxu0 0.0
    %3037 = vmatpush1.msra.mxu0 0.0
    %3038 = vmatprep.subr.mxu0 0.0
    %3039 = vmatpush1.msra.mxu0 0.0
    %3040 = vmatprep.subr.mxu0 0.0
    %3041 = vmatpush1.msra.mxu0 0.0
    %3042 = vmatprep.subr.mxu0 0.0
    %3043 = vmatpush1.msra.mxu0 0.0
    %3044 = vmatprep.subr.mxu0 0.0
    %3045 = vmatpush1.msra.mxu0 0.0
    %3046 = vmatprep.subr.mxu0 0.0
    %3047 = vmatpush1.msra.mxu0 0.0
    %3048 = vmatprep.subr.mxu0 0.0
    %3049 = vmatpush1.msra.mxu0 0.0
    %3050 = vmatprep.subr.mxu0 0.0
    %3051 = vmatpush1.msra.mxu0 0.0
    %3052 = vmatprep.subr.mxu0 0.0
    %3053 = vmatpush1.msra.mxu0 0.0
    %3054 = vmatprep.subr.mxu0 0.0
    %3055 = vmatpush1.msra.mxu0 0.0
    %3056 = vmatprep.subr.mxu0 0.0
    %3057 = vmatpush1.msra.mxu0 0.0
    %3058 = vmatprep.mubr.f32.mxu0 0.0
    %3059 = vmatmul.mubr.f32.gmra.mrb[0].mxu0 %v2992
    %v3060 = vpop.f32.mrb[0].mxu0
    %v3061 = vadd.f32 %v2808, %v3060
    %v3062 = vpop.f32.mrb[0].mxu0
    %v3063 = vadd.f32 %v2812, %v3062
    %3064 = vdwg.mxu0
    %3065 = vmatprep.subr.mxu0 0.0
    %3066 = vmatpush1.msra.mxu0 %v2822
    %3067 = vmatprep.subr.mxu0 0.0
    %3068 = vmatpush1.msra.mxu0 %v2825
    %3069 = vmatprep.subr.mxu0 0.0
    %3070 = vmatpush1.msra.mxu0 0.0
    %3071 = vmatprep.subr.mxu0 0.0
    %3072 = vmatpush1.msra.mxu0 0.0
    %3073 = vmatprep.subr.mxu0 0.0
    %3074 = vmatpush1.msra.mxu0 0.0
    %3075 = vmatprep.subr.mxu0 0.0
    %3076 = vmatpush1.msra.mxu0 0.0
    %3077 = vmatprep.subr.mxu0 0.0
    %3078 = vmatpush1.msra.mxu0 0.0
    %3079 = vmatprep.subr.mxu0 0.0
    %3080 = vmatpush1.msra.mxu0 0.0
    %3081 = vmatprep.subr.mxu0 0.0
    %3082 = vmatpush1.msra.mxu0 0.0
    %3083 = vmatprep.subr.mxu0 0.0
    %3084 = vmatpush1.msra.mxu0 0.0
    %3085 = vmatprep.subr.mxu0 0.0
    %3086 = vmatpush1.msra.mxu0 0.0
    %3087 = vmatprep.subr.mxu0 0.0
    %3088 = vmatpush1.msra.mxu0 0.0
    %3089 = vmatprep.subr.mxu0 0.0
    %3090 = vmatpush1.msra.mxu0 0.0
    %3091 = vmatprep.subr.mxu0 0.0
    %3092 = vmatpush1.msra.mxu0 0.0
    %3093 = vmatprep.subr.mxu0 0.0
    %3094 = vmatpush1.msra.mxu0 0.0
    %3095 = vmatprep.subr.mxu0 0.0
    %3096 = vmatpush1.msra.mxu0 0.0
    %3097 = vmatprep.subr.mxu0 0.0
    %3098 = vmatpush1.msra.mxu0 0.0
    %3099 = vmatprep.subr.mxu0 0.0
    %3100 = vmatpush1.msra.mxu0 0.0
    %3101 = vmatprep.subr.mxu0 0.0
    %3102 = vmatpush1.msra.mxu0 0.0
    %3103 = vmatprep.subr.mxu0 0.0
    %3104 = vmatpush1.msra.mxu0 0.0
    %3105 = vmatprep.subr.mxu0 0.0
    %3106 = vmatpush1.msra.mxu0 0.0
    %3107 = vmatprep.subr.mxu0 0.0
    %3108 = vmatpush1.msra.mxu0 0.0
    %3109 = vmatprep.subr.mxu0 0.0
    %3110 = vmatpush1.msra.mxu0 0.0
    %3111 = vmatprep.subr.mxu0 0.0
    %3112 = vmatpush1.msra.mxu0 0.0
    %3113 = vmatprep.subr.mxu0 0.0
    %3114 = vmatpush1.msra.mxu0 0.0
    %3115 = vmatprep.subr.mxu0 0.0
    %3116 = vmatpush1.msra.mxu0 0.0
    %3117 = vmatprep.subr.mxu0 0.0
    %3118 = vmatpush1.msra.mxu0 0.0
    %3119 = vmatprep.subr.mxu0 0.0
    %3120 = vmatpush1.msra.mxu0 0.0
    %3121 = vmatprep.subr.mxu0 0.0
    %3122 = vmatpush1.msra.mxu0 0.0
    %3123 = vmatprep.subr.mxu0 0.0
    %3124 = vmatpush1.msra.mxu0 0.0
    %3125 = vmatprep.subr.mxu0 0.0
    %3126 = vmatpush1.msra.mxu0 0.0
    %3127 = vmatprep.subr.mxu0 0.0
    %3128 = vmatpush1.msra.mxu0 0.0
    %3129 = vmatprep.mubr.f32.mxu0 0.0
    %3130 = vmatmul.mubr.f32.gmra.mrb[0].mxu0 %v2992
    %v3131 = vpop.f32.mrb[0].mxu0
    %v3132 = vadd.f32 %v2816, %v3131
    %v3133 = vpop.f32.mrb[0].mxu0
    %3134 = vdwg.mxu0
    %v3136 = vrot.slane %v3061, 7
    %v3138 = vadd.f32 %v2718, %v3136
    %v3139 = vadd.f32 %v2724, %v3136
    %v3140 = vxor.u32 %v3138, 2147483648
    %v3141 = vxor.u32 %v3139, 2147483648
    %v3142 = vmul.f32 %v3140, 1.442695
    %v3143 = vpow.pop %v3142
    %v3144 = vmul.f32 %v3141, 1.442695
    %v3145 = vpow.pop %v3144
    %v3146 = vadd.f32 %v3143, 1.0
    %v3147 = vadd.f32 %v3145, 1.0
    %v3148 = vrcp.pop %v3146
    %v3149 = vmul.f32 1.0, %v3148
    %v3150 = vrcp.pop %v3147
    %v3151 = vmul.f32 1.0, %v3150
    %v3153 = vrot.slane %v3063, 7
    %v3155 = vadd.f32 %v2720, %v3153
    %v3156 = vadd.f32 %v2726, %v3153
    %v3157 = vxor.u32 %v3155, 2147483648
    %v3158 = vxor.u32 %v3156, 2147483648
    %v3159 = vmul.f32 %v3157, 1.442695
    %v3160 = vpow.pop %v3159
    %v3161 = vmul.f32 %v3158, 1.442695
    %v3162 = vpow.pop %v3161
    %v3163 = vadd.f32 %v3160, 1.0
    %v3164 = vadd.f32 %v3162, 1.0
    %v3165 = vrcp.pop %v3163
    %v3166 = vmul.f32 1.0, %v3165
    %v3167 = vrcp.pop %v3164
    %v3168 = vmul.f32 1.0, %v3167
    %v3170 = vrot.slane %v3132, 7
    %v3172 = vmul.f32 %v3149, %v3170
    %v3173 = vmul.f32 %v3151, %v3170
    %v3174 = vadd.f32 %v2795, %v3172
    %v3175 = vadd.f32 %v2800, %v3173
    %v3176 = vtanh.pop %v3174
    %v3177 = vtanh.pop %v3175
    %v3178 = vsub.f32 1.0, %v3166
    %v3179 = vsub.f32 1.0, %v3168
    %v3180 = vmul.f32 %v3178, %v3176
    %v3181 = vmul.f32 %v3179, %v3177
    %v3182 = vrot.slane %v2990, 7
    %v3184 = vmul.f32 %v3166, %v3182
    %v3185 = vmul.f32 %v3168, %v3182
    %v3186 = vadd.f32 %v3180, %v3184
    %v3187 = vadd.f32 %v3181, %v3185
    %vm3190 = vcmask 1046528
    %v3191 = vrot.slane %v3186, 1
    %v3192 = vrot.slane %v3187, 1
    %v3193 = vsel %vm3190, %v3191, %v3192
    %v3194 = vsel %vm2826, %v3193, 0
    %3196 = vmatprep.subr.mxu0 %v2821
    %3197 = vmatpush1.msra.mxu0 %v2820
    %3198 = vmatprep.subr.mxu0 %v2824
    %3199 = vmatpush1.msra.mxu0 %v2823
    %3200 = vmatprep.subr.mxu0 0.0
    %3201 = vmatpush1.msra.mxu0 0.0
    %3202 = vmatprep.subr.mxu0 0.0
    %3203 = vmatpush1.msra.mxu0 0.0
    %3204 = vmatprep.subr.mxu0 0.0
    %3205 = vmatpush1.msra.mxu0 0.0
    %3206 = vmatprep.subr.mxu0 0.0
    %3207 = vmatpush1.msra.mxu0 0.0
    %3208 = vmatprep.subr.mxu0 0.0
    %3209 = vmatpush1.msra.mxu0 0.0
    %3210 = vmatprep.subr.mxu0 0.0
    %3211 = vmatpush1.msra.mxu0 0.0
    %3212 = vmatprep.subr.mxu0 0.0
    %3213 = vmatpush1.msra.mxu0 0.0
    %3214 = vmatprep.subr.mxu0 0.0
    %3215 = vmatpush1.msra.mxu0 0.0
    %3216 = vmatprep.subr.mxu0 0.0
    %3217 = vmatpush1.msra.mxu0 0.0
    %3218 = vmatprep.subr.mxu0 0.0
    %3219 = vmatpush1.msra.mxu0 0.0
    %3220 = vmatprep.subr.mxu0 0.0
    %3221 = vmatpush1.msra.mxu0 0.0
    %3222 = vmatprep.subr.mxu0 0.0
    %3223 = vmatpush1.msra.mxu0 0.0
    %3224 = vmatprep.subr.mxu0 0.0
    %3225 = vmatpush1.msra.mxu0 0.0
    %3226 = vmatprep.subr.mxu0 0.0
    %3227 = vmatpush1.msra.mxu0 0.0
    %3228 = vmatprep.subr.mxu0 0.0
    %3229 = vmatpush1.msra.mxu0 0.0
    %3230 = vmatprep.subr.mxu0 0.0
    %3231 = vmatpush1.msra.mxu0 0.0
    %3232 = vmatprep.subr.mxu0 0.0
    %3233 = vmatpush1.msra.mxu0 0.0
    %3234 = vmatprep.subr.mxu0 0.0
    %3235 = vmatpush1.msra.mxu0 0.0
    %3236 = vmatprep.subr.mxu0 0.0
    %3237 = vmatpush1.msra.mxu0 0.0
    %3238 = vmatprep.subr.mxu0 0.0
    %3239 = vmatpush1.msra.mxu0 0.0
    %3240 = vmatprep.subr.mxu0 0.0
    %3241 = vmatpush1.msra.mxu0 0.0
    %3242 = vmatprep.subr.mxu0 0.0
    %3243 = vmatpush1.msra.mxu0 0.0
    %3244 = vmatprep.subr.mxu0 0.0
    %3245 = vmatpush1.msra.mxu0 0.0
    %3246 = vmatprep.subr.mxu0 0.0
    %3247 = vmatpush1.msra.mxu0 0.0
    %3248 = vmatprep.subr.mxu0 0.0
    %3249 = vmatpush1.msra.mxu0 0.0
    %3250 = vmatprep.subr.mxu0 0.0
    %3251 = vmatpush1.msra.mxu0 0.0
    %3252 = vmatprep.subr.mxu0 0.0
    %3253 = vmatpush1.msra.mxu0 0.0
    %3254 = vmatprep.subr.mxu0 0.0
    %3255 = vmatpush1.msra.mxu0 0.0
    %3256 = vmatprep.subr.mxu0 0.0
    %3257 = vmatpush1.msra.mxu0 0.0
    %3258 = vmatprep.subr.mxu0 0.0
    %3259 = vmatpush1.msra.mxu0 0.0
    %3260 = vmatprep.mubr.f32.mxu0 0.0
    %3261 = vmatmul.mubr.f32.gmra.mrb[0].mxu0 %v3194
    %v3262 = vpop.f32.mrb[0].mxu0
    %v3263 = vadd.f32 %v2808, %v3262
    %v3264 = vpop.f32.mrb[0].mxu0
    %v3265 = vadd.f32 %v2812, %v3264
    %3266 = vdwg.mxu0
    %3267 = vmatprep.subr.mxu0 0.0
    %3268 = vmatpush1.msra.mxu0 %v2822
    %3269 = vmatprep.subr.mxu0 0.0
    %3270 = vmatpush1.msra.mxu0 %v2825
    %3271 = vmatprep.subr.mxu0 0.0
    %3272 = vmatpush1.msra.mxu0 0.0
    %3273 = vmatprep.subr.mxu0 0.0
    %3274 = vmatpush1.msra.mxu0 0.0
    %3275 = vmatprep.subr.mxu0 0.0
    %3276 = vmatpush1.msra.mxu0 0.0
    %3277 = vmatprep.subr.mxu0 0.0
    %3278 = vmatpush1.msra.mxu0 0.0
    %3279 = vmatprep.subr.mxu0 0.0
    %3280 = vmatpush1.msra.mxu0 0.0
    %3281 = vmatprep.subr.mxu0 0.0
    %3282 = vmatpush1.msra.mxu0 0.0
    %3283 = vmatprep.subr.mxu0 0.0
    %3284 = vmatpush1.msra.mxu0 0.0
    %3285 = vmatprep.subr.mxu0 0.0
    %3286 = vmatpush1.msra.mxu0 0.0
    %3287 = vmatprep.subr.mxu0 0.0
    %3288 = vmatpush1.msra.mxu0 0.0
    %3289 = vmatprep.subr.mxu0 0.0
    %3290 = vmatpush1.msra.mxu0 0.0
    %3291 = vmatprep.subr.mxu0 0.0
    %3292 = vmatpush1.msra.mxu0 0.0
    %3293 = vmatprep.subr.mxu0 0.0
    %3294 = vmatpush1.msra.mxu0 0.0
    %3295 = vmatprep.subr.mxu0 0.0
    %3296 = vmatpush1.msra.mxu0 0.0
    %3297 = vmatprep.subr.mxu0 0.0
    %3298 = vmatpush1.msra.mxu0 0.0
    %3299 = vmatprep.subr.mxu0 0.0
    %3300 = vmatpush1.msra.mxu0 0.0
    %3301 = vmatprep.subr.mxu0 0.0
    %3302 = vmatpush1.msra.mxu0 0.0
    %3303 = vmatprep.subr.mxu0 0.0
    %3304 = vmatpush1.msra.mxu0 0.0
    %3305 = vmatprep.subr.mxu0 0.0
    %3306 = vmatpush1.msra.mxu0 0.0
    %3307 = vmatprep.subr.mxu0 0.0
    %3308 = vmatpush1.msra.mxu0 0.0
    %3309 = vmatprep.subr.mxu0 0.0
    %3310 = vmatpush1.msra.mxu0 0.0
    %3311 = vmatprep.subr.mxu0 0.0
    %3312 = vmatpush1.msra.mxu0 0.0
    %3313 = vmatprep.subr.mxu0 0.0
    %3314 = vmatpush1.msra.mxu0 0.0
    %3315 = vmatprep.subr.mxu0 0.0
    %3316 = vmatpush1.msra.mxu0 0.0
    %3317 = vmatprep.subr.mxu0 0.0
    %3318 = vmatpush1.msra.mxu0 0.0
    %3319 = vmatprep.subr.mxu0 0.0
    %3320 = vmatpush1.msra.mxu0 0.0
    %3321 = vmatprep.subr.mxu0 0.0
    %3322 = vmatpush1.msra.mxu0 0.0
    %3323 = vmatprep.subr.mxu0 0.0
    %3324 = vmatpush1.msra.mxu0 0.0
    %3325 = vmatprep.subr.mxu0 0.0
    %3326 = vmatpush1.msra.mxu0 0.0
    %3327 = vmatprep.subr.mxu0 0.0
    %3328 = vmatpush1.msra.mxu0 0.0
    %3329 = vmatprep.subr.mxu0 0.0
    %3330 = vmatpush1.msra.mxu0 0.0
    %3331 = vmatprep.mubr.f32.mxu0 0.0
    %3332 = vmatmul.mubr.f32.gmra.mrb[0].mxu0 %v3194
    %v3333 = vpop.f32.mrb[0].mxu0
    %v3334 = vadd.f32 %v2816, %v3333
    %v3335 = vpop.f32.mrb[0].mxu0
    %3336 = vdwg.mxu0
    %v3338 = vrot.slane %v3263, 6
    %v3340 = vadd.f32 %v2718, %v3338
    %v3341 = vadd.f32 %v2724, %v3338
    %v3342 = vxor.u32 %v3340, 2147483648
    %v3343 = vxor.u32 %v3341, 2147483648
    %v3344 = vmul.f32 %v3342, 1.442695
    %v3345 = vpow.pop %v3344
    %v3346 = vmul.f32 %v3343, 1.442695
    %v3347 = vpow.pop %v3346
    %v3348 = vadd.f32 %v3345, 1.0
    %v3349 = vadd.f32 %v3347, 1.0
    %v3350 = vrcp.pop %v3348
    %v3351 = vmul.f32 1.0, %v3350
    %v3352 = vrcp.pop %v3349
    %v3353 = vmul.f32 1.0, %v3352
    %v3355 = vrot.slane %v3265, 6
    %v3357 = vadd.f32 %v2720, %v3355
    %v3358 = vadd.f32 %v2726, %v3355
    %v3359 = vxor.u32 %v3357, 2147483648
    %v3360 = vxor.u32 %v3358, 2147483648
    %v3361 = vmul.f32 %v3359, 1.442695
    %v3362 = vpow.pop %v3361
    %v3363 = vmul.f32 %v3360, 1.442695
    %v3364 = vpow.pop %v3363
    %v3365 = vadd.f32 %v3362, 1.0
    %v3366 = vadd.f32 %v3364, 1.0
    %v3367 = vrcp.pop %v3365
    %v3368 = vmul.f32 1.0, %v3367
    %v3369 = vrcp.pop %v3366
    %v3370 = vmul.f32 1.0, %v3369
    %v3372 = vrot.slane %v3334, 6
    %v3374 = vmul.f32 %v3351, %v3372
    %v3375 = vmul.f32 %v3353, %v3372
    %v3376 = vadd.f32 %v2795, %v3374
    %v3377 = vadd.f32 %v2800, %v3375
    %v3378 = vtanh.pop %v3376
    %v3379 = vtanh.pop %v3377
    %v3380 = vsub.f32 1.0, %v3368
    %v3381 = vsub.f32 1.0, %v3370
    %v3382 = vmul.f32 %v3380, %v3378
    %v3383 = vmul.f32 %v3381, %v3379
    %vm3384 = vcmask 1040384
    %v3385 = vrot.slane %v3186, 7
    %v3386 = vrot.slane %v3187, 7
    %v3387 = vsel %vm3384, %v3385, %v3386
    %v3390 = vmul.f32 %v3368, %v3385
    %v3391 = vmul.f32 %v3370, %v3387
    %v3392 = vadd.f32 %v3382, %v3390
    %v3393 = vadd.f32 %v3383, %v3391
    %v3396 = vrot.slane %v3392, 2
    %v3397 = vrot.slane %v3393, 2
    %v3398 = vsel %vm2641, %v3396, %v3397
    %v3399 = vsel %vm2826, %v3398, 0
    %3401 = vmatprep.subr.mxu0 %v2821
    %3402 = vmatpush1.msra.mxu0 %v2820
    %3403 = vmatprep.subr.mxu0 %v2824
    %3404 = vmatpush1.msra.mxu0 %v2823
    %3405 = vmatprep.subr.mxu0 0.0
    %3406 = vmatpush1.msra.mxu0 0.0
    %3407 = vmatprep.subr.mxu0 0.0
    %3408 = vmatpush1.msra.mxu0 0.0
    %3409 = vmatprep.subr.mxu0 0.0
    %3410 = vmatpush1.msra.mxu0 0.0
    %3411 = vmatprep.subr.mxu0 0.0
    %3412 = vmatpush1.msra.mxu0 0.0
    %3413 = vmatprep.subr.mxu0 0.0
    %3414 = vmatpush1.msra.mxu0 0.0
    %3415 = vmatprep.subr.mxu0 0.0
    %3416 = vmatpush1.msra.mxu0 0.0
    %3417 = vmatprep.subr.mxu0 0.0
    %3418 = vmatpush1.msra.mxu0 0.0
    %3419 = vmatprep.subr.mxu0 0.0
    %3420 = vmatpush1.msra.mxu0 0.0
    %3421 = vmatprep.subr.mxu0 0.0
    %3422 = vmatpush1.msra.mxu0 0.0
    %3423 = vmatprep.subr.mxu0 0.0
    %3424 = vmatpush1.msra.mxu0 0.0
    %3425 = vmatprep.subr.mxu0 0.0
    %3426 = vmatpush1.msra.mxu0 0.0
    %3427 = vmatprep.subr.mxu0 0.0
    %3428 = vmatpush1.msra.mxu0 0.0
    %3429 = vmatprep.subr.mxu0 0.0
    %3430 = vmatpush1.msra.mxu0 0.0
    %3431 = vmatprep.subr.mxu0 0.0
    %3432 = vmatpush1.msra.mxu0 0.0
    %3433 = vmatprep.subr.mxu0 0.0
    %3434 = vmatpush1.msra.mxu0 0.0
    %3435 = vmatprep.subr.mxu0 0.0
    %3436 = vmatpush1.msra.mxu0 0.0
    %3437 = vmatprep.subr.mxu0 0.0
    %3438 = vmatpush1.msra.mxu0 0.0
    %3439 = vmatprep.subr.mxu0 0.0
    %3440 = vmatpush1.msra.mxu0 0.0
    %3441 = vmatprep.subr.mxu0 0.0
    %3442 = vmatpush1.msra.mxu0 0.0
    %3443 = vmatprep.subr.mxu0 0.0
    %3444 = vmatpush1.msra.mxu0 0.0
    %3445 = vmatprep.subr.mxu0 0.0
    %3446 = vmatpush1.msra.mxu0 0.0
    %3447 = vmatprep.subr.mxu0 0.0
    %3448 = vmatpush1.msra.mxu0 0.0
    %3449 = vmatprep.subr.mxu0 0.0
    %3450 = vmatpush1.msra.mxu0 0.0
    %3451 = vmatprep.subr.mxu0 0.0
    %3452 = vmatpush1.msra.mxu0 0.0
    %3453 = vmatprep.subr.mxu0 0.0
    %3454 = vmatpush1.msra.mxu0 0.0
    %3455 = vmatprep.subr.mxu0 0.0
    %3456 = vmatpush1.msra.mxu0 0.0
    %3457 = vmatprep.subr.mxu0 0.0
    %3458 = vmatpush1.msra.mxu0 0.0
    %3459 = vmatprep.subr.mxu0 0.0
    %3460 = vmatpush1.msra.mxu0 0.0
    %3461 = vmatprep.subr.mxu0 0.0
    %3462 = vmatpush1.msra.mxu0 0.0
    %3463 = vmatprep.subr.mxu0 0.0
    %3464 = vmatpush1.msra.mxu0 0.0
    %3465 = vmatprep.mubr.f32.mxu0 0.0
    %3466 = vmatmul.mubr.f32.gmra.mrb[0].mxu0 %v3399
    %v3467 = vpop.f32.mrb[0].mxu0
    %v3468 = vadd.f32 %v2808, %v3467
    %v3469 = vpop.f32.mrb[0].mxu0
    %v3470 = vadd.f32 %v2812, %v3469
    %3471 = vdwg.mxu0
    %3472 = vmatprep.subr.mxu0 0.0
    %3473 = vmatpush1.msra.mxu0 %v2822
    %3474 = vmatprep.subr.mxu0 0.0
    %3475 = vmatpush1.msra.mxu0 %v2825
    %3476 = vmatprep.subr.mxu0 0.0
    %3477 = vmatpush1.msra.mxu0 0.0
    %3478 = vmatprep.subr.mxu0 0.0
    %3479 = vmatpush1.msra.mxu0 0.0
    %3480 = vmatprep.subr.mxu0 0.0
    %3481 = vmatpush1.msra.mxu0 0.0
    %3482 = vmatprep.subr.mxu0 0.0
    %3483 = vmatpush1.msra.mxu0 0.0
    %3484 = vmatprep.subr.mxu0 0.0
    %3485 = vmatpush1.msra.mxu0 0.0
    %3486 = vmatprep.subr.mxu0 0.0
    %3487 = vmatpush1.msra.mxu0 0.0
    %3488 = vmatprep.subr.mxu0 0.0
    %3489 = vmatpush1.msra.mxu0 0.0
    %3490 = vmatprep.subr.mxu0 0.0
    %3491 = vmatpush1.msra.mxu0 0.0
    %3492 = vmatprep.subr.mxu0 0.0
    %3493 = vmatpush1.msra.mxu0 0.0
    %3494 = vmatprep.subr.mxu0 0.0
    %3495 = vmatpush1.msra.mxu0 0.0
    %3496 = vmatprep.subr.mxu0 0.0
    %3497 = vmatpush1.msra.mxu0 0.0
    %3498 = vmatprep.subr.mxu0 0.0
    %3499 = vmatpush1.msra.mxu0 0.0
    %3500 = vmatprep.subr.mxu0 0.0
    %3501 = vmatpush1.msra.mxu0 0.0
    %3502 = vmatprep.subr.mxu0 0.0
    %3503 = vmatpush1.msra.mxu0 0.0
    %3504 = vmatprep.subr.mxu0 0.0
    %3505 = vmatpush1.msra.mxu0 0.0
    %3506 = vmatprep.subr.mxu0 0.0
    %3507 = vmatpush1.msra.mxu0 0.0
    %3508 = vmatprep.subr.mxu0 0.0
    %3509 = vmatpush1.msra.mxu0 0.0
    %3510 = vmatprep.subr.mxu0 0.0
    %3511 = vmatpush1.msra.mxu0 0.0
    %3512 = vmatprep.subr.mxu0 0.0
    %3513 = vmatpush1.msra.mxu0 0.0
    %3514 = vmatprep.subr.mxu0 0.0
    %3515 = vmatpush1.msra.mxu0 0.0
    %3516 = vmatprep.subr.mxu0 0.0
    %3517 = vmatpush1.msra.mxu0 0.0
    %3518 = vmatprep.subr.mxu0 0.0
    %3519 = vmatpush1.msra.mxu0 0.0
    %3520 = vmatprep.subr.mxu0 0.0
    %3521 = vmatpush1.msra.mxu0 0.0
    %3522 = vmatprep.subr.mxu0 0.0
    %3523 = vmatpush1.msra.mxu0 0.0
    %3524 = vmatprep.subr.mxu0 0.0
    %3525 = vmatpush1.msra.mxu0 0.0
    %3526 = vmatprep.subr.mxu0 0.0
    %3527 = vmatpush1.msra.mxu0 0.0
    %3528 = vmatprep.subr.mxu0 0.0
    %3529 = vmatpush1.msra.mxu0 0.0
    %3530 = vmatprep.subr.mxu0 0.0
    %3531 = vmatpush1.msra.mxu0 0.0
    %3532 = vmatprep.subr.mxu0 0.0
    %3533 = vmatpush1.msra.mxu0 0.0
    %3534 = vmatprep.subr.mxu0 0.0
    %3535 = vmatpush1.msra.mxu0 0.0
    %3536 = vmatprep.mubr.f32.mxu0 0.0
    %3537 = vmatmul.mubr.f32.gmra.mrb[0].mxu0 %v3399
    %v3538 = vpop.f32.mrb[0].mxu0
    %v3539 = vadd.f32 %v2816, %v3538
    %v3540 = vpop.f32.mrb[0].mxu0
    %3541 = vdwg.mxu0
    %v3543 = vrot.slane %v3468, 5
    %v3545 = vadd.f32 %v2718, %v3543
    %v3546 = vadd.f32 %v2724, %v3543
    %v3547 = vxor.u32 %v3545, 2147483648
    %v3548 = vxor.u32 %v3546, 2147483648
    %v3549 = vmul.f32 %v3547, 1.442695
    %v3550 = vpow.pop %v3549
    %v3551 = vmul.f32 %v3548, 1.442695
    %v3552 = vpow.pop %v3551
    %v3553 = vadd.f32 %v3550, 1.0
    %v3554 = vadd.f32 %v3552, 1.0
    %v3555 = vrcp.pop %v3553
    %v3556 = vmul.f32 1.0, %v3555
    %v3557 = vrcp.pop %v3554
    %v3558 = vmul.f32 1.0, %v3557
    %v3560 = vrot.slane %v3470, 5
    %v3562 = vadd.f32 %v2720, %v3560
    %v3563 = vadd.f32 %v2726, %v3560
    %v3564 = vxor.u32 %v3562, 2147483648
    %v3565 = vxor.u32 %v3563, 2147483648
    %v3566 = vmul.f32 %v3564, 1.442695
    %v3567 = vpow.pop %v3566
    %v3568 = vmul.f32 %v3565, 1.442695
    %v3569 = vpow.pop %v3568
    %v3570 = vadd.f32 %v3567, 1.0
    %v3571 = vadd.f32 %v3569, 1.0
    %v3572 = vrcp.pop %v3570
    %v3573 = vmul.f32 1.0, %v3572
    %v3574 = vrcp.pop %v3571
    %v3575 = vmul.f32 1.0, %v3574
    %v3577 = vrot.slane %v3539, 5
    %v3579 = vmul.f32 %v3556, %v3577
    %v3580 = vmul.f32 %v3558, %v3577
    %v3581 = vadd.f32 %v2795, %v3579
    %v3582 = vadd.f32 %v2800, %v3580
    %v3583 = vtanh.pop %v3581
    %v3584 = vtanh.pop %v3582
    %v3585 = vsub.f32 1.0, %v3573
    %v3586 = vsub.f32 1.0, %v3575
    %v3587 = vmul.f32 %v3585, %v3583
    %v3588 = vmul.f32 %v3586, %v3584
    %v3589 = vrot.slane %v3392, 7
    %v3590 = vrot.slane %v3393, 7
    %v3591 = vsel %vm3384, %v3589, %v3590
    %v3594 = vmul.f32 %v3573, %v3589
    %v3595 = vmul.f32 %v3575, %v3591
    %v3596 = vadd.f32 %v3587, %v3594
    %v3597 = vadd.f32 %v3588, %v3595
    %vm3600 = vcmask 1044480
    %v3601 = vrot.slane %v3596, 3
    %v3602 = vrot.slane %v3597, 3
    %v3603 = vsel %vm3600, %v3601, %v3602
    %v3604 = vsel %vm2826, %v3603, 0
    %3606 = vmatprep.subr.mxu0 %v2821
    %3607 = vmatpush1.msra.mxu0 %v2820
    %3608 = vmatprep.subr.mxu0 %v2824
    %3609 = vmatpush1.msra.mxu0 %v2823
    %3610 = vmatprep.subr.mxu0 0.0
    %3611 = vmatpush1.msra.mxu0 0.0
    %3612 = vmatprep.subr.mxu0 0.0
    %3613 = vmatpush1.msra.mxu0 0.0
    %3614 = vmatprep.subr.mxu0 0.0
    %3615 = vmatpush1.msra.mxu0 0.0
    %3616 = vmatprep.subr.mxu0 0.0
    %3617 = vmatpush1.msra.mxu0 0.0
    %3618 = vmatprep.subr.mxu0 0.0
    %3619 = vmatpush1.msra.mxu0 0.0
    %3620 = vmatprep.subr.mxu0 0.0
    %3621 = vmatpush1.msra.mxu0 0.0
    %3622 = vmatprep.subr.mxu0 0.0
    %3623 = vmatpush1.msra.mxu0 0.0
    %3624 = vmatprep.subr.mxu0 0.0
    %3625 = vmatpush1.msra.mxu0 0.0
    %3626 = vmatprep.subr.mxu0 0.0
    %3627 = vmatpush1.msra.mxu0 0.0
    %3628 = vmatprep.subr.mxu0 0.0
    %3629 = vmatpush1.msra.mxu0 0.0
    %3630 = vmatprep.subr.mxu0 0.0
    %3631 = vmatpush1.msra.mxu0 0.0
    %3632 = vmatprep.subr.mxu0 0.0
    %3633 = vmatpush1.msra.mxu0 0.0
    %3634 = vmatprep.subr.mxu0 0.0
    %3635 = vmatpush1.msra.mxu0 0.0
    %3636 = vmatprep.subr.mxu0 0.0
    %3637 = vmatpush1.msra.mxu0 0.0
    %3638 = vmatprep.subr.mxu0 0.0
    %3639 = vmatpush1.msra.mxu0 0.0
    %3640 = vmatprep.subr.mxu0 0.0
    %3641 = vmatpush1.msra.mxu0 0.0
    %3642 = vmatprep.subr.mxu0 0.0
    %3643 = vmatpush1.msra.mxu0 0.0
    %3644 = vmatprep.subr.mxu0 0.0
    %3645 = vmatpush1.msra.mxu0 0.0
    %3646 = vmatprep.subr.mxu0 0.0
    %3647 = vmatpush1.msra.mxu0 0.0
    %3648 = vmatprep.subr.mxu0 0.0
    %3649 = vmatpush1.msra.mxu0 0.0
    %3650 = vmatprep.subr.mxu0 0.0
    %3651 = vmatpush1.msra.mxu0 0.0
    %3652 = vmatprep.subr.mxu0 0.0
    %3653 = vmatpush1.msra.mxu0 0.0
    %3654 = vmatprep.subr.mxu0 0.0
    %3655 = vmatpush1.msra.mxu0 0.0
    %3656 = vmatprep.subr.mxu0 0.0
    %3657 = vmatpush1.msra.mxu0 0.0
    %3658 = vmatprep.subr.mxu0 0.0
    %3659 = vmatpush1.msra.mxu0 0.0
    %3660 = vmatprep.subr.mxu0 0.0
    %3661 = vmatpush1.msra.mxu0 0.0
    %3662 = vmatprep.subr.mxu0 0.0
    %3663 = vmatpush1.msra.mxu0 0.0
    %3664 = vmatprep.subr.mxu0 0.0
    %3665 = vmatpush1.msra.mxu0 0.0
    %3666 = vmatprep.subr.mxu0 0.0
    %3667 = vmatpush1.msra.mxu0 0.0
    %3668 = vmatprep.subr.mxu0 0.0
    %3669 = vmatpush1.msra.mxu0 0.0
    %3670 = vmatprep.mubr.f32.mxu0 0.0
    %3671 = vmatmul.mubr.f32.gmra.mrb[0].mxu0 %v3604
    %v3672 = vpop.f32.mrb[0].mxu0
    %v3673 = vadd.f32 %v2808, %v3672
    %v3674 = vpop.f32.mrb[0].mxu0
    %v3675 = vadd.f32 %v2812, %v3674
    %3676 = vdwg.mxu0
    %3677 = vmatprep.subr.mxu0 0.0
    %3678 = vmatpush1.msra.mxu0 %v2822
    %3679 = vmatprep.subr.mxu0 0.0
    %3680 = vmatpush1.msra.mxu0 %v2825
    %3681 = vmatprep.subr.mxu0 0.0
    %3682 = vmatpush1.msra.mxu0 0.0
    %3683 = vmatprep.subr.mxu0 0.0
    %3684 = vmatpush1.msra.mxu0 0.0
    %3685 = vmatprep.subr.mxu0 0.0
    %3686 = vmatpush1.msra.mxu0 0.0
    %3687 = vmatprep.subr.mxu0 0.0
    %3688 = vmatpush1.msra.mxu0 0.0
    %3689 = vmatprep.subr.mxu0 0.0
    %3690 = vmatpush1.msra.mxu0 0.0
    %3691 = vmatprep.subr.mxu0 0.0
    %3692 = vmatpush1.msra.mxu0 0.0
    %3693 = vmatprep.subr.mxu0 0.0
    %3694 = vmatpush1.msra.mxu0 0.0
    %3695 = vmatprep.subr.mxu0 0.0
    %3696 = vmatpush1.msra.mxu0 0.0
    %3697 = vmatprep.subr.mxu0 0.0
    %3698 = vmatpush1.msra.mxu0 0.0
    %3699 = vmatprep.subr.mxu0 0.0
    %3700 = vmatpush1.msra.mxu0 0.0
    %3701 = vmatprep.subr.mxu0 0.0
    %3702 = vmatpush1.msra.mxu0 0.0
    %3703 = vmatprep.subr.mxu0 0.0
    %3704 = vmatpush1.msra.mxu0 0.0
    %3705 = vmatprep.subr.mxu0 0.0
    %3706 = vmatpush1.msra.mxu0 0.0
    %3707 = vmatprep.subr.mxu0 0.0
    %3708 = vmatpush1.msra.mxu0 0.0
    %3709 = vmatprep.subr.mxu0 0.0
    %3710 = vmatpush1.msra.mxu0 0.0
    %3711 = vmatprep.subr.mxu0 0.0
    %3712 = vmatpush1.msra.mxu0 0.0
    %3713 = vmatprep.subr.mxu0 0.0
    %3714 = vmatpush1.msra.mxu0 0.0
    %3715 = vmatprep.subr.mxu0 0.0
    %3716 = vmatpush1.msra.mxu0 0.0
    %3717 = vmatprep.subr.mxu0 0.0
    %3718 = vmatpush1.msra.mxu0 0.0
    %3719 = vmatprep.subr.mxu0 0.0
    %3720 = vmatpush1.msra.mxu0 0.0
    %3721 = vmatprep.subr.mxu0 0.0
    %3722 = vmatpush1.msra.mxu0 0.0
    %3723 = vmatprep.subr.mxu0 0.0
    %3724 = vmatpush1.msra.mxu0 0.0
    %3725 = vmatprep.subr.mxu0 0.0
    %3726 = vmatpush1.msra.mxu0 0.0
    %3727 = vmatprep.subr.mxu0 0.0
    %3728 = vmatpush1.msra.mxu0 0.0
    %3729 = vmatprep.subr.mxu0 0.0
    %3730 = vmatpush1.msra.mxu0 0.0
    %3731 = vmatprep.subr.mxu0 0.0
    %3732 = vmatpush1.msra.mxu0 0.0
    %3733 = vmatprep.subr.mxu0 0.0
    %3734 = vmatpush1.msra.mxu0 0.0
    %3735 = vmatprep.subr.mxu0 0.0
    %3736 = vmatpush1.msra.mxu0 0.0
    %3737 = vmatprep.subr.mxu0 0.0
    %3738 = vmatpush1.msra.mxu0 0.0
    %3739 = vmatprep.subr.mxu0 0.0
    %3740 = vmatpush1.msra.mxu0 0.0
    %3741 = vmatprep.mubr.f32.mxu0 0.0
    %3742 = vmatmul.mubr.f32.gmra.mrb[0].mxu0 %v3604
    %v3743 = vpop.f32.mrb[0].mxu0
    %v3744 = vadd.f32 %v2816, %v3743
    %v3745 = vpop.f32.mrb[0].mxu0
    %3746 = vdwg.mxu0
    %v3748 = vrot.slane %v3673, 4
    %v3750 = vadd.f32 %v2718, %v3748
    %v3751 = vadd.f32 %v2724, %v3748
    %v3752 = vxor.u32 %v3750, 2147483648
    %v3753 = vxor.u32 %v3751, 2147483648
    %v3754 = vmul.f32 %v3752, 1.442695
    %v3755 = vpow.pop %v3754
    %v3756 = vmul.f32 %v3753, 1.442695
    %v3757 = vpow.pop %v3756
    %v3758 = vadd.f32 %v3755, 1.0
    %v3759 = vadd.f32 %v3757, 1.0
    %v3760 = vrcp.pop %v3758
    %v3761 = vmul.f32 1.0, %v3760
    %v3762 = vrcp.pop %v3759
    %v3763 = vmul.f32 1.0, %v3762
    %v3765 = vrot.slane %v3675, 4
    %v3767 = vadd.f32 %v2720, %v3765
    %v3768 = vadd.f32 %v2726, %v3765
    %v3769 = vxor.u32 %v3767, 2147483648
    %v3770 = vxor.u32 %v3768, 2147483648
    %v3771 = vmul.f32 %v3769, 1.442695
    %v3772 = vpow.pop %v3771
    %v3773 = vmul.f32 %v3770, 1.442695
    %v3774 = vpow.pop %v3773
    %v3775 = vadd.f32 %v3772, 1.0
    %v3776 = vadd.f32 %v3774, 1.0
    %v3777 = vrcp.pop %v3775
    %v3778 = vmul.f32 1.0, %v3777
    %v3779 = vrcp.pop %v3776
    %v3780 = vmul.f32 1.0, %v3779
    %v3782 = vrot.slane %v3744, 4
    %v3784 = vmul.f32 %v3761, %v3782
    %v3785 = vmul.f32 %v3763, %v3782
    %v3786 = vadd.f32 %v2795, %v3784
    %v3787 = vadd.f32 %v2800, %v3785
    %v3788 = vtanh.pop %v3786
    %v3789 = vtanh.pop %v3787
    %v3790 = vsub.f32 1.0, %v3778
    %v3791 = vsub.f32 1.0, %v3780
    %v3792 = vmul.f32 %v3790, %v3788
    %v3793 = vmul.f32 %v3791, %v3789
    %v3794 = vrot.slane %v3596, 7
    %v3795 = vrot.slane %v3597, 7
    %v3796 = vsel %vm3384, %v3794, %v3795
    %v3799 = vmul.f32 %v3778, %v3794
    %v3800 = vmul.f32 %v3780, %v3796
    %v3801 = vadd.f32 %v3792, %v3799
    %v3802 = vadd.f32 %v3793, %v3800
    %v3805 = vrot.slane %v3801, 4
    %v3806 = vrot.slane %v3802, 4
    %v3807 = vsel %vm150, %v3805, %v3806
    %v3808 = vsel %vm2826, %v3807, 0
    %3810 = vmatprep.subr.mxu0 %v2821
    %3811 = vmatpush1.msra.mxu0 %v2820
    %3812 = vmatprep.subr.mxu0 %v2824
    %3813 = vmatpush1.msra.mxu0 %v2823
    %3814 = vmatprep.subr.mxu0 0.0
    %3815 = vmatpush1.msra.mxu0 0.0
    %3816 = vmatprep.subr.mxu0 0.0
    %3817 = vmatpush1.msra.mxu0 0.0
    %3818 = vmatprep.subr.mxu0 0.0
    %3819 = vmatpush1.msra.mxu0 0.0
    %3820 = vmatprep.subr.mxu0 0.0
    %3821 = vmatpush1.msra.mxu0 0.0
    %3822 = vmatprep.subr.mxu0 0.0
    %3823 = vmatpush1.msra.mxu0 0.0
    %3824 = vmatprep.subr.mxu0 0.0
    %3825 = vmatpush1.msra.mxu0 0.0
    %3826 = vmatprep.subr.mxu0 0.0
    %3827 = vmatpush1.msra.mxu0 0.0
    %3828 = vmatprep.subr.mxu0 0.0
    %3829 = vmatpush1.msra.mxu0 0.0
    %3830 = vmatprep.subr.mxu0 0.0
    %3831 = vmatpush1.msra.mxu0 0.0
    %3832 = vmatprep.subr.mxu0 0.0
    %3833 = vmatpush1.msra.mxu0 0.0
    %3834 = vmatprep.subr.mxu0 0.0
    %3835 = vmatpush1.msra.mxu0 0.0
    %3836 = vmatprep.subr.mxu0 0.0
    %3837 = vmatpush1.msra.mxu0 0.0
    %3838 = vmatprep.subr.mxu0 0.0
    %3839 = vmatpush1.msra.mxu0 0.0
    %3840 = vmatprep.subr.mxu0 0.0
    %3841 = vmatpush1.msra.mxu0 0.0
    %3842 = vmatprep.subr.mxu0 0.0
    %3843 = vmatpush1.msra.mxu0 0.0
    %3844 = vmatprep.subr.mxu0 0.0
    %3845 = vmatpush1.msra.mxu0 0.0
    %3846 = vmatprep.subr.mxu0 0.0
    %3847 = vmatpush1.msra.mxu0 0.0
    %3848 = vmatprep.subr.mxu0 0.0
    %3849 = vmatpush1.msra.mxu0 0.0
    %3850 = vmatprep.subr.mxu0 0.0
    %3851 = vmatpush1.msra.mxu0 0.0
    %3852 = vmatprep.subr.mxu0 0.0
    %3853 = vmatpush1.msra.mxu0 0.0
    %3854 = vmatprep.subr.mxu0 0.0
    %3855 = vmatpush1.msra.mxu0 0.0
    %3856 = vmatprep.subr.mxu0 0.0
    %3857 = vmatpush1.msra.mxu0 0.0
    %3858 = vmatprep.subr.mxu0 0.0
    %3859 = vmatpush1.msra.mxu0 0.0
    %3860 = vmatprep.subr.mxu0 0.0
    %3861 = vmatpush1.msra.mxu0 0.0
    %3862 = vmatprep.subr.mxu0 0.0
    %3863 = vmatpush1.msra.mxu0 0.0
    %3864 = vmatprep.subr.mxu0 0.0
    %3865 = vmatpush1.msra.mxu0 0.0
    %3866 = vmatprep.subr.mxu0 0.0
    %3867 = vmatpush1.msra.mxu0 0.0
    %3868 = vmatprep.subr.mxu0 0.0
    %3869 = vmatpush1.msra.mxu0 0.0
    %3870 = vmatprep.subr.mxu0 0.0
    %3871 = vmatpush1.msra.mxu0 0.0
    %3872 = vmatprep.subr.mxu0 0.0
    %3873 = vmatpush1.msra.mxu0 0.0
    %3874 = vmatprep.mubr.f32.mxu0 0.0
    %3875 = vmatmul.mubr.f32.gmra.mrb[0].mxu0 %v3808
    %v3876 = vpop.f32.mrb[0].mxu0
    %v3877 = vadd.f32 %v2808, %v3876
    %v3878 = vpop.f32.mrb[0].mxu0
    %v3879 = vadd.f32 %v2812, %v3878
    %3880 = vdwg.mxu0
    %3881 = vmatprep.subr.mxu0 0.0
    %3882 = vmatpush1.msra.mxu0 %v2822
    %3883 = vmatprep.subr.mxu0 0.0
    %3884 = vmatpush1.msra.mxu0 %v2825
    %3885 = vmatprep.subr.mxu0 0.0
    %3886 = vmatpush1.msra.mxu0 0.0
    %3887 = vmatprep.subr.mxu0 0.0
    %3888 = vmatpush1.msra.mxu0 0.0
    %3889 = vmatprep.subr.mxu0 0.0
    %3890 = vmatpush1.msra.mxu0 0.0
    %3891 = vmatprep.subr.mxu0 0.0
    %3892 = vmatpush1.msra.mxu0 0.0
    %3893 = vmatprep.subr.mxu0 0.0
    %3894 = vmatpush1.msra.mxu0 0.0
    %3895 = vmatprep.subr.mxu0 0.0
    %3896 = vmatpush1.msra.mxu0 0.0
    %3897 = vmatprep.subr.mxu0 0.0
    %3898 = vmatpush1.msra.mxu0 0.0
    %3899 = vmatprep.subr.mxu0 0.0
    %3900 = vmatpush1.msra.mxu0 0.0
    %3901 = vmatprep.subr.mxu0 0.0
    %3902 = vmatpush1.msra.mxu0 0.0
    %3903 = vmatprep.subr.mxu0 0.0
    %3904 = vmatpush1.msra.mxu0 0.0
    %3905 = vmatprep.subr.mxu0 0.0
    %3906 = vmatpush1.msra.mxu0 0.0
    %3907 = vmatprep.subr.mxu0 0.0
    %3908 = vmatpush1.msra.mxu0 0.0
    %3909 = vmatprep.subr.mxu0 0.0
    %3910 = vmatpush1.msra.mxu0 0.0
    %3911 = vmatprep.subr.mxu0 0.0
    %3912 = vmatpush1.msra.mxu0 0.0
    %3913 = vmatprep.subr.mxu0 0.0
    %3914 = vmatpush1.msra.mxu0 0.0
    %3915 = vmatprep.subr.mxu0 0.0
    %3916 = vmatpush1.msra.mxu0 0.0
    %3917 = vmatprep.subr.mxu0 0.0
    %3918 = vmatpush1.msra.mxu0 0.0
    %3919 = vmatprep.subr.mxu0 0.0
    %3920 = vmatpush1.msra.mxu0 0.0
    %3921 = vmatprep.subr.mxu0 0.0
    %3922 = vmatpush1.msra.mxu0 0.0
    %3923 = vmatprep.subr.mxu0 0.0
    %3924 = vmatpush1.msra.mxu0 0.0
    %3925 = vmatprep.subr.mxu0 0.0
    %3926 = vmatpush1.msra.mxu0 0.0
    %3927 = vmatprep.subr.mxu0 0.0
    %3928 = vmatpush1.msra.mxu0 0.0
    %3929 = vmatprep.subr.mxu0 0.0
    %3930 = vmatpush1.msra.mxu0 0.0
    %3931 = vmatprep.subr.mxu0 0.0
    %3932 = vmatpush1.msra.mxu0 0.0
    %3933 = vmatprep.subr.mxu0 0.0
    %3934 = vmatpush1.msra.mxu0 0.0
    %3935 = vmatprep.subr.mxu0 0.0
    %3936 = vmatpush1.msra.mxu0 0.0
    %3937 = vmatprep.subr.mxu0 0.0
    %3938 = vmatpush1.msra.mxu0 0.0
    %3939 = vmatprep.subr.mxu0 0.0
    %3940 = vmatpush1.msra.mxu0 0.0
    %3941 = vmatprep.subr.mxu0 0.0
    %3942 = vmatpush1.msra.mxu0 0.0
    %3943 = vmatprep.subr.mxu0 0.0
    %3944 = vmatpush1.msra.mxu0 0.0
    %3945 = vmatprep.mubr.f32.mxu0 0.0
    %3946 = vmatmul.mubr.f32.gmra.mrb[0].mxu0 %v3808
    %v3947 = vpop.f32.mrb[0].mxu0
    %v3948 = vadd.f32 %v2816, %v3947
    %v3949 = vpop.f32.mrb[0].mxu0
    %3950 = vdwg.mxu0
    %v3952 = vrot.slane %v3877, 3
    %v3954 = vadd.f32 %v2718, %v3952
    %v3955 = vadd.f32 %v2724, %v3952
    %v3956 = vxor.u32 %v3954, 2147483648
    %v3957 = vxor.u32 %v3955, 2147483648
    %v3958 = vmul.f32 %v3956, 1.442695
    %v3959 = vpow.pop %v3958
    %v3960 = vmul.f32 %v3957, 1.442695
    %v3961 = vpow.pop %v3960
    %v3962 = vadd.f32 %v3959, 1.0
    %v3963 = vadd.f32 %v3961, 1.0
    %v3964 = vrcp.pop %v3962
    %v3965 = vmul.f32 1.0, %v3964
    %v3966 = vrcp.pop %v3963
    %v3967 = vmul.f32 1.0, %v3966
    %v3969 = vrot.slane %v3879, 3
    %v3971 = vadd.f32 %v2720, %v3969
    %v3972 = vadd.f32 %v2726, %v3969
    %v3973 = vxor.u32 %v3971, 2147483648
    %v3974 = vxor.u32 %v3972, 2147483648
    %v3975 = vmul.f32 %v3973, 1.442695
    %v3976 = vpow.pop %v3975
    %v3977 = vmul.f32 %v3974, 1.442695
    %v3978 = vpow.pop %v3977
    %v3979 = vadd.f32 %v3976, 1.0
    %v3980 = vadd.f32 %v3978, 1.0
    %v3981 = vrcp.pop %v3979
    %v3982 = vmul.f32 1.0, %v3981
    %v3983 = vrcp.pop %v3980
    %v3984 = vmul.f32 1.0, %v3983
    %v3986 = vrot.slane %v3948, 3
    %v3988 = vmul.f32 %v3965, %v3986
    %v3989 = vmul.f32 %v3967, %v3986
    %v3990 = vadd.f32 %v2795, %v3988
    %v3991 = vadd.f32 %v2800, %v3989
    %v3992 = vtanh.pop %v3990
    %v3993 = vtanh.pop %v3991
    %v3994 = vsub.f32 1.0, %v3982
    %v3995 = vsub.f32 1.0, %v3984
    %v3996 = vmul.f32 %v3994, %v3992
    %v3997 = vmul.f32 %v3995, %v3993
    %v3998 = vrot.slane %v3801, 7
    %v3999 = vrot.slane %v3802, 7
    %v4000 = vsel %vm3384, %v3998, %v3999
    %v4003 = vmul.f32 %v3982, %v3998
    %v4004 = vmul.f32 %v3984, %v4000
    %v4005 = vadd.f32 %v3996, %v4003
    %v4006 = vadd.f32 %v3997, %v4004
    %vm4009 = vcmask 1042432
    %v4010 = vrot.slane %v4005, 5
    %v4011 = vrot.slane %v4006, 5
    %v4012 = vsel %vm4009, %v4010, %v4011
    %v4013 = vsel %vm2826, %v4012, 0
    %4015 = vmatprep.subr.mxu0 %v2821
    %4016 = vmatpush1.msra.mxu0 %v2820
    %4017 = vmatprep.subr.mxu0 %v2824
    %4018 = vmatpush1.msra.mxu0 %v2823
    %4019 = vmatprep.subr.mxu0 0.0
    %4020 = vmatpush1.msra.mxu0 0.0
    %4021 = vmatprep.subr.mxu0 0.0
    %4022 = vmatpush1.msra.mxu0 0.0
    %4023 = vmatprep.subr.mxu0 0.0
    %4024 = vmatpush1.msra.mxu0 0.0
    %4025 = vmatprep.subr.mxu0 0.0
    %4026 = vmatpush1.msra.mxu0 0.0
    %4027 = vmatprep.subr.mxu0 0.0
    %4028 = vmatpush1.msra.mxu0 0.0
    %4029 = vmatprep.subr.mxu0 0.0
    %4030 = vmatpush1.msra.mxu0 0.0
    %4031 = vmatprep.subr.mxu0 0.0
    %4032 = vmatpush1.msra.mxu0 0.0
    %4033 = vmatprep.subr.mxu0 0.0
    %4034 = vmatpush1.msra.mxu0 0.0
    %4035 = vmatprep.subr.mxu0 0.0
    %4036 = vmatpush1.msra.mxu0 0.0
    %4037 = vmatprep.subr.mxu0 0.0
    %4038 = vmatpush1.msra.mxu0 0.0
    %4039 = vmatprep.subr.mxu0 0.0
    %4040 = vmatpush1.msra.mxu0 0.0
    %4041 = vmatprep.subr.mxu0 0.0
    %4042 = vmatpush1.msra.mxu0 0.0
    %4043 = vmatprep.subr.mxu0 0.0
    %4044 = vmatpush1.msra.mxu0 0.0
    %4045 = vmatprep.subr.mxu0 0.0
    %4046 = vmatpush1.msra.mxu0 0.0
    %4047 = vmatprep.subr.mxu0 0.0
    %4048 = vmatpush1.msra.mxu0 0.0
    %4049 = vmatprep.subr.mxu0 0.0
    %4050 = vmatpush1.msra.mxu0 0.0
    %4051 = vmatprep.subr.mxu0 0.0
    %4052 = vmatpush1.msra.mxu0 0.0
    %4053 = vmatprep.subr.mxu0 0.0
    %4054 = vmatpush1.msra.mxu0 0.0
    %4055 = vmatprep.subr.mxu0 0.0
    %4056 = vmatpush1.msra.mxu0 0.0
    %4057 = vmatprep.subr.mxu0 0.0
    %4058 = vmatpush1.msra.mxu0 0.0
    %4059 = vmatprep.subr.mxu0 0.0
    %4060 = vmatpush1.msra.mxu0 0.0
    %4061 = vmatprep.subr.mxu0 0.0
    %4062 = vmatpush1.msra.mxu0 0.0
    %4063 = vmatprep.subr.mxu0 0.0
    %4064 = vmatpush1.msra.mxu0 0.0
    %4065 = vmatprep.subr.mxu0 0.0
    %4066 = vmatpush1.msra.mxu0 0.0
    %4067 = vmatprep.subr.mxu0 0.0
    %4068 = vmatpush1.msra.mxu0 0.0
    %4069 = vmatprep.subr.mxu0 0.0
    %4070 = vmatpush1.msra.mxu0 0.0
    %4071 = vmatprep.subr.mxu0 0.0
    %4072 = vmatpush1.msra.mxu0 0.0
    %4073 = vmatprep.subr.mxu0 0.0
    %4074 = vmatpush1.msra.mxu0 0.0
    %4075 = vmatprep.subr.mxu0 0.0
    %4076 = vmatpush1.msra.mxu0 0.0
    %4077 = vmatprep.subr.mxu0 0.0
    %4078 = vmatpush1.msra.mxu0 0.0
    %4079 = vmatprep.mubr.f32.mxu0 0.0
    %4080 = vmatmul.mubr.f32.gmra.mrb[0].mxu0 %v4013
    %v4081 = vpop.f32.mrb[0].mxu0
    %v4082 = vadd.f32 %v2808, %v4081
    %v4083 = vpop.f32.mrb[0].mxu0
    %v4084 = vadd.f32 %v2812, %v4083
    %4085 = vdwg.mxu0
    %4086 = vmatprep.subr.mxu0 0.0
    %4087 = vmatpush1.msra.mxu0 %v2822
    %4088 = vmatprep.subr.mxu0 0.0
    %4089 = vmatpush1.msra.mxu0 %v2825
    %4090 = vmatprep.subr.mxu0 0.0
    %4091 = vmatpush1.msra.mxu0 0.0
    %4092 = vmatprep.subr.mxu0 0.0
    %4093 = vmatpush1.msra.mxu0 0.0
    %4094 = vmatprep.subr.mxu0 0.0
    %4095 = vmatpush1.msra.mxu0 0.0
    %4096 = vmatprep.subr.mxu0 0.0
    %4097 = vmatpush1.msra.mxu0 0.0
    %4098 = vmatprep.subr.mxu0 0.0
    %4099 = vmatpush1.msra.mxu0 0.0
    %4100 = vmatprep.subr.mxu0 0.0
    %4101 = vmatpush1.msra.mxu0 0.0
    %4102 = vmatprep.subr.mxu0 0.0
    %4103 = vmatpush1.msra.mxu0 0.0
    %4104 = vmatprep.subr.mxu0 0.0
    %4105 = vmatpush1.msra.mxu0 0.0
    %4106 = vmatprep.subr.mxu0 0.0
    %4107 = vmatpush1.msra.mxu0 0.0
    %4108 = vmatprep.subr.mxu0 0.0
    %4109 = vmatpush1.msra.mxu0 0.0
    %4110 = vmatprep.subr.mxu0 0.0
    %4111 = vmatpush1.msra.mxu0 0.0
    %4112 = vmatprep.subr.mxu0 0.0
    %4113 = vmatpush1.msra.mxu0 0.0
    %4114 = vmatprep.subr.mxu0 0.0
    %4115 = vmatpush1.msra.mxu0 0.0
    %4116 = vmatprep.subr.mxu0 0.0
    %4117 = vmatpush1.msra.mxu0 0.0
    %4118 = vmatprep.subr.mxu0 0.0
    %4119 = vmatpush1.msra.mxu0 0.0
    %4120 = vmatprep.subr.mxu0 0.0
    %4121 = vmatpush1.msra.mxu0 0.0
    %4122 = vmatprep.subr.mxu0 0.0
    %4123 = vmatpush1.msra.mxu0 0.0
    %4124 = vmatprep.subr.mxu0 0.0
    %4125 = vmatpush1.msra.mxu0 0.0
    %4126 = vmatprep.subr.mxu0 0.0
    %4127 = vmatpush1.msra.mxu0 0.0
    %4128 = vmatprep.subr.mxu0 0.0
    %4129 = vmatpush1.msra.mxu0 0.0
    %4130 = vmatprep.subr.mxu0 0.0
    %4131 = vmatpush1.msra.mxu0 0.0
    %4132 = vmatprep.subr.mxu0 0.0
    %4133 = vmatpush1.msra.mxu0 0.0
    %4134 = vmatprep.subr.mxu0 0.0
    %4135 = vmatpush1.msra.mxu0 0.0
    %4136 = vmatprep.subr.mxu0 0.0
    %4137 = vmatpush1.msra.mxu0 0.0
    %4138 = vmatprep.subr.mxu0 0.0
    %4139 = vmatpush1.msra.mxu0 0.0
    %4140 = vmatprep.subr.mxu0 0.0
    %4141 = vmatpush1.msra.mxu0 0.0
    %4142 = vmatprep.subr.mxu0 0.0
    %4143 = vmatpush1.msra.mxu0 0.0
    %4144 = vmatprep.subr.mxu0 0.0
    %4145 = vmatpush1.msra.mxu0 0.0
    %4146 = vmatprep.subr.mxu0 0.0
    %4147 = vmatpush1.msra.mxu0 0.0
    %4148 = vmatprep.subr.mxu0 0.0
    %4149 = vmatpush1.msra.mxu0 0.0
    %4150 = vmatprep.mubr.f32.mxu0 0.0
    %4151 = vmatmul.mubr.f32.gmra.mrb[0].mxu0 %v4013
    %v4152 = vpop.f32.mrb[0].mxu0
    %v4153 = vadd.f32 %v2816, %v4152
    %v4154 = vpop.f32.mrb[0].mxu0
    %4155 = vdwg.mxu0
    %v4157 = vrot.slane %v4082, 2
    %v4159 = vadd.f32 %v2718, %v4157
    %v4160 = vadd.f32 %v2724, %v4157
    %v4161 = vxor.u32 %v4159, 2147483648
    %v4162 = vxor.u32 %v4160, 2147483648
    %v4163 = vmul.f32 %v4161, 1.442695
    %v4164 = vpow.pop %v4163
    %v4165 = vmul.f32 %v4162, 1.442695
    %v4166 = vpow.pop %v4165
    %v4167 = vadd.f32 %v4164, 1.0
    %v4168 = vadd.f32 %v4166, 1.0
    %v4169 = vrcp.pop %v4167
    %v4170 = vmul.f32 1.0, %v4169
    %v4171 = vrcp.pop %v4168
    %v4172 = vmul.f32 1.0, %v4171
    %v4174 = vrot.slane %v4084, 2
    %v4176 = vadd.f32 %v2720, %v4174
    %v4177 = vadd.f32 %v2726, %v4174
    %v4178 = vxor.u32 %v4176, 2147483648
    %v4179 = vxor.u32 %v4177, 2147483648
    %v4180 = vmul.f32 %v4178, 1.442695
    %v4181 = vpow.pop %v4180
    %v4182 = vmul.f32 %v4179, 1.442695
    %v4183 = vpow.pop %v4182
    %v4184 = vadd.f32 %v4181, 1.0
    %v4185 = vadd.f32 %v4183, 1.0
    %v4186 = vrcp.pop %v4184
    %v4187 = vmul.f32 1.0, %v4186
    %v4188 = vrcp.pop %v4185
    %v4189 = vmul.f32 1.0, %v4188
    %v4191 = vrot.slane %v4153, 2
    %v4193 = vmul.f32 %v4170, %v4191
    %v4194 = vmul.f32 %v4172, %v4191
    %v4195 = vadd.f32 %v2795, %v4193
    %v4196 = vadd.f32 %v2800, %v4194
    %v4197 = vtanh.pop %v4195
    %v4198 = vtanh.pop %v4196
    %v4199 = vsub.f32 1.0, %v4187
    %v4200 = vsub.f32 1.0, %v4189
    %v4201 = vmul.f32 %v4199, %v4197
    %v4202 = vmul.f32 %v4200, %v4198
    %v4203 = vrot.slane %v4005, 7
    %v4204 = vrot.slane %v4006, 7
    %v4205 = vsel %vm3384, %v4203, %v4204
    %v4208 = vmul.f32 %v4187, %v4203
    %v4209 = vmul.f32 %v4189, %v4205
    %v4210 = vadd.f32 %v4201, %v4208
    %v4211 = vadd.f32 %v4202, %v4209
    %vm4214 = vcmask 1041408
    %v4215 = vrot.slane %v4210, 6
    %v4216 = vrot.slane %v4211, 6
    %v4217 = vsel %vm4214, %v4215, %v4216
    %v4218 = vsel %vm2826, %v4217, 0
    %4220 = vmatprep.subr.mxu0 %v2821
    %4221 = vmatpush1.msra.mxu0 %v2820
    %4222 = vmatprep.subr.mxu0 %v2824
    %4223 = vmatpush1.msra.mxu0 %v2823
    %4224 = vmatprep.subr.mxu0 0.0
    %4225 = vmatpush1.msra.mxu0 0.0
    %4226 = vmatprep.subr.mxu0 0.0
    %4227 = vmatpush1.msra.mxu0 0.0
    %4228 = vmatprep.subr.mxu0 0.0
    %4229 = vmatpush1.msra.mxu0 0.0
    %4230 = vmatprep.subr.mxu0 0.0
    %4231 = vmatpush1.msra.mxu0 0.0
    %4232 = vmatprep.subr.mxu0 0.0
    %4233 = vmatpush1.msra.mxu0 0.0
    %4234 = vmatprep.subr.mxu0 0.0
    %4235 = vmatpush1.msra.mxu0 0.0
    %4236 = vmatprep.subr.mxu0 0.0
    %4237 = vmatpush1.msra.mxu0 0.0
    %4238 = vmatprep.subr.mxu0 0.0
    %4239 = vmatpush1.msra.mxu0 0.0
    %4240 = vmatprep.subr.mxu0 0.0
    %4241 = vmatpush1.msra.mxu0 0.0
    %4242 = vmatprep.subr.mxu0 0.0
    %4243 = vmatpush1.msra.mxu0 0.0
    %4244 = vmatprep.subr.mxu0 0.0
    %4245 = vmatpush1.msra.mxu0 0.0
    %4246 = vmatprep.subr.mxu0 0.0
    %4247 = vmatpush1.msra.mxu0 0.0
    %4248 = vmatprep.subr.mxu0 0.0
    %4249 = vmatpush1.msra.mxu0 0.0
    %4250 = vmatprep.subr.mxu0 0.0
    %4251 = vmatpush1.msra.mxu0 0.0
    %4252 = vmatprep.subr.mxu0 0.0
    %4253 = vmatpush1.msra.mxu0 0.0
    %4254 = vmatprep.subr.mxu0 0.0
    %4255 = vmatpush1.msra.mxu0 0.0
    %4256 = vmatprep.subr.mxu0 0.0
    %4257 = vmatpush1.msra.mxu0 0.0
    %4258 = vmatprep.subr.mxu0 0.0
    %4259 = vmatpush1.msra.mxu0 0.0
    %4260 = vmatprep.subr.mxu0 0.0
    %4261 = vmatpush1.msra.mxu0 0.0
    %4262 = vmatprep.subr.mxu0 0.0
    %4263 = vmatpush1.msra.mxu0 0.0
    %4264 = vmatprep.subr.mxu0 0.0
    %4265 = vmatpush1.msra.mxu0 0.0
    %4266 = vmatprep.subr.mxu0 0.0
    %4267 = vmatpush1.msra.mxu0 0.0
    %4268 = vmatprep.subr.mxu0 0.0
    %4269 = vmatpush1.msra.mxu0 0.0
    %4270 = vmatprep.subr.mxu0 0.0
    %4271 = vmatpush1.msra.mxu0 0.0
    %4272 = vmatprep.subr.mxu0 0.0
    %4273 = vmatpush1.msra.mxu0 0.0
    %4274 = vmatprep.subr.mxu0 0.0
    %4275 = vmatpush1.msra.mxu0 0.0
    %4276 = vmatprep.subr.mxu0 0.0
    %4277 = vmatpush1.msra.mxu0 0.0
    %4278 = vmatprep.subr.mxu0 0.0
    %4279 = vmatpush1.msra.mxu0 0.0
    %4280 = vmatprep.subr.mxu0 0.0
    %4281 = vmatpush1.msra.mxu0 0.0
    %4282 = vmatprep.subr.mxu0 0.0
    %4283 = vmatpush1.msra.mxu0 0.0
    %4284 = vmatprep.mubr.f32.mxu0 0.0
    %4285 = vmatmul.mubr.f32.gmra.mrb[0].mxu0 %v4218
    %v4286 = vpop.f32.mrb[0].mxu0
    %v4287 = vadd.f32 %v2808, %v4286
    %v4288 = vpop.f32.mrb[0].mxu0
    %v4289 = vadd.f32 %v2812, %v4288
    %4290 = vdwg.mxu0
    %4291 = vmatprep.subr.mxu0 0.0
    %4292 = vmatpush1.msra.mxu0 %v2822
    %4293 = vmatprep.subr.mxu0 0.0
    %4294 = vmatpush1.msra.mxu0 %v2825
    %4295 = vmatprep.subr.mxu0 0.0
    %4296 = vmatpush1.msra.mxu0 0.0
    %4297 = vmatprep.subr.mxu0 0.0
    %4298 = vmatpush1.msra.mxu0 0.0
    %4299 = vmatprep.subr.mxu0 0.0
    %4300 = vmatpush1.msra.mxu0 0.0
    %4301 = vmatprep.subr.mxu0 0.0
    %4302 = vmatpush1.msra.mxu0 0.0
    %4303 = vmatprep.subr.mxu0 0.0
    %4304 = vmatpush1.msra.mxu0 0.0
    %4305 = vmatprep.subr.mxu0 0.0
    %4306 = vmatpush1.msra.mxu0 0.0
    %4307 = vmatprep.subr.mxu0 0.0
    %4308 = vmatpush1.msra.mxu0 0.0
    %4309 = vmatprep.subr.mxu0 0.0
    %4310 = vmatpush1.msra.mxu0 0.0
    %4311 = vmatprep.subr.mxu0 0.0
    %4312 = vmatpush1.msra.mxu0 0.0
    %4313 = vmatprep.subr.mxu0 0.0
    %4314 = vmatpush1.msra.mxu0 0.0
    %4315 = vmatprep.subr.mxu0 0.0
    %4316 = vmatpush1.msra.mxu0 0.0
    %4317 = vmatprep.subr.mxu0 0.0
    %4318 = vmatpush1.msra.mxu0 0.0
    %4319 = vmatprep.subr.mxu0 0.0
    %4320 = vmatpush1.msra.mxu0 0.0
    %4321 = vmatprep.subr.mxu0 0.0
    %4322 = vmatpush1.msra.mxu0 0.0
    %4323 = vmatprep.subr.mxu0 0.0
    %4324 = vmatpush1.msra.mxu0 0.0
    %4325 = vmatprep.subr.mxu0 0.0
    %4326 = vmatpush1.msra.mxu0 0.0
    %4327 = vmatprep.subr.mxu0 0.0
    %4328 = vmatpush1.msra.mxu0 0.0
    %4329 = vmatprep.subr.mxu0 0.0
    %4330 = vmatpush1.msra.mxu0 0.0
    %4331 = vmatprep.subr.mxu0 0.0
    %4332 = vmatpush1.msra.mxu0 0.0
    %4333 = vmatprep.subr.mxu0 0.0
    %4334 = vmatpush1.msra.mxu0 0.0
    %4335 = vmatprep.subr.mxu0 0.0
    %4336 = vmatpush1.msra.mxu0 0.0
    %4337 = vmatprep.subr.mxu0 0.0
    %4338 = vmatpush1.msra.mxu0 0.0
    %4339 = vmatprep.subr.mxu0 0.0
    %4340 = vmatpush1.msra.mxu0 0.0
    %4341 = vmatprep.subr.mxu0 0.0
    %4342 = vmatpush1.msra.mxu0 0.0
    %4343 = vmatprep.subr.mxu0 0.0
    %4344 = vmatpush1.msra.mxu0 0.0
    %4345 = vmatprep.subr.mxu0 0.0
    %4346 = vmatpush1.msra.mxu0 0.0
    %4347 = vmatprep.subr.mxu0 0.0
    %4348 = vmatpush1.msra.mxu0 0.0
    %4349 = vmatprep.subr.mxu0 0.0
    %4350 = vmatpush1.msra.mxu0 0.0
    %4351 = vmatprep.subr.mxu0 0.0
    %4352 = vmatpush1.msra.mxu0 0.0
    %4353 = vmatprep.subr.mxu0 0.0
    %4354 = vmatpush1.msra.mxu0 0.0
    %4355 = vmatprep.mubr.f32.mxu0 0.0
    %4356 = vmatmul.mubr.f32.gmra.mrb[0].mxu0 %v4218
    %v4357 = vpop.f32.mrb[0].mxu0
    %v4358 = vadd.f32 %v2816, %v4357
    %v4359 = vpop.f32.mrb[0].mxu0
    %4360 = vdwg.mxu0
    %v4362 = vrot.slane %v4287, 1
    %v4364 = vadd.f32 %v2718, %v4362
    %v4365 = vadd.f32 %v2724, %v4362
    %v4366 = vxor.u32 %v4364, 2147483648
    %v4367 = vxor.u32 %v4365, 2147483648
    %v4368 = vmul.f32 %v4366, 1.442695
    %v4369 = vpow.pop %v4368
    %v4370 = vmul.f32 %v4367, 1.442695
    %v4371 = vpow.pop %v4370
    %v4372 = vadd.f32 %v4369, 1.0
    %v4373 = vadd.f32 %v4371, 1.0
    %v4374 = vrcp.pop %v4372
    %v4375 = vmul.f32 1.0, %v4374
    %v4376 = vrcp.pop %v4373
    %v4377 = vmul.f32 1.0, %v4376
    %v4379 = vrot.slane %v4289, 1
    %v4381 = vadd.f32 %v2720, %v4379
    %v4382 = vadd.f32 %v2726, %v4379
    %v4383 = vxor.u32 %v4381, 2147483648
    %v4384 = vxor.u32 %v4382, 2147483648
    %v4385 = vmul.f32 %v4383, 1.442695
    %v4386 = vpow.pop %v4385
    %v4387 = vmul.f32 %v4384, 1.442695
    %v4388 = vpow.pop %v4387
    %v4389 = vadd.f32 %v4386, 1.0
    %v4390 = vadd.f32 %v4388, 1.0
    %v4391 = vrcp.pop %v4389
    %v4392 = vmul.f32 1.0, %v4391
    %v4393 = vrcp.pop %v4390
    %v4394 = vmul.f32 1.0, %v4393
    %v4396 = vrot.slane %v4358, 1
    %v4398 = vmul.f32 %v4375, %v4396
    %v4399 = vmul.f32 %v4377, %v4396
    %v4400 = vadd.f32 %v2795, %v4398
    %v4401 = vadd.f32 %v2800, %v4399
    %v4402 = vtanh.pop %v4400
    %v4403 = vtanh.pop %v4401
    %v4404 = vsub.f32 1.0, %v4392
    %v4405 = vsub.f32 1.0, %v4394
    %v4406 = vmul.f32 %v4404, %v4402
    %v4407 = vmul.f32 %v4405, %v4403
    %v4408 = vrot.slane %v4210, 7
    %v4409 = vrot.slane %v4211, 7
    %v4410 = vsel %vm3384, %v4408, %v4409
    %v4413 = vmul.f32 %v4392, %v4408
    %v4414 = vmul.f32 %v4394, %v4410
    %v4415 = vadd.f32 %v4406, %v4413
    %v4416 = vadd.f32 %v4407, %v4414
    %v4419 = vrot.slane %v4415, 7
    %v4420 = vrot.slane %v4416, 7
    %v4421 = vsel %vm3384, %v4419, %v4420
    %v4422 = vld [vmem:[%s14] sm:$0xff]
    %v4423 = vld [vmem:[%s14 + $0x8] sm:$0xff]
    %v4424 = vld [vmem:[%s15] sm:$0x1]
    %v4426 = vlaneseq
    %v4427 = vshrl.u32 %v4426, 7
    %v4428 = vsub.s32 0, %v4427
    %v4429 = vrot.slane %v4424, %v4428
    %v4431 = vsel %vm2826, %v4421, 0
    %4433 = vmatprep.subr.mxu0 0.0
    %4434 = vmatpush1.msra.mxu0 %v4422
    %4435 = vmatprep.subr.mxu0 0.0
    %4436 = vmatpush1.msra.mxu0 %v4423
    %4437 = vmatprep.subr.mxu0 0.0
    %4438 = vmatpush1.msra.mxu0 0.0
    %4439 = vmatprep.subr.mxu0 0.0
    %4440 = vmatpush1.msra.mxu0 0.0
    %4441 = vmatprep.subr.mxu0 0.0
    %4442 = vmatpush1.msra.mxu0 0.0
    %4443 = vmatprep.subr.mxu0 0.0
    %4444 = vmatpush1.msra.mxu0 0.0
    %4445 = vmatprep.subr.mxu0 0.0
    %4446 = vmatpush1.msra.mxu0 0.0
    %4447 = vmatprep.subr.mxu0 0.0
    %4448 = vmatpush1.msra.mxu0 0.0
    %4449 = vmatprep.subr.mxu0 0.0
    %4450 = vmatpush1.msra.mxu0 0.0
    %4451 = vmatprep.subr.mxu0 0.0
    %4452 = vmatpush1.msra.mxu0 0.0
    %4453 = vmatprep.subr.mxu0 0.0
    %4454 = vmatpush1.msra.mxu0 0.0
    %4455 = vmatprep.subr.mxu0 0.0
    %4456 = vmatpush1.msra.mxu0 0.0
    %4457 = vmatprep.subr.mxu0 0.0
    %4458 = vmatpush1.msra.mxu0 0.0
    %4459 = vmatprep.subr.mxu0 0.0
    %4460 = vmatpush1.msra.mxu0 0.0
    %4461 = vmatprep.subr.mxu0 0.0
    %4462 = vmatpush1.msra.mxu0 0.0
    %4463 = vmatprep.subr.mxu0 0.0
    %4464 = vmatpush1.msra.mxu0 0.0
    %4465 = vmatprep.subr.mxu0 0.0
    %4466 = vmatpush1.msra.mxu0 0.0
    %4467 = vmatprep.subr.mxu0 0.0
    %4468 = vmatpush1.msra.mxu0 0.0
    %4469 = vmatprep.subr.mxu0 0.0
    %4470 = vmatpush1.msra.mxu0 0.0
    %4471 = vmatprep.subr.mxu0 0.0
    %4472 = vmatpush1.msra.mxu0 0.0
    %4473 = vmatprep.subr.mxu0 0.0
    %4474 = vmatpush1.msra.mxu0 0.0
    %4475 = vmatprep.subr.mxu0 0.0
    %4476 = vmatpush1.msra.mxu0 0.0
    %4477 = vmatprep.subr.mxu0 0.0
    %4478 = vmatpush1.msra.mxu0 0.0
    %4479 = vmatprep.subr.mxu0 0.0
    %4480 = vmatpush1.msra.mxu0 0.0
    %4481 = vmatprep.subr.mxu0 0.0
    %4482 = vmatpush1.msra.mxu0 0.0
    %4483 = vmatprep.subr.mxu0 0.0
    %4484 = vmatpush1.msra.mxu0 0.0
    %4485 = vmatprep.subr.mxu0 0.0
    %4486 = vmatpush1.msra.mxu0 0.0
    %4487 = vmatprep.subr.mxu0 0.0
    %4488 = vmatpush1.msra.mxu0 0.0
    %4489 = vmatprep.subr.mxu0 0.0
    %4490 = vmatpush1.msra.mxu0 0.0
    %4491 = vmatprep.subr.mxu0 0.0
    %4492 = vmatpush1.msra.mxu0 0.0
    %4493 = vmatprep.subr.mxu0 0.0
    %4494 = vmatpush1.msra.mxu0 0.0
    %4495 = vmatprep.subr.mxu0 0.0
    %4496 = vmatpush1.msra.mxu0 0.0
    %4497 = vmatprep.mubr.f32.mxu0 0.0
    %4498 = vmatmul.mubr.f32.gmra.mrb[0].mxu0 %v2992
    %v4499 = vpop.f32.mrb[0].mxu0
    %v4500 = vadd.f32 %v4429, %v4499
    %v4501 = vpop.f32.mrb[0].mxu0
    %4502 = vmatprep.mubr.f32.mxu0 0.0
    %4503 = vmatmul.mubr.f32.gmra.mrb[0].mxu0 %v3194
    %v4504 = vpop.f32.mrb[0].mxu0
    %v4505 = vadd.f32 %v4429, %v4504
    %v4506 = vpop.f32.mrb[0].mxu0
    %4507 = vmatprep.mubr.f32.mxu0 0.0
    %4508 = vmatmul.mubr.f32.gmra.mrb[0].mxu0 %v3399
    %v4509 = vpop.f32.mrb[0].mxu0
    %v4510 = vadd.f32 %v4429, %v4509
    %v4511 = vpop.f32.mrb[0].mxu0
    %4512 = vmatprep.mubr.f32.mxu0 0.0
    %4513 = vmatmul.mubr.f32.gmra.mrb[0].mxu0 %v3604
    %v4514 = vpop.f32.mrb[0].mxu0
    %v4515 = vadd.f32 %v4429, %v4514
    %v4516 = vpop.f32.mrb[0].mxu0
    %4517 = vmatprep.mubr.f32.mxu0 0.0
    %4518 = vmatmul.mubr.f32.gmra.mrb[0].mxu0 %v3808
    %v4519 = vpop.f32.mrb[0].mxu0
    %v4520 = vadd.f32 %v4429, %v4519
    %v4521 = vpop.f32.mrb[0].mxu0
    %4522 = vmatprep.mubr.f32.mxu0 0.0
    %4523 = vmatmul.mubr.f32.gmra.mrb[0].mxu0 %v4013
    %v4524 = vpop.f32.mrb[0].mxu0
    %v4525 = vadd.f32 %v4429, %v4524
    %v4526 = vpop.f32.mrb[0].mxu0
    %4527 = vmatprep.mubr.f32.mxu0 0.0
    %4528 = vmatmul.mubr.f32.gmra.mrb[0].mxu0 %v4218
    %v4529 = vpop.f32.mrb[0].mxu0
    %v4530 = vadd.f32 %v4429, %v4529
    %v4531 = vpop.f32.mrb[0].mxu0
    %4532 = vmatprep.mubr.f32.mxu0 0.0
    %4533 = vmatmul.mubr.f32.gmra.mrb[0].mxu0 %v4431
    %v4534 = vpop.f32.mrb[0].mxu0
    %v4535 = vadd.f32 %v4429, %v4534
    %v4536 = vpop.f32.mrb[0].mxu0
    %4537 = vdwg.mxu0
    %vm4538 = vcmp.gt.f32.partialorder %v4500, 0.0
    %vm4539 = vcmp.gt.f32.partialorder %v4505, 0.0
    %vm4540 = vcmp.gt.f32.partialorder %v4510, 0.0
    %vm4541 = vcmp.gt.f32.partialorder %v4515, 0.0
    %vm4542 = vcmp.gt.f32.partialorder %v4520, 0.0
    %vm4543 = vcmp.gt.f32.partialorder %v4525, 0.0
    %vm4544 = vcmp.gt.f32.partialorder %v4530, 0.0
    %vm4545 = vcmp.gt.f32.partialorder %v4535, 0.0
    %v4546 = vmul.f32 %v4500, 0.5
    %v4547 = vmul.f32 %v4505, 0.5
    %v4548 = vmul.f32 %v4510, 0.5
    %v4549 = vmul.f32 %v4515, 0.5
    %v4550 = vmul.f32 %v4520, 0.5
    %v4551 = vmul.f32 %v4525, 0.5
    %v4552 = vmul.f32 %v4530, 0.5
    %v4553 = vmul.f32 %v4535, 0.5
    %v4554 = vsel %vm4538, %v4500, %v4546
    %v4555 = vsel %vm4539, %v4505, %v4547
    %v4556 = vsel %vm4540, %v4510, %v4548
    %v4557 = vsel %vm4541, %v4515, %v4549
    %v4558 = vsel %vm4542, %v4520, %v4550
    %v4559 = vsel %vm4543, %v4525, %v4551
    %v4560 = vsel %vm4544, %v4530, %v4552
    %v4561 = vsel %vm4545, %v4535, %v4553
    %v4562 = vadd.f32 %v4554, %v2537
    %v4563 = vadd.f32 %v4555, %v2538
    %v4564 = vadd.f32 %v4556, %v2539
    %v4565 = vadd.f32 %v4557, %v2540
    %v4566 = vadd.f32 %v4558, %v2541
    %v4567 = vadd.f32 %v4559, %v2542
    %v4568 = vadd.f32 %v4560, %v2543
    %v4569 = vadd.f32 %v4561, %v2545
    %v4570 = vld [vmem:[%s16] sm:$0xff]
    %v4571 = vld [vmem:[%s16 + $0x8] sm:$0xf]
    %v4572 = vld [vmem:[%s17] sm:$0x1]
    %v4574 = vlaneseq
    %v4575 = vshrl.u32 %v4574, 7
    %v4576 = vsub.s32 0, %v4575
    %v4577 = vrot.slane %v4572, %v4576
    %v4580 = vsel %vm101, %v4562, 0
    %v4583 = vsel %vm101, %v4563, 0
    %v4586 = vsel %vm101, %v4564, 0
    %v4589 = vsel %vm101, %v4565, 0
    %v4592 = vsel %vm101, %v4566, 0
    %v4595 = vsel %vm101, %v4567, 0
    %v4598 = vsel %vm101, %v4568, 0
    %v4601 = vsel %vm101, %v4569, 0
    %v4604 = vsel %vm150, %v4571, 0
    %4606 = vmatprep.subr.mxu0 0.0
    %4607 = vmatpush1.msra.mxu0 %v4570
    %4608 = vmatprep.subr.mxu0 0.0
    %4609 = vmatpush1.msra.mxu0 %v4604
    %4610 = vmatprep.subr.mxu0 0.0
    %4611 = vmatpush1.msra.mxu0 0.0
    %4612 = vmatprep.subr.mxu0 0.0
    %4613 = vmatpush1.msra.mxu0 0.0
    %4614 = vmatprep.subr.mxu0 0.0
    %4615 = vmatpush1.msra.mxu0 0.0
    %4616 = vmatprep.subr.mxu0 0.0
    %4617 = vmatpush1.msra.mxu0 0.0
    %4618 = vmatprep.subr.mxu0 0.0
    %4619 = vmatpush1.msra.mxu0 0.0
    %4620 = vmatprep.subr.mxu0 0.0
    %4621 = vmatpush1.msra.mxu0 0.0
    %4622 = vmatprep.subr.mxu0 0.0
    %4623 = vmatpush1.msra.mxu0 0.0
    %4624 = vmatprep.subr.mxu0 0.0
    %4625 = vmatpush1.msra.mxu0 0.0
    %4626 = vmatprep.subr.mxu0 0.0
    %4627 = vmatpush1.msra.mxu0 0.0
    %4628 = vmatprep.subr.mxu0 0.0
    %4629 = vmatpush1.msra.mxu0 0.0
    %4630 = vmatprep.subr.mxu0 0.0
    %4631 = vmatpush1.msra.mxu0 0.0
    %4632 = vmatprep.subr.mxu0 0.0
    %4633 = vmatpush1.msra.mxu0 0.0
    %4634 = vmatprep.subr.mxu0 0.0
    %4635 = vmatpush1.msra.mxu0 0.0
    %4636 = vmatprep.subr.mxu0 0.0
    %4637 = vmatpush1.msra.mxu0 0.0
    %4638 = vmatprep.subr.mxu0 0.0
    %4639 = vmatpush1.msra.mxu0 0.0
    %4640 = vmatprep.subr.mxu0 0.0
    %4641 = vmatpush1.msra.mxu0 0.0
    %4642 = vmatprep.subr.mxu0 0.0
    %4643 = vmatpush1.msra.mxu0 0.0
    %4644 = vmatprep.subr.mxu0 0.0
    %4645 = vmatpush1.msra.mxu0 0.0
    %4646 = vmatprep.subr.mxu0 0.0
    %4647 = vmatpush1.msra.mxu0 0.0
    %4648 = vmatprep.subr.mxu0 0.0
    %4649 = vmatpush1.msra.mxu0 0.0
    %4650 = vmatprep.subr.mxu0 0.0
    %4651 = vmatpush1.msra.mxu0 0.0
    %4652 = vmatprep.subr.mxu0 0.0
    %4653 = vmatpush1.msra.mxu0 0.0
    %4654 = vmatprep.subr.mxu0 0.0
    %4655 = vmatpush1.msra.mxu0 0.0
    %4656 = vmatprep.subr.mxu0 0.0
    %4657 = vmatpush1.msra.mxu0 0.0
    %4658 = vmatprep.subr.mxu0 0.0
    %4659 = vmatpush1.msra.mxu0 0.0
    %4660 = vmatprep.subr.mxu0 0.0
    %4661 = vmatpush1.msra.mxu0 0.0
    %4662 = vmatprep.subr.mxu0 0.0
    %4663 = vmatpush1.msra.mxu0 0.0
    %4664 = vmatprep.subr.mxu0 0.0
    %4665 = vmatpush1.msra.mxu0 0.0
    %4666 = vmatprep.subr.mxu0 0.0
    %4667 = vmatpush1.msra.mxu0 0.0
    %4668 = vmatprep.subr.mxu0 0.0
    %4669 = vmatpush1.msra.mxu0 0.0
    %4670 = vmatprep.mubr.f32.mxu0 0.0
    %4671 = vmatmul.mubr.f32.gmra.mrb[0].mxu0 %v4580
    %v4672 = vpop.f32.mrb[0].mxu0
    %v4673 = vadd.f32 %v4577, %v4672
    %v4674 = vpop.f32.mrb[0].mxu0
    %4675 = vmatprep.mubr.f32.mxu0 0.0
    %4676 = vmatmul.mubr.f32.gmra.mrb[0].mxu0 %v4583
    %v4677 = vpop.f32.mrb[0].mxu0
    %v4678 = vadd.f32 %v4577, %v4677
    %v4679 = vpop.f32.mrb[0].mxu0
    %4680 = vmatprep.mubr.f32.mxu0 0.0
    %4681 = vmatmul.mubr.f32.gmra.mrb[0].mxu0 %v4586
    %v4682 = vpop.f32.mrb[0].mxu0
    %v4683 = vadd.f32 %v4577, %v4682
    %v4684 = vpop.f32.mrb[0].mxu0
    %4685 = vmatprep.mubr.f32.mxu0 0.0
    %4686 = vmatmul.mubr.f32.gmra.mrb[0].mxu0 %v4589
    %v4687 = vpop.f32.mrb[0].mxu0
    %v4688 = vadd.f32 %v4577, %v4687
    %v4689 = vpop.f32.mrb[0].mxu0
    %4690 = vmatprep.mubr.f32.mxu0 0.0
    %4691 = vmatmul.mubr.f32.gmra.mrb[0].mxu0 %v4592
    %v4692 = vpop.f32.mrb[0].mxu0
    %v4693 = vadd.f32 %v4577, %v4692
    %v4694 = vpop.f32.mrb[0].mxu0
    %4695 = vmatprep.mubr.f32.mxu0 0.0
    %4696 = vmatmul.mubr.f32.gmra.mrb[0].mxu0 %v4595
    %v4697 = vpop.f32.mrb[0].mxu0
    %v4698 = vadd.f32 %v4577, %v4697
    %v4699 = vpop.f32.mrb[0].mxu0
    %4700 = vmatprep.mubr.f32.mxu0 0.0
    %4701 = vmatmul.mubr.f32.gmra.mrb[0].mxu0 %v4598
    %v4702 = vpop.f32.mrb[0].mxu0
    %v4703 = vadd.f32 %v4577, %v4702
    %v4704 = vpop.f32.mrb[0].mxu0
    %4705 = vmatprep.mubr.f32.mxu0 0.0
    %4706 = vmatmul.mubr.f32.gmra.mrb[0].mxu0 %v4601
    %v4707 = vpop.f32.mrb[0].mxu0
    %v4708 = vadd.f32 %v4577, %v4707
    %v4709 = vpop.f32.mrb[0].mxu0
    %4710 = vdwg.mxu0
    %v4711 = vxor.u32 %v4673, 2147483648
    %v4712 = vxor.u32 %v4678, 2147483648
    %v4713 = vxor.u32 %v4683, 2147483648
    %v4714 = vxor.u32 %v4688, 2147483648
    %v4715 = vxor.u32 %v4693, 2147483648
    %v4716 = vxor.u32 %v4698, 2147483648
    %v4717 = vxor.u32 %v4703, 2147483648
    %v4718 = vxor.u32 %v4708, 2147483648
    %v4719 = vmul.f32 %v4711, 1.442695
    %v4720 = vpow.pop %v4719
    %v4721 = vmul.f32 %v4712, 1.442695
    %v4722 = vpow.pop %v4721
    %v4723 = vmul.f32 %v4713, 1.442695
    %v4724 = vpow.pop %v4723
    %v4725 = vmul.f32 %v4714, 1.442695
    %v4726 = vpow.pop %v4725
    %v4727 = vmul.f32 %v4715, 1.442695
    %v4728 = vpow.pop %v4727
    %v4729 = vmul.f32 %v4716, 1.442695
    %v4730 = vpow.pop %v4729
    %v4731 = vmul.f32 %v4717, 1.442695
    %v4732 = vpow.pop %v4731
    %v4733 = vmul.f32 %v4718, 1.442695
    %v4734 = vpow.pop %v4733
    %v4735 = vadd.f32 %v4720, 1.0
    %v4736 = vadd.f32 %v4722, 1.0
    %v4737 = vadd.f32 %v4724, 1.0
    %v4738 = vadd.f32 %v4726, 1.0
    %v4739 = vadd.f32 %v4728, 1.0
    %v4740 = vadd.f32 %v4730, 1.0
    %v4741 = vadd.f32 %v4732, 1.0
    %v4742 = vadd.f32 %v4734, 1.0
    %v4743 = vrcp.pop %v4735
    %v4744 = vmul.f32 1.0, %v4743
    %v4745 = vrcp.pop %v4736
    %v4746 = vmul.f32 1.0, %v4745
    %v4747 = vrcp.pop %v4737
    %v4748 = vmul.f32 1.0, %v4747
    %v4749 = vrcp.pop %v4738
    %v4750 = vmul.f32 1.0, %v4749
    %v4751 = vrcp.pop %v4739
    %v4752 = vmul.f32 1.0, %v4751
    %v4753 = vrcp.pop %v4740
    %v4754 = vmul.f32 1.0, %v4753
    %v4755 = vrcp.pop %v4741
    %v4756 = vmul.f32 1.0, %v4755
    %v4757 = vrcp.pop %v4742
    %v4758 = vmul.f32 1.0, %v4757
    %4759 = vst.msk [vmem:[%s18] sm:$0xff] %vm101, %v4744
    %4760 = vst.msk [vmem:[%s18 + $0x8] sm:$0xff] %vm101, %v4746
    %4761 = vst.msk [vmem:[%s18 + $0x10] sm:$0xff] %vm101, %v4748
    %4762 = vst.msk [vmem:[%s18 + $0x18] sm:$0xff] %vm101, %v4750
    %4763 = vst.msk [vmem:[%s18 + $0x20] sm:$0xff] %vm101, %v4752
    %4764 = vst.msk [vmem:[%s18 + $0x28] sm:$0xff] %vm101, %v4754
    %4765 = vst.msk [vmem:[%s18 + $0x30] sm:$0xff] %vm101, %v4756
    %4766 = vst.msk [vmem:[%s18 + $0x38] sm:$0xff] %vm101, %v4758
    // Predicated region
    $region74: #{gruvae2_forward.1} parent=1 // pred_check
      _
    $region75: #{gruvae2_forward.1} parent=1 // pred_check_branch
      %4768 = sbr.rel (0) target = $region77
    $region76: #{gruvae2_forward.1} parent=1 // pred_region
      _
    $region77: #{gruvae2_forward.1} parent=1 // pred_fallthru
      _
    // Predicated region
    $region78: #{gruvae2_forward.1} parent=1 // pred_check
      _
    $region79: #{gruvae2_forward.1} parent=1 // pred_check_branch
      %4770 = sbr.rel (0) target = $region81
    $region80: #{gruvae2_forward.1} parent=1 // pred_region
      %s4772 = ssub.s32 16, 16
      %4773 = vsyncadd [#allocation3], %s4772
      %s4775 = sshll.u32 [#allocation2], 4
      %s4776 = int_to_ptr.vmem [resolvable:$true] %s4775
      %4778 = dma.vmem_to_hbm [thread:$0]  %s4776, 16, %s19, [#allocation3]
    $region81: #{gruvae2_forward.1} parent=1 // pred_fallthru
      _
    // Predicated region
    $region82: #{gruvae2_forward.1} parent=1 // pred_check
      _
    $region83: #{gruvae2_forward.1} parent=1 // pred_check_branch
      %4780 = sbr.rel (0) target = $region85
    $region84: #{gruvae2_forward.1} parent=1 // pred_region
      _
    $region85: #{gruvae2_forward.1} parent=1 // pred_fallthru
      _
    // Predicated region
    $region86: #{gruvae2_forward.1} parent=1 // pred_check
      _
    $region87: #{gruvae2_forward.1} parent=1 // pred_check_branch
      %4782 = sbr.rel (0) target = $region89
    $region88: #{gruvae2_forward.1} parent=1 // pred_region
      %4783 = dma.done [#allocation3], 16
    $region89: #{gruvae2_forward.1} parent=1 // pred_fallthru
      _
    %4784 = vsyncpa [#allocation3], 1

</llo_original>
